<compile_context>
chip_gen: v7x
topology: tpu7x:2x2x1
jax: 0.10.0
libtpu: 0.0.40
codegen_flags: <defaults>
</compile_context>

<pallas_src>
import numpy as np

import jax
import jax.numpy as jnp
from jax.experimental import pallas as pl
from jax.experimental.pallas import tpu as pltpu


# ----------------------------------------------------------------------------
# Host-side operator construction (runs once, plain numpy).
# Activation layout: 2-D, rows = (n*H + h), cols = (w*C + c)  (channel fastest).
# ----------------------------------------------------------------------------
def _conv_operators(w, b, n, h_in, w_in, stride, pads, crops):
    """nn.Conv2d(stride) preceded by ZeroPad2d(pads) and followed by a crop."""
    w = np.asarray(w, np.float32)
    b = np.asarray(b, np.float32)
    c_out, c_in, kh, kw = w.shape
    p_l, p_r, p_t, p_b = pads
    c_l, c_r, c_t, c_b = crops
    oh_full = (h_in + p_t + p_b - kh) // stride + 1
    ow_full = (w_in + p_l + p_r - kw) // stride + 1
    oh, ow = oh_full - c_t - c_b, ow_full - c_l - c_r

    R = np.zeros((kh, n * oh, n * h_in), np.float32)
    O = np.zeros((kh, w_in * c_in, ow * c_out), np.float32)
    for i in range(kh):
        for r in range(oh):
            h = stride * (c_t + r) + i - p_t
            if 0 <= h < h_in:
                for nn in range(n):
                    R[i, nn * oh + r, nn * h_in + h] = 1.0
        for c in range(ow):
            for j in range(kw):
                wc = stride * (c_l + c) + j - p_l
                if 0 <= wc < w_in:
                    O[i, wc * c_in:(wc + 1) * c_in,
                      c * c_out:(c + 1) * c_out] += w[:, :, i, j].T
    bias = np.tile(b, ow)[None, :].astype(np.float32)        # [1, ow*c_out]
    r_stack = R.reshape(kh * n * oh, n * h_in)                # vertical stack
    return r_stack, O, bias, oh, ow


def _convT_operators(w, b, n, h_in, w_in, stride, crops):
    """nn.ConvTranspose2d(stride, padding=0) followed by a crop."""
    w = np.asarray(w, np.float32)
    b = np.asarray(b, np.float32)
    c_in, c_out, kh, kw = w.shape
    c_l, c_r, c_t, c_b = crops
    oh_full = (h_in - 1) * stride + kh
    ow_full = (w_in - 1) * stride + kw
    oh, ow = oh_full - c_t - c_b, ow_full - c_l - c_r

    R = np.zeros((kh, n * oh, n * h_in), np.float32)
    O = np.zeros((kh, w_in * c_in, ow * c_out), np.float32)
    for i in range(kh):
        for r in range(oh):
            num = c_t + r - i
            if num >= 0 and num % stride == 0 and num // stride < h_in:
                p = num // stride
                for nn in range(n):
                    R[i, nn * oh + r, nn * h_in + p] = 1.0
        for q in range(w_in):
            for j in range(kw):
                c = stride * q + j - c_l
                if 0 <= c < ow:
                    O[i, q * c_in:(q + 1) * c_in,
                      c * c_out:(c + 1) * c_out] += w[:, :, i, j]
    bias = np.tile(b, ow)[None, :].astype(np.float32)
    r_stack = R.reshape(kh * n * oh, n * h_in)
    return r_stack, O, bias, oh, ow


def build_operators(params, batch):
    """Returns the flat tuple [R1,O1,b1, ..., R6,O6,b6] for the fused kernel."""
    ops = []
    h, w = 48, 42
    # Encoder: conv + (pad before, crop after)
    R, O, B, h, w = _conv_operators(params["encL1_w"], params["encL1_b"],
                                    batch, h, w, 2, (1, 2, 1, 2), (0, 0, 0, 0))
    ops += [R, O, B]
    R, O, B, h, w = _conv_operators(params["encL2_w"], params["encL2_b"],
                                    batch, h, w, 2, (1, 1, 2, 1), (0, 0, 1, 0))
    ops += [R, O, B]
    R, O, B, h, w = _conv_operators(params["encL3_w"], params["encL3_b"],
                                    batch, h, w, 2, (1, 1, 2, 1), (0, 0, 1, 0))
    ops += [R, O, B]
    # Decoder: conv-transpose + crop after
    R, O, B, h, w = _convT_operators(params["decL1_w"], params["decL1_b"],
                                     batch, h, w, 2, (1, 1, 0, 1))
    ops += [R, O, B]
    R, O, B, h, w = _convT_operators(params["decL2_w"], params["decL2_b"],
                                     batch, h, w, 2, (1, 1, 0, 1))
    ops += [R, O, B]
    R, O, B, h, w = _convT_operators(params["decL3_w"], params["decL3_b"],
                                     batch, h, w, 2, (1, 2, 1, 2))
    ops += [R, O, B]
    return tuple(jnp.asarray(x) for x in ops)


# ----------------------------------------------------------------------------
# Fused Pallas kernel: the whole 6-layer forward, activations resident in VMEM.
# ----------------------------------------------------------------------------
def _make_fused_kernel(layer_meta):
    """layer_meta: static tuple of (kh, n_out_rows) per layer."""
    def kernel(*refs):
        x_ref = refs[0]
        out_ref = refs[-1]
        lrefs = refs[1:-1]                       # 6 x (Rstack, O, bias)
        a = x_ref[...]                           # (N*H0, W0*C0)
        for li, (kh, noh) in enumerate(layer_meta):
            r_ref = lrefs[3 * li]                # (kh*N*OH, N*Hin)
            o_ref = lrefs[3 * li + 1]            # (kh, Win*Cin, OW*Cout)
            b_ref = lrefs[3 * li + 2]            # (1, OW*Cout)
            # Row stage: ONE MXU matmul covering all kh vertical taps.
            rows = jnp.dot(r_ref[...], a, preferred_element_type=jnp.float32)
            # Column stage: kh accumulating matmuls (weights x horizontal taps).
            acc = jnp.zeros((noh, o_ref.shape[2]), jnp.float32)
            for i in range(kh):
                acc = acc + jnp.dot(rows[i * noh:(i + 1) * noh, :], o_ref[i],
                                    preferred_element_type=jnp.float32)
            a = jnp.maximum(acc + b_ref[...], 0.0)   # fused bias + ReLU
        out_ref[...] = a                         # (N*48, 42)
    return kernel


def conv_ae_in_forward(X, ops):
    """X: (N, 1, 48, 42) f32, ops: flat operator tuple -> (N, 1, 48, 42)."""
    n, _, h_in, w_in = X.shape
    x2d = X.reshape(n * h_in, w_in)              # Cin == 1: rows=(n,h), cols=w

    layer_meta = []
    for li in range(0, len(ops), 3):
        kh = ops[li + 1].shape[0]
        noh = ops[li].shape[0] // kh
        layer_meta.append((kh, noh))
    out_rows = layer_meta[-1][1]                 # N * 48
    out_cols = ops[-2].shape[2]                  # 42 * 1

    operands = (x2d,) + tuple(ops)
    vmem_spec = pl.BlockSpec(memory_space=pltpu.MemorySpace.VMEM)

    y2d = pl.pallas_call(
        _make_fused_kernel(tuple(layer_meta)),
        out_shape=jax.ShapeDtypeStruct((out_rows, out_cols), jnp.float32),
        in_specs=[vmem_spec] * len(operands),
        out_specs=vmem_spec,
    )(*operands)
    # Final layer has a single output channel, so columns are just W.
    return y2d.reshape(n, 1, out_rows // n, out_cols)


# ----------------------------------------------------------------------------
# Plain-JAX reference (independent of the operator construction)
# ----------------------------------------------------------------------------
def _zeropad2d(x, pads):
    l, r, t, b = pads
    H, W = x.shape[2], x.shape[3]
    x = x[:, :, max(0, -t):H - max(0, -b), max(0, -l):W - max(0, -r)]
    return jnp.pad(
        x, ((0, 0), (0, 0), (max(0, t), max(0, b)), (max(0, l), max(0, r))))


def _conv2d(x, w, b, stride):
    y = jax.lax.conv_general_dilated(
        x, w, (stride, stride), ((0, 0), (0, 0)),
        dimension_numbers=("NCHW", "OIHW", "NCHW"),
        precision=jax.lax.Precision.HIGHEST)
    return y + b[None, :, None, None]


def _convT2d(x, w, b, stride):
    kh, kw = w.shape[2], w.shape[3]
    wc = jnp.flip(w, (2, 3)).transpose(1, 0, 2, 3)      # (Cout, Cin, kh, kw)
    y = jax.lax.conv_general_dilated(
        x, wc, (1, 1), ((kh - 1, kh - 1), (kw - 1, kw - 1)),
        lhs_dilation=(stride, stride),
        dimension_numbers=("NCHW", "OIHW", "NCHW"),
        precision=jax.lax.Precision.HIGHEST)
    return y + b[None, :, None, None]


def reference_forward(X, p):
    relu = lambda v: jnp.maximum(v, 0.0)
    Z1 = relu(_conv2d(_zeropad2d(X, (1, 2, 1, 2)), p["encL1_w"], p["encL1_b"], 2))
    Z2 = relu(_zeropad2d(_conv2d(_zeropad2d(Z1, (1, 1, 2, 1)),
                                 p["encL2_w"], p["encL2_b"], 2), (0, 0, -1, 0)))
    Z3 = relu(_zeropad2d(_conv2d(_zeropad2d(Z2, (1, 1, 2, 1)),
                                 p["encL3_w"], p["encL3_b"], 2), (0, 0, -1, 0)))
    O3 = relu(_zeropad2d(_convT2d(Z3, p["decL1_w"], p["decL1_b"], 2), (-1, -1, 0, -1)))
    O2 = relu(_zeropad2d(_convT2d(O3, p["decL2_w"], p["decL2_b"], 2), (-1, -1, 0, -1)))
    return relu(_zeropad2d(_convT2d(O2, p["decL3_w"], p["decL3_b"], 2), (-1, -2, -1, -2)))


# ----------------------------------------------------------------------------
# Parameters (same shapes as the PyTorch module)
# ----------------------------------------------------------------------------
def init_params(key, kernel_size, num_hidden):
    ks, nh = kernel_size, num_hidden
    keys = jax.random.split(key, 12)
    norm = lambda k, s: 0.1 * jax.random.normal(k, s, jnp.float32)
    return {
        # nn.Conv2d weight: (Cout, Cin, kh, kw)
        "encL1_w": norm(keys[0], (nh[0], 1, ks[0], ks[0])),
        "encL1_b": norm(keys[1], (nh[0],)),
        "encL2_w": norm(keys[2], (nh[1], nh[0], ks[1], ks[1])),
        "encL2_b": norm(keys[3], (nh[1],)),
        "encL3_w": norm(keys[4], (nh[2], nh[1], ks[2], ks[2])),
        "encL3_b": norm(keys[5], (nh[2],)),
        # nn.ConvTranspose2d weight: (Cin, Cout, kh, kw)
        "decL1_w": norm(keys[6], (nh[2], nh[1], ks[2], ks[2])),
        "decL1_b": norm(keys[7], (nh[1],)),
        "decL2_w": norm(keys[8], (nh[1], nh[0], ks[1], ks[1])),
        "decL2_b": norm(keys[9], (nh[0],)),
        "decL3_w": norm(keys[10], (nh[0], 1, ks[0], ks[0])),
        "decL3_b": norm(keys[11], (1,)),
    }


if __name__ == "__main__":
    # EYaleB DSC-Net style config (small channel counts):
    # kernelSize=[5,3,3], numHidden=[4,8,8], batch=2, images 48x42 (the padding
    # scheme of this module reconstructs exactly that spatial size).
    kernel_size = [5, 3, 3]
    num_hidden = [4, 8, 8]
    batch = 2

    key = jax.random.PRNGKey(0)
    kx, kp = jax.random.split(key)
    X = jax.random.normal(kx, (batch, 1, 48, 42), jnp.float32)
    params = init_params(kp, kernel_size, num_hidden)

    # Build the per-layer operator matrices once on the host.
    ops = build_operators(params, batch)

    fwd = jax.jit(conv_ae_in_forward)
    out = jax.block_until_ready(fwd(X, ops))

    assert out.shape == X.shape, (out.shape, X.shape)
    assert out.dtype == jnp.float32

    # Correctness check against an independent plain-JAX reference.
    ref = jax.block_until_ready(jax.jit(reference_forward)(X, params))
    np.testing.assert_allclose(np.asarray(out), np.asarray(ref),
                               atol=2e-2, rtol=2e-2)

    print("KERNEL_OK")
</pallas_src>

<mosaic_0001>
module attributes {stable_mosaic.version = 11 : i64} {
  func.func @kernel(%arg0: memref<96x42xf32, #tpu.memory_space<vmem>>, %arg1: memref<240x96xf32, #tpu.memory_space<vmem>>, %arg2: memref<5x42x84xf32, #tpu.memory_space<vmem>>, %arg3: memref<1x84xf32, #tpu.memory_space<vmem>>, %arg4: memref<72x48xf32, #tpu.memory_space<vmem>>, %arg5: memref<3x84x88xf32, #tpu.memory_space<vmem>>, %arg6: memref<1x88xf32, #tpu.memory_space<vmem>>, %arg7: memref<36x24xf32, #tpu.memory_space<vmem>>, %arg8: memref<3x88x48xf32, #tpu.memory_space<vmem>>, %arg9: memref<1x48xf32, #tpu.memory_space<vmem>>, %arg10: memref<72x12xf32, #tpu.memory_space<vmem>>, %arg11: memref<3x48x88xf32, #tpu.memory_space<vmem>>, %arg12: memref<1x88xf32, #tpu.memory_space<vmem>>, %arg13: memref<144x24xf32, #tpu.memory_space<vmem>>, %arg14: memref<3x88x84xf32, #tpu.memory_space<vmem>>, %arg15: memref<1x84xf32, #tpu.memory_space<vmem>>, %arg16: memref<480x48xf32, #tpu.memory_space<vmem>>, %arg17: memref<5x84x42xf32, #tpu.memory_space<vmem>>, %arg18: memref<1x42xf32, #tpu.memory_space<vmem>>, %arg19: memref<96x42xf32, #tpu.memory_space<vmem>>) attributes {dimension_semantics = [], scalar_prefetch = 0 : i64, scratch_operands = 0 : i64, tpu.core_type = #tpu.core_type<tc>} {
    %c0 = arith.constant 0 : index
    %c0_0 = arith.constant 0 : index
    %0 = vector.load %arg0[%c0, %c0_0] : memref<96x42xf32, #tpu.memory_space<vmem>>, vector<96x42xf32>
    %c0_1 = arith.constant 0 : index
    %c0_2 = arith.constant 0 : index
    %1 = vector.load %arg1[%c0_1, %c0_2] : memref<240x96xf32, #tpu.memory_space<vmem>>, vector<240x96xf32>
    %cst = arith.constant dense<0.000000e+00> : vector<240x42xf32>
    %2 = tpu.matmul %1, %0, %cst {dimension_numbers = #tpu.dot_dimension_numbers<[1], [0], [0], [1], [0, 0, 1, 1], [], []>} : vector<240x96xf32>, vector<96x42xf32>, vector<240x42xf32> -> vector<240x42xf32>
    %cst_3 = arith.constant 0.000000e+00 : f32
    %3 = vector.broadcast %cst_3 : f32 to vector<48x84xf32>
    %4 = vector.extract_strided_slice %2 {offsets = [0, 0], sizes = [48, 42], strides = [1, 1]} : vector<240x42xf32> to vector<48x42xf32>
    %c0_4 = arith.constant 0 : index
    %c0_5 = arith.constant 0 : index
    %c0_6 = arith.constant 0 : index
    %5 = vector.load %arg2[%c0_4, %c0_5, %c0_6] : memref<5x42x84xf32, #tpu.memory_space<vmem>>, vector<1x42x84xf32>
    %6 = vector.shape_cast %5 : vector<1x42x84xf32> to vector<42x84xf32>
    %cst_7 = arith.constant dense<0.000000e+00> : vector<48x84xf32>
    %7 = tpu.matmul %4, %6, %cst_7 {dimension_numbers = #tpu.dot_dimension_numbers<[1], [0], [0], [1], [0, 0, 1, 1], [], []>} : vector<48x42xf32>, vector<42x84xf32>, vector<48x84xf32> -> vector<48x84xf32>
    %8 = arith.addf %3, %7 : vector<48x84xf32>
    %9 = vector.extract_strided_slice %2 {offsets = [48, 0], sizes = [48, 42], strides = [1, 1]} : vector<240x42xf32> to vector<48x42xf32>
    %c1 = arith.constant 1 : index
    %c0_8 = arith.constant 0 : index
    %c0_9 = arith.constant 0 : index
    %10 = vector.load %arg2[%c1, %c0_8, %c0_9] : memref<5x42x84xf32, #tpu.memory_space<vmem>>, vector<1x42x84xf32>
    %11 = vector.shape_cast %10 : vector<1x42x84xf32> to vector<42x84xf32>
    %cst_10 = arith.constant dense<0.000000e+00> : vector<48x84xf32>
    %12 = tpu.matmul %9, %11, %cst_10 {dimension_numbers = #tpu.dot_dimension_numbers<[1], [0], [0], [1], [0, 0, 1, 1], [], []>} : vector<48x42xf32>, vector<42x84xf32>, vector<48x84xf32> -> vector<48x84xf32>
    %13 = arith.addf %8, %12 : vector<48x84xf32>
    %14 = vector.extract_strided_slice %2 {offsets = [96, 0], sizes = [48, 42], strides = [1, 1]} : vector<240x42xf32> to vector<48x42xf32>
    %c2 = arith.constant 2 : index
    %c0_11 = arith.constant 0 : index
    %c0_12 = arith.constant 0 : index
    %15 = vector.load %arg2[%c2, %c0_11, %c0_12] : memref<5x42x84xf32, #tpu.memory_space<vmem>>, vector<1x42x84xf32>
    %16 = vector.shape_cast %15 : vector<1x42x84xf32> to vector<42x84xf32>
    %cst_13 = arith.constant dense<0.000000e+00> : vector<48x84xf32>
    %17 = tpu.matmul %14, %16, %cst_13 {dimension_numbers = #tpu.dot_dimension_numbers<[1], [0], [0], [1], [0, 0, 1, 1], [], []>} : vector<48x42xf32>, vector<42x84xf32>, vector<48x84xf32> -> vector<48x84xf32>
    %18 = arith.addf %13, %17 : vector<48x84xf32>
    %19 = vector.extract_strided_slice %2 {offsets = [144, 0], sizes = [48, 42], strides = [1, 1]} : vector<240x42xf32> to vector<48x42xf32>
    %c3 = arith.constant 3 : index
    %c0_14 = arith.constant 0 : index
    %c0_15 = arith.constant 0 : index
    %20 = vector.load %arg2[%c3, %c0_14, %c0_15] : memref<5x42x84xf32, #tpu.memory_space<vmem>>, vector<1x42x84xf32>
    %21 = vector.shape_cast %20 : vector<1x42x84xf32> to vector<42x84xf32>
    %cst_16 = arith.constant dense<0.000000e+00> : vector<48x84xf32>
    %22 = tpu.matmul %19, %21, %cst_16 {dimension_numbers = #tpu.dot_dimension_numbers<[1], [0], [0], [1], [0, 0, 1, 1], [], []>} : vector<48x42xf32>, vector<42x84xf32>, vector<48x84xf32> -> vector<48x84xf32>
    %23 = arith.addf %18, %22 : vector<48x84xf32>
    %24 = vector.extract_strided_slice %2 {offsets = [192, 0], sizes = [48, 42], strides = [1, 1]} : vector<240x42xf32> to vector<48x42xf32>
    %c4 = arith.constant 4 : index
    %c0_17 = arith.constant 0 : index
    %c0_18 = arith.constant 0 : index
    %25 = vector.load %arg2[%c4, %c0_17, %c0_18] : memref<5x42x84xf32, #tpu.memory_space<vmem>>, vector<1x42x84xf32>
    %26 = vector.shape_cast %25 : vector<1x42x84xf32> to vector<42x84xf32>
    %cst_19 = arith.constant dense<0.000000e+00> : vector<48x84xf32>
    %27 = tpu.matmul %24, %26, %cst_19 {dimension_numbers = #tpu.dot_dimension_numbers<[1], [0], [0], [1], [0, 0, 1, 1], [], []>} : vector<48x42xf32>, vector<42x84xf32>, vector<48x84xf32> -> vector<48x84xf32>
    %28 = arith.addf %23, %27 : vector<48x84xf32>
    %c0_20 = arith.constant 0 : index
    %c0_21 = arith.constant 0 : index
    %29 = vector.load %arg3[%c0_20, %c0_21] : memref<1x84xf32, #tpu.memory_space<vmem>>, vector<1x84xf32>
    %30 = vector.broadcast %29 : vector<1x84xf32> to vector<48x84xf32>
    %31 = arith.addf %28, %30 : vector<48x84xf32>
    %cst_22 = arith.constant 0.000000e+00 : f32
    %32 = vector.broadcast %cst_22 : f32 to vector<48x84xf32>
    %33 = arith.maximumf %31, %32 : vector<48x84xf32>
    %c0_23 = arith.constant 0 : index
    %c0_24 = arith.constant 0 : index
    %34 = vector.load %arg4[%c0_23, %c0_24] : memref<72x48xf32, #tpu.memory_space<vmem>>, vector<72x48xf32>
    %cst_25 = arith.constant dense<0.000000e+00> : vector<72x84xf32>
    %35 = tpu.matmul %34, %33, %cst_25 {dimension_numbers = #tpu.dot_dimension_numbers<[1], [0], [0], [1], [0, 0, 1, 1], [], []>} : vector<72x48xf32>, vector<48x84xf32>, vector<72x84xf32> -> vector<72x84xf32>
    %cst_26 = arith.constant 0.000000e+00 : f32
    %36 = vector.broadcast %cst_26 : f32 to vector<24x88xf32>
    %37 = vector.extract_strided_slice %35 {offsets = [0, 0], sizes = [24, 84], strides = [1, 1]} : vector<72x84xf32> to vector<24x84xf32>
    %c0_27 = arith.constant 0 : index
    %c0_28 = arith.constant 0 : index
    %c0_29 = arith.constant 0 : index
    %38 = vector.load %arg5[%c0_27, %c0_28, %c0_29] : memref<3x84x88xf32, #tpu.memory_space<vmem>>, vector<1x84x88xf32>
    %39 = vector.shape_cast %38 : vector<1x84x88xf32> to vector<84x88xf32>
    %cst_30 = arith.constant dense<0.000000e+00> : vector<24x88xf32>
    %40 = tpu.matmul %37, %39, %cst_30 {dimension_numbers = #tpu.dot_dimension_numbers<[1], [0], [0], [1], [0, 0, 1, 1], [], []>} : vector<24x84xf32>, vector<84x88xf32>, vector<24x88xf32> -> vector<24x88xf32>
    %41 = arith.addf %36, %40 : vector<24x88xf32>
    %42 = vector.extract_strided_slice %35 {offsets = [24, 0], sizes = [24, 84], strides = [1, 1]} : vector<72x84xf32> to vector<24x84xf32>
    %c1_31 = arith.constant 1 : index
    %c0_32 = arith.constant 0 : index
    %c0_33 = arith.constant 0 : index
    %43 = vector.load %arg5[%c1_31, %c0_32, %c0_33] : memref<3x84x88xf32, #tpu.memory_space<vmem>>, vector<1x84x88xf32>
    %44 = vector.shape_cast %43 : vector<1x84x88xf32> to vector<84x88xf32>
    %cst_34 = arith.constant dense<0.000000e+00> : vector<24x88xf32>
    %45 = tpu.matmul %42, %44, %cst_34 {dimension_numbers = #tpu.dot_dimension_numbers<[1], [0], [0], [1], [0, 0, 1, 1], [], []>} : vector<24x84xf32>, vector<84x88xf32>, vector<24x88xf32> -> vector<24x88xf32>
    %46 = arith.addf %41, %45 : vector<24x88xf32>
    %47 = vector.extract_strided_slice %35 {offsets = [48, 0], sizes = [24, 84], strides = [1, 1]} : vector<72x84xf32> to vector<24x84xf32>
    %c2_35 = arith.constant 2 : index
    %c0_36 = arith.constant 0 : index
    %c0_37 = arith.constant 0 : index
    %48 = vector.load %arg5[%c2_35, %c0_36, %c0_37] : memref<3x84x88xf32, #tpu.memory_space<vmem>>, vector<1x84x88xf32>
    %49 = vector.shape_cast %48 : vector<1x84x88xf32> to vector<84x88xf32>
    %cst_38 = arith.constant dense<0.000000e+00> : vector<24x88xf32>
    %50 = tpu.matmul %47, %49, %cst_38 {dimension_numbers = #tpu.dot_dimension_numbers<[1], [0], [0], [1], [0, 0, 1, 1], [], []>} : vector<24x84xf32>, vector<84x88xf32>, vector<24x88xf32> -> vector<24x88xf32>
    %51 = arith.addf %46, %50 : vector<24x88xf32>
    %c0_39 = arith.constant 0 : index
    %c0_40 = arith.constant 0 : index
    %52 = vector.load %arg6[%c0_39, %c0_40] : memref<1x88xf32, #tpu.memory_space<vmem>>, vector<1x88xf32>
    %53 = vector.broadcast %52 : vector<1x88xf32> to vector<24x88xf32>
    %54 = arith.addf %51, %53 : vector<24x88xf32>
    %cst_41 = arith.constant 0.000000e+00 : f32
    %55 = vector.broadcast %cst_41 : f32 to vector<24x88xf32>
    %56 = arith.maximumf %54, %55 : vector<24x88xf32>
    %c0_42 = arith.constant 0 : index
    %c0_43 = arith.constant 0 : index
    %57 = vector.load %arg7[%c0_42, %c0_43] : memref<36x24xf32, #tpu.memory_space<vmem>>, vector<36x24xf32>
    %cst_44 = arith.constant dense<0.000000e+00> : vector<36x88xf32>
    %58 = tpu.matmul %57, %56, %cst_44 {dimension_numbers = #tpu.dot_dimension_numbers<[1], [0], [0], [1], [0, 0, 1, 1], [], []>} : vector<36x24xf32>, vector<24x88xf32>, vector<36x88xf32> -> vector<36x88xf32>
    %cst_45 = arith.constant 0.000000e+00 : f32
    %59 = vector.broadcast %cst_45 : f32 to vector<12x48xf32>
    %60 = vector.extract_strided_slice %58 {offsets = [0, 0], sizes = [12, 88], strides = [1, 1]} : vector<36x88xf32> to vector<12x88xf32>
    %c0_46 = arith.constant 0 : index
    %c0_47 = arith.constant 0 : index
    %c0_48 = arith.constant 0 : index
    %61 = vector.load %arg8[%c0_46, %c0_47, %c0_48] : memref<3x88x48xf32, #tpu.memory_space<vmem>>, vector<1x88x48xf32>
    %62 = vector.shape_cast %61 : vector<1x88x48xf32> to vector<88x48xf32>
    %cst_49 = arith.constant dense<0.000000e+00> : vector<12x48xf32>
    %63 = tpu.matmul %60, %62, %cst_49 {dimension_numbers = #tpu.dot_dimension_numbers<[1], [0], [0], [1], [0, 0, 1, 1], [], []>} : vector<12x88xf32>, vector<88x48xf32>, vector<12x48xf32> -> vector<12x48xf32>
    %64 = arith.addf %59, %63 : vector<12x48xf32>
    %65 = vector.extract_strided_slice %58 {offsets = [12, 0], sizes = [12, 88], strides = [1, 1]} : vector<36x88xf32> to vector<12x88xf32>
    %c1_50 = arith.constant 1 : index
    %c0_51 = arith.constant 0 : index
    %c0_52 = arith.constant 0 : index
    %66 = vector.load %arg8[%c1_50, %c0_51, %c0_52] : memref<3x88x48xf32, #tpu.memory_space<vmem>>, vector<1x88x48xf32>
    %67 = vector.shape_cast %66 : vector<1x88x48xf32> to vector<88x48xf32>
    %cst_53 = arith.constant dense<0.000000e+00> : vector<12x48xf32>
    %68 = tpu.matmul %65, %67, %cst_53 {dimension_numbers = #tpu.dot_dimension_numbers<[1], [0], [0], [1], [0, 0, 1, 1], [], []>} : vector<12x88xf32>, vector<88x48xf32>, vector<12x48xf32> -> vector<12x48xf32>
    %69 = arith.addf %64, %68 : vector<12x48xf32>
    %70 = vector.extract_strided_slice %58 {offsets = [24, 0], sizes = [12, 88], strides = [1, 1]} : vector<36x88xf32> to vector<12x88xf32>
    %c2_54 = arith.constant 2 : index
    %c0_55 = arith.constant 0 : index
    %c0_56 = arith.constant 0 : index
    %71 = vector.load %arg8[%c2_54, %c0_55, %c0_56] : memref<3x88x48xf32, #tpu.memory_space<vmem>>, vector<1x88x48xf32>
    %72 = vector.shape_cast %71 : vector<1x88x48xf32> to vector<88x48xf32>
    %cst_57 = arith.constant dense<0.000000e+00> : vector<12x48xf32>
    %73 = tpu.matmul %70, %72, %cst_57 {dimension_numbers = #tpu.dot_dimension_numbers<[1], [0], [0], [1], [0, 0, 1, 1], [], []>} : vector<12x88xf32>, vector<88x48xf32>, vector<12x48xf32> -> vector<12x48xf32>
    %74 = arith.addf %69, %73 : vector<12x48xf32>
    %c0_58 = arith.constant 0 : index
    %c0_59 = arith.constant 0 : index
    %75 = vector.load %arg9[%c0_58, %c0_59] : memref<1x48xf32, #tpu.memory_space<vmem>>, vector<1x48xf32>
    %76 = vector.broadcast %75 : vector<1x48xf32> to vector<12x48xf32>
    %77 = arith.addf %74, %76 : vector<12x48xf32>
    %cst_60 = arith.constant 0.000000e+00 : f32
    %78 = vector.broadcast %cst_60 : f32 to vector<12x48xf32>
    %79 = arith.maximumf %77, %78 : vector<12x48xf32>
    %c0_61 = arith.constant 0 : index
    %c0_62 = arith.constant 0 : index
    %80 = vector.load %arg10[%c0_61, %c0_62] : memref<72x12xf32, #tpu.memory_space<vmem>>, vector<72x12xf32>
    %cst_63 = arith.constant dense<0.000000e+00> : vector<72x48xf32>
    %81 = tpu.matmul %80, %79, %cst_63 {dimension_numbers = #tpu.dot_dimension_numbers<[1], [0], [0], [1], [0, 0, 1, 1], [], []>} : vector<72x12xf32>, vector<12x48xf32>, vector<72x48xf32> -> vector<72x48xf32>
    %cst_64 = arith.constant 0.000000e+00 : f32
    %82 = vector.broadcast %cst_64 : f32 to vector<24x88xf32>
    %83 = vector.extract_strided_slice %81 {offsets = [0, 0], sizes = [24, 48], strides = [1, 1]} : vector<72x48xf32> to vector<24x48xf32>
    %c0_65 = arith.constant 0 : index
    %c0_66 = arith.constant 0 : index
    %c0_67 = arith.constant 0 : index
    %84 = vector.load %arg11[%c0_65, %c0_66, %c0_67] : memref<3x48x88xf32, #tpu.memory_space<vmem>>, vector<1x48x88xf32>
    %85 = vector.shape_cast %84 : vector<1x48x88xf32> to vector<48x88xf32>
    %cst_68 = arith.constant dense<0.000000e+00> : vector<24x88xf32>
    %86 = tpu.matmul %83, %85, %cst_68 {dimension_numbers = #tpu.dot_dimension_numbers<[1], [0], [0], [1], [0, 0, 1, 1], [], []>} : vector<24x48xf32>, vector<48x88xf32>, vector<24x88xf32> -> vector<24x88xf32>
    %87 = arith.addf %82, %86 : vector<24x88xf32>
    %88 = vector.extract_strided_slice %81 {offsets = [24, 0], sizes = [24, 48], strides = [1, 1]} : vector<72x48xf32> to vector<24x48xf32>
    %c1_69 = arith.constant 1 : index
    %c0_70 = arith.constant 0 : index
    %c0_71 = arith.constant 0 : index
    %89 = vector.load %arg11[%c1_69, %c0_70, %c0_71] : memref<3x48x88xf32, #tpu.memory_space<vmem>>, vector<1x48x88xf32>
    %90 = vector.shape_cast %89 : vector<1x48x88xf32> to vector<48x88xf32>
    %cst_72 = arith.constant dense<0.000000e+00> : vector<24x88xf32>
    %91 = tpu.matmul %88, %90, %cst_72 {dimension_numbers = #tpu.dot_dimension_numbers<[1], [0], [0], [1], [0, 0, 1, 1], [], []>} : vector<24x48xf32>, vector<48x88xf32>, vector<24x88xf32> -> vector<24x88xf32>
    %92 = arith.addf %87, %91 : vector<24x88xf32>
    %93 = vector.extract_strided_slice %81 {offsets = [48, 0], sizes = [24, 48], strides = [1, 1]} : vector<72x48xf32> to vector<24x48xf32>
    %c2_73 = arith.constant 2 : index
    %c0_74 = arith.constant 0 : index
    %c0_75 = arith.constant 0 : index
    %94 = vector.load %arg11[%c2_73, %c0_74, %c0_75] : memref<3x48x88xf32, #tpu.memory_space<vmem>>, vector<1x48x88xf32>
    %95 = vector.shape_cast %94 : vector<1x48x88xf32> to vector<48x88xf32>
    %cst_76 = arith.constant dense<0.000000e+00> : vector<24x88xf32>
    %96 = tpu.matmul %93, %95, %cst_76 {dimension_numbers = #tpu.dot_dimension_numbers<[1], [0], [0], [1], [0, 0, 1, 1], [], []>} : vector<24x48xf32>, vector<48x88xf32>, vector<24x88xf32> -> vector<24x88xf32>
    %97 = arith.addf %92, %96 : vector<24x88xf32>
    %c0_77 = arith.constant 0 : index
    %c0_78 = arith.constant 0 : index
    %98 = vector.load %arg12[%c0_77, %c0_78] : memref<1x88xf32, #tpu.memory_space<vmem>>, vector<1x88xf32>
    %99 = vector.broadcast %98 : vector<1x88xf32> to vector<24x88xf32>
    %100 = arith.addf %97, %99 : vector<24x88xf32>
    %cst_79 = arith.constant 0.000000e+00 : f32
    %101 = vector.broadcast %cst_79 : f32 to vector<24x88xf32>
    %102 = arith.maximumf %100, %101 : vector<24x88xf32>
    %c0_80 = arith.constant 0 : index
    %c0_81 = arith.constant 0 : index
    %103 = vector.load %arg13[%c0_80, %c0_81] : memref<144x24xf32, #tpu.memory_space<vmem>>, vector<144x24xf32>
    %cst_82 = arith.constant dense<0.000000e+00> : vector<144x88xf32>
    %104 = tpu.matmul %103, %102, %cst_82 {dimension_numbers = #tpu.dot_dimension_numbers<[1], [0], [0], [1], [0, 0, 1, 1], [], []>} : vector<144x24xf32>, vector<24x88xf32>, vector<144x88xf32> -> vector<144x88xf32>
    %cst_83 = arith.constant 0.000000e+00 : f32
    %105 = vector.broadcast %cst_83 : f32 to vector<48x84xf32>
    %106 = vector.extract_strided_slice %104 {offsets = [0, 0], sizes = [48, 88], strides = [1, 1]} : vector<144x88xf32> to vector<48x88xf32>
    %c0_84 = arith.constant 0 : index
    %c0_85 = arith.constant 0 : index
    %c0_86 = arith.constant 0 : index
    %107 = vector.load %arg14[%c0_84, %c0_85, %c0_86] : memref<3x88x84xf32, #tpu.memory_space<vmem>>, vector<1x88x84xf32>
    %108 = vector.shape_cast %107 : vector<1x88x84xf32> to vector<88x84xf32>
    %cst_87 = arith.constant dense<0.000000e+00> : vector<48x84xf32>
    %109 = tpu.matmul %106, %108, %cst_87 {dimension_numbers = #tpu.dot_dimension_numbers<[1], [0], [0], [1], [0, 0, 1, 1], [], []>} : vector<48x88xf32>, vector<88x84xf32>, vector<48x84xf32> -> vector<48x84xf32>
    %110 = arith.addf %105, %109 : vector<48x84xf32>
    %111 = vector.extract_strided_slice %104 {offsets = [48, 0], sizes = [48, 88], strides = [1, 1]} : vector<144x88xf32> to vector<48x88xf32>
    %c1_88 = arith.constant 1 : index
    %c0_89 = arith.constant 0 : index
    %c0_90 = arith.constant 0 : index
    %112 = vector.load %arg14[%c1_88, %c0_89, %c0_90] : memref<3x88x84xf32, #tpu.memory_space<vmem>>, vector<1x88x84xf32>
    %113 = vector.shape_cast %112 : vector<1x88x84xf32> to vector<88x84xf32>
    %cst_91 = arith.constant dense<0.000000e+00> : vector<48x84xf32>
    %114 = tpu.matmul %111, %113, %cst_91 {dimension_numbers = #tpu.dot_dimension_numbers<[1], [0], [0], [1], [0, 0, 1, 1], [], []>} : vector<48x88xf32>, vector<88x84xf32>, vector<48x84xf32> -> vector<48x84xf32>
    %115 = arith.addf %110, %114 : vector<48x84xf32>
    %116 = vector.extract_strided_slice %104 {offsets = [96, 0], sizes = [48, 88], strides = [1, 1]} : vector<144x88xf32> to vector<48x88xf32>
    %c2_92 = arith.constant 2 : index
    %c0_93 = arith.constant 0 : index
    %c0_94 = arith.constant 0 : index
    %117 = vector.load %arg14[%c2_92, %c0_93, %c0_94] : memref<3x88x84xf32, #tpu.memory_space<vmem>>, vector<1x88x84xf32>
    %118 = vector.shape_cast %117 : vector<1x88x84xf32> to vector<88x84xf32>
    %cst_95 = arith.constant dense<0.000000e+00> : vector<48x84xf32>
    %119 = tpu.matmul %116, %118, %cst_95 {dimension_numbers = #tpu.dot_dimension_numbers<[1], [0], [0], [1], [0, 0, 1, 1], [], []>} : vector<48x88xf32>, vector<88x84xf32>, vector<48x84xf32> -> vector<48x84xf32>
    %120 = arith.addf %115, %119 : vector<48x84xf32>
    %c0_96 = arith.constant 0 : index
    %c0_97 = arith.constant 0 : index
    %121 = vector.load %arg15[%c0_96, %c0_97] : memref<1x84xf32, #tpu.memory_space<vmem>>, vector<1x84xf32>
    %122 = vector.broadcast %121 : vector<1x84xf32> to vector<48x84xf32>
    %123 = arith.addf %120, %122 : vector<48x84xf32>
    %cst_98 = arith.constant 0.000000e+00 : f32
    %124 = vector.broadcast %cst_98 : f32 to vector<48x84xf32>
    %125 = arith.maximumf %123, %124 : vector<48x84xf32>
    %c0_99 = arith.constant 0 : index
    %c0_100 = arith.constant 0 : index
    %126 = vector.load %arg16[%c0_99, %c0_100] : memref<480x48xf32, #tpu.memory_space<vmem>>, vector<480x48xf32>
    %cst_101 = arith.constant dense<0.000000e+00> : vector<480x84xf32>
    %127 = tpu.matmul %126, %125, %cst_101 {dimension_numbers = #tpu.dot_dimension_numbers<[1], [0], [0], [1], [0, 0, 1, 1], [], []>} : vector<480x48xf32>, vector<48x84xf32>, vector<480x84xf32> -> vector<480x84xf32>
    %cst_102 = arith.constant 0.000000e+00 : f32
    %128 = vector.broadcast %cst_102 : f32 to vector<96x42xf32>
    %129 = vector.extract_strided_slice %127 {offsets = [0, 0], sizes = [96, 84], strides = [1, 1]} : vector<480x84xf32> to vector<96x84xf32>
    %c0_103 = arith.constant 0 : index
    %c0_104 = arith.constant 0 : index
    %c0_105 = arith.constant 0 : index
    %130 = vector.load %arg17[%c0_103, %c0_104, %c0_105] : memref<5x84x42xf32, #tpu.memory_space<vmem>>, vector<1x84x42xf32>
    %131 = vector.shape_cast %130 : vector<1x84x42xf32> to vector<84x42xf32>
    %cst_106 = arith.constant dense<0.000000e+00> : vector<96x42xf32>
    %132 = tpu.matmul %129, %131, %cst_106 {dimension_numbers = #tpu.dot_dimension_numbers<[1], [0], [0], [1], [0, 0, 1, 1], [], []>} : vector<96x84xf32>, vector<84x42xf32>, vector<96x42xf32> -> vector<96x42xf32>
    %133 = arith.addf %128, %132 : vector<96x42xf32>
    %134 = vector.extract_strided_slice %127 {offsets = [96, 0], sizes = [96, 84], strides = [1, 1]} : vector<480x84xf32> to vector<96x84xf32>
    %c1_107 = arith.constant 1 : index
    %c0_108 = arith.constant 0 : index
    %c0_109 = arith.constant 0 : index
    %135 = vector.load %arg17[%c1_107, %c0_108, %c0_109] : memref<5x84x42xf32, #tpu.memory_space<vmem>>, vector<1x84x42xf32>
    %136 = vector.shape_cast %135 : vector<1x84x42xf32> to vector<84x42xf32>
    %cst_110 = arith.constant dense<0.000000e+00> : vector<96x42xf32>
    %137 = tpu.matmul %134, %136, %cst_110 {dimension_numbers = #tpu.dot_dimension_numbers<[1], [0], [0], [1], [0, 0, 1, 1], [], []>} : vector<96x84xf32>, vector<84x42xf32>, vector<96x42xf32> -> vector<96x42xf32>
    %138 = arith.addf %133, %137 : vector<96x42xf32>
    %139 = vector.extract_strided_slice %127 {offsets = [192, 0], sizes = [96, 84], strides = [1, 1]} : vector<480x84xf32> to vector<96x84xf32>
    %c2_111 = arith.constant 2 : index
    %c0_112 = arith.constant 0 : index
    %c0_113 = arith.constant 0 : index
    %140 = vector.load %arg17[%c2_111, %c0_112, %c0_113] : memref<5x84x42xf32, #tpu.memory_space<vmem>>, vector<1x84x42xf32>
    %141 = vector.shape_cast %140 : vector<1x84x42xf32> to vector<84x42xf32>
    %cst_114 = arith.constant dense<0.000000e+00> : vector<96x42xf32>
    %142 = tpu.matmul %139, %141, %cst_114 {dimension_numbers = #tpu.dot_dimension_numbers<[1], [0], [0], [1], [0, 0, 1, 1], [], []>} : vector<96x84xf32>, vector<84x42xf32>, vector<96x42xf32> -> vector<96x42xf32>
    %143 = arith.addf %138, %142 : vector<96x42xf32>
    %144 = vector.extract_strided_slice %127 {offsets = [288, 0], sizes = [96, 84], strides = [1, 1]} : vector<480x84xf32> to vector<96x84xf32>
    %c3_115 = arith.constant 3 : index
    %c0_116 = arith.constant 0 : index
    %c0_117 = arith.constant 0 : index
    %145 = vector.load %arg17[%c3_115, %c0_116, %c0_117] : memref<5x84x42xf32, #tpu.memory_space<vmem>>, vector<1x84x42xf32>
    %146 = vector.shape_cast %145 : vector<1x84x42xf32> to vector<84x42xf32>
    %cst_118 = arith.constant dense<0.000000e+00> : vector<96x42xf32>
    %147 = tpu.matmul %144, %146, %cst_118 {dimension_numbers = #tpu.dot_dimension_numbers<[1], [0], [0], [1], [0, 0, 1, 1], [], []>} : vector<96x84xf32>, vector<84x42xf32>, vector<96x42xf32> -> vector<96x42xf32>
    %148 = arith.addf %143, %147 : vector<96x42xf32>
    %149 = vector.extract_strided_slice %127 {offsets = [384, 0], sizes = [96, 84], strides = [1, 1]} : vector<480x84xf32> to vector<96x84xf32>
    %c4_119 = arith.constant 4 : index
    %c0_120 = arith.constant 0 : index
    %c0_121 = arith.constant 0 : index
    %150 = vector.load %arg17[%c4_119, %c0_120, %c0_121] : memref<5x84x42xf32, #tpu.memory_space<vmem>>, vector<1x84x42xf32>
    %151 = vector.shape_cast %150 : vector<1x84x42xf32> to vector<84x42xf32>
    %cst_122 = arith.constant dense<0.000000e+00> : vector<96x42xf32>
    %152 = tpu.matmul %149, %151, %cst_122 {dimension_numbers = #tpu.dot_dimension_numbers<[1], [0], [0], [1], [0, 0, 1, 1], [], []>} : vector<96x84xf32>, vector<84x42xf32>, vector<96x42xf32> -> vector<96x42xf32>
    %153 = arith.addf %148, %152 : vector<96x42xf32>
    %c0_123 = arith.constant 0 : index
    %c0_124 = arith.constant 0 : index
    %154 = vector.load %arg18[%c0_123, %c0_124] : memref<1x42xf32, #tpu.memory_space<vmem>>, vector<1x42xf32>
    %155 = vector.broadcast %154 : vector<1x42xf32> to vector<96x42xf32>
    %156 = arith.addf %153, %155 : vector<96x42xf32>
    %cst_125 = arith.constant 0.000000e+00 : f32
    %157 = vector.broadcast %cst_125 : f32 to vector<96x42xf32>
    %158 = arith.maximumf %156, %157 : vector<96x42xf32>
    %c0_126 = arith.constant 0 : index
    %c0_127 = arith.constant 0 : index
    %159 = vector.load %arg19[%c0_126, %c0_127] : memref<96x42xf32, #tpu.memory_space<vmem>>, vector<96x42xf32>
    tpu.vector_store %arg19[%c0_126, %c0_127], %158 {strides = array<i32>} : memref<96x42xf32, #tpu.memory_space<vmem>>, vector<96x42xf32>,
    return
  }
}

</mosaic_0001>

<llo_original>
// kernel: conv_ae_in_forward.1
$region0: #{conv_ae_in_forward.1}
  #allocation0 [shape = 'u32[]', space=smem, size = 0x4, offset = 0x4, fixed_abs, tag = 'smem constant byte address 0x4 - core index']
  #allocation1 [shape = 'u32[144,128]{1,0:T(1,128)}', space=vmem, size = 0x12000, scoped, tag = 'internal scratch']
  %s0 = inlined_call_operand.vmem [shape: f32[96,42], index: 0, kind: input, shape index: {}]
  %s1 = inlined_call_operand.vmem [shape: f32[240,96], index: 1, kind: input, shape index: {}]
  %s2 = inlined_call_operand.vmem [shape: f32[5,42,84], index: 2, kind: input, shape index: {}]
  %s3 = inlined_call_operand.vmem [shape: f32[1,84], index: 3, kind: input, shape index: {}]
  %s4 = inlined_call_operand.vmem [shape: f32[72,48], index: 4, kind: input, shape index: {}]
  %s5 = inlined_call_operand.vmem [shape: f32[3,84,88], index: 5, kind: input, shape index: {}]
  %s6 = inlined_call_operand.vmem [shape: f32[1,88], index: 6, kind: input, shape index: {}]
  %s7 = inlined_call_operand.vmem [shape: f32[36,24], index: 7, kind: input, shape index: {}]
  %s8 = inlined_call_operand.vmem [shape: f32[3,88,48], index: 8, kind: input, shape index: {}]
  %s9 = inlined_call_operand.vmem [shape: f32[1,48], index: 9, kind: input, shape index: {}]
  %s10 = inlined_call_operand.vmem [shape: f32[72,12], index: 10, kind: input, shape index: {}]
  %s11 = inlined_call_operand.vmem [shape: f32[3,48,88], index: 11, kind: input, shape index: {}]
  %s12 = inlined_call_operand.vmem [shape: f32[1,88], index: 12, kind: input, shape index: {}]
  %s13 = inlined_call_operand.vmem [shape: f32[144,24], index: 13, kind: input, shape index: {}]
  %s14 = inlined_call_operand.vmem [shape: f32[3,88,84], index: 14, kind: input, shape index: {}]
  %s15 = inlined_call_operand.vmem [shape: f32[1,84], index: 15, kind: input, shape index: {}]
  %s16 = inlined_call_operand.vmem [shape: f32[480,48], index: 16, kind: input, shape index: {}]
  %s17 = inlined_call_operand.vmem [shape: f32[5,84,42], index: 17, kind: input, shape index: {}]
  %s18 = inlined_call_operand.vmem [shape: f32[1,42], index: 18, kind: input, shape index: {}]
  %s19 = inlined_call_operand.vmem [shape: f32[96,42], index: 19, kind: output, shape index: {}]
  %s20 = sld [smem:[#allocation0]]
  $region86: #{conv_ae_in_forward.1} parent=0
    _
  %s22 = ssub.s32 1, %s20
  %s23 = scalar_select 0, %s22, %s20
  // Predicated region
  $region2: #{conv_ae_in_forward.1} parent=0 // pred_check
    _
  $region3: #{conv_ae_in_forward.1} parent=0 // pred_check_branch
    %25 = sbr.rel (0) target = $region5
  $region4: #{conv_ae_in_forward.1} parent=0 // pred_region
    _
  $region5: #{conv_ae_in_forward.1} parent=0 // pred_fallthru
    _
  // Predicated region
  $region6: #{conv_ae_in_forward.1} parent=0 // pred_check
    _
  $region7: #{conv_ae_in_forward.1} parent=0 // pred_check_branch
    %27 = sbr.rel (0) target = $region9
  $region8: #{conv_ae_in_forward.1} parent=0 // pred_region
    _
  $region9: #{conv_ae_in_forward.1} parent=0 // pred_fallthru
    _
  // Predicated region
  $region10: #{conv_ae_in_forward.1} parent=0 // pred_check
    _
  $region11: #{conv_ae_in_forward.1} parent=0 // pred_check_branch
    %29 = sbr.rel (0) target = $region13
  $region12: #{conv_ae_in_forward.1} parent=0 // pred_region
    _
  $region13: #{conv_ae_in_forward.1} parent=0 // pred_fallthru
    _
  // Predicated region
  $region14: #{conv_ae_in_forward.1} parent=0 // pred_check
    _
  $region15: #{conv_ae_in_forward.1} parent=0 // pred_check_branch
    %31 = sbr.rel (0) target = $region17
  $region16: #{conv_ae_in_forward.1} parent=0 // pred_region
    _
  $region17: #{conv_ae_in_forward.1} parent=0 // pred_fallthru
    _
  // Predicated region
  $region18: #{conv_ae_in_forward.1} parent=0 // pred_check
    _
  $region19: #{conv_ae_in_forward.1} parent=0 // pred_check_branch
    %33 = sbr.rel (0) target = $region21
  $region20: #{conv_ae_in_forward.1} parent=0 // pred_region
    _
  $region21: #{conv_ae_in_forward.1} parent=0 // pred_fallthru
    _
  // Predicated region
  $region22: #{conv_ae_in_forward.1} parent=0 // pred_check
    _
  $region23: #{conv_ae_in_forward.1} parent=0 // pred_check_branch
    %35 = sbr.rel (0) target = $region25
  $region24: #{conv_ae_in_forward.1} parent=0 // pred_region
    _
  $region25: #{conv_ae_in_forward.1} parent=0 // pred_fallthru
    _
  // Predicated region
  $region26: #{conv_ae_in_forward.1} parent=0 // pred_check
    _
  $region27: #{conv_ae_in_forward.1} parent=0 // pred_check_branch
    %37 = sbr.rel (0) target = $region29
  $region28: #{conv_ae_in_forward.1} parent=0 // pred_region
    _
  $region29: #{conv_ae_in_forward.1} parent=0 // pred_fallthru
    _
  // Predicated region
  $region30: #{conv_ae_in_forward.1} parent=0 // pred_check
    _
  $region31: #{conv_ae_in_forward.1} parent=0 // pred_check_branch
    %39 = sbr.rel (0) target = $region33
  $region32: #{conv_ae_in_forward.1} parent=0 // pred_region
    _
  $region33: #{conv_ae_in_forward.1} parent=0 // pred_fallthru
    _
  // Predicated region
  $region34: #{conv_ae_in_forward.1} parent=0 // pred_check
    _
  $region35: #{conv_ae_in_forward.1} parent=0 // pred_check_branch
    %41 = sbr.rel (0) target = $region37
  $region36: #{conv_ae_in_forward.1} parent=0 // pred_region
    _
  $region37: #{conv_ae_in_forward.1} parent=0 // pred_fallthru
    _
  // Predicated region
  $region38: #{conv_ae_in_forward.1} parent=0 // pred_check
    _
  $region39: #{conv_ae_in_forward.1} parent=0 // pred_check_branch
    %43 = sbr.rel (0) target = $region41
  $region40: #{conv_ae_in_forward.1} parent=0 // pred_region
    _
  $region41: #{conv_ae_in_forward.1} parent=0 // pred_fallthru
    _
  // Predicated region
  $region42: #{conv_ae_in_forward.1} parent=0 // pred_check
    _
  $region43: #{conv_ae_in_forward.1} parent=0 // pred_check_branch
    %45 = sbr.rel (0) target = $region45
  $region44: #{conv_ae_in_forward.1} parent=0 // pred_region
    _
  $region45: #{conv_ae_in_forward.1} parent=0 // pred_fallthru
    _
  // Predicated region
  $region46: #{conv_ae_in_forward.1} parent=0 // pred_check
    _
  $region47: #{conv_ae_in_forward.1} parent=0 // pred_check_branch
    %47 = sbr.rel (0) target = $region49
  $region48: #{conv_ae_in_forward.1} parent=0 // pred_region
    _
  $region49: #{conv_ae_in_forward.1} parent=0 // pred_fallthru
    _
  // Predicated region
  $region50: #{conv_ae_in_forward.1} parent=0 // pred_check
    _
  $region51: #{conv_ae_in_forward.1} parent=0 // pred_check_branch
    %49 = sbr.rel (0) target = $region53
  $region52: #{conv_ae_in_forward.1} parent=0 // pred_region
    _
  $region53: #{conv_ae_in_forward.1} parent=0 // pred_fallthru
    _
  // Predicated region
  $region54: #{conv_ae_in_forward.1} parent=0 // pred_check
    _
  $region55: #{conv_ae_in_forward.1} parent=0 // pred_check_branch
    %51 = sbr.rel (0) target = $region57
  $region56: #{conv_ae_in_forward.1} parent=0 // pred_region
    _
  $region57: #{conv_ae_in_forward.1} parent=0 // pred_fallthru
    _
  // Predicated region
  $region58: #{conv_ae_in_forward.1} parent=0 // pred_check
    _
  $region59: #{conv_ae_in_forward.1} parent=0 // pred_check_branch
    %53 = sbr.rel (0) target = $region61
  $region60: #{conv_ae_in_forward.1} parent=0 // pred_region
    _
  $region61: #{conv_ae_in_forward.1} parent=0 // pred_fallthru
    _
  // Predicated region
  $region62: #{conv_ae_in_forward.1} parent=0 // pred_check
    _
  $region63: #{conv_ae_in_forward.1} parent=0 // pred_check_branch
    %55 = sbr.rel (0) target = $region65
  $region64: #{conv_ae_in_forward.1} parent=0 // pred_region
    _
  $region65: #{conv_ae_in_forward.1} parent=0 // pred_fallthru
    _
  // Predicated region
  $region66: #{conv_ae_in_forward.1} parent=0 // pred_check
    _
  $region67: #{conv_ae_in_forward.1} parent=0 // pred_check_branch
    %57 = sbr.rel (0) target = $region69
  $region68: #{conv_ae_in_forward.1} parent=0 // pred_region
    _
  $region69: #{conv_ae_in_forward.1} parent=0 // pred_fallthru
    _
  // Predicated region
  $region70: #{conv_ae_in_forward.1} parent=0 // pred_check
    _
  $region71: #{conv_ae_in_forward.1} parent=0 // pred_check_branch
    %59 = sbr.rel (0) target = $region73
  $region72: #{conv_ae_in_forward.1} parent=0 // pred_region
    _
  $region73: #{conv_ae_in_forward.1} parent=0 // pred_fallthru
    _
  // Predicated region
  $region74: #{conv_ae_in_forward.1} parent=0 // pred_check
    _
  $region75: #{conv_ae_in_forward.1} parent=0 // pred_check_branch
    %61 = sbr.rel (0) target = $region77
  $region76: #{conv_ae_in_forward.1} parent=0 // pred_region
    _
  $region77: #{conv_ae_in_forward.1} parent=0 // pred_fallthru
    _
  %v62 = vld [vmem:[%s0] sm:$0xff]
  %v63 = vld [vmem:[%s0 + $0x8] sm:$0xff]
  %v64 = vld [vmem:[%s0 + $0x10] sm:$0xff]
  %v65 = vld [vmem:[%s0 + $0x18] sm:$0xff]
  %v66 = vld [vmem:[%s0 + $0x20] sm:$0xff]
  %v67 = vld [vmem:[%s0 + $0x28] sm:$0xff]
  %v68 = vld [vmem:[%s0 + $0x30] sm:$0xff]
  %v69 = vld [vmem:[%s0 + $0x38] sm:$0xff]
  %v70 = vld [vmem:[%s0 + $0x40] sm:$0xff]
  %v71 = vld [vmem:[%s0 + $0x48] sm:$0xff]
  %v72 = vld [vmem:[%s0 + $0x50] sm:$0xff]
  %v73 = vld [vmem:[%s0 + $0x58] sm:$0xff]
  %v74 = vld [vmem:[%s1] sm:$0xff]
  %v75 = vld [vmem:[%s1 + $0x8] sm:$0xff]
  %v76 = vld [vmem:[%s1 + $0x10] sm:$0xff]
  %v77 = vld [vmem:[%s1 + $0x18] sm:$0xff]
  %v78 = vld [vmem:[%s1 + $0x20] sm:$0xff]
  %v79 = vld [vmem:[%s1 + $0x28] sm:$0xff]
  %v80 = vld [vmem:[%s1 + $0x30] sm:$0xff]
  %v81 = vld [vmem:[%s1 + $0x38] sm:$0xff]
  %v82 = vld [vmem:[%s1 + $0x40] sm:$0xff]
  %v83 = vld [vmem:[%s1 + $0x48] sm:$0xff]
  %v84 = vld [vmem:[%s1 + $0x50] sm:$0xff]
  %v85 = vld [vmem:[%s1 + $0x58] sm:$0xff]
  %v86 = vld [vmem:[%s1 + $0x60] sm:$0xff]
  %v87 = vld [vmem:[%s1 + $0x68] sm:$0xff]
  %v88 = vld [vmem:[%s1 + $0x70] sm:$0xff]
  %v89 = vld [vmem:[%s1 + $0x78] sm:$0xff]
  %v90 = vld [vmem:[%s1 + $0x80] sm:$0xff]
  %v91 = vld [vmem:[%s1 + $0x88] sm:$0xff]
  %v92 = vld [vmem:[%s1 + $0x90] sm:$0xff]
  %v93 = vld [vmem:[%s1 + $0x98] sm:$0xff]
  %v94 = vld [vmem:[%s1 + $0xa0] sm:$0xff]
  %v95 = vld [vmem:[%s1 + $0xa8] sm:$0xff]
  %v96 = vld [vmem:[%s1 + $0xb0] sm:$0xff]
  %v97 = vld [vmem:[%s1 + $0xb8] sm:$0xff]
  %v98 = vld [vmem:[%s1 + $0xc0] sm:$0xff]
  %v99 = vld [vmem:[%s1 + $0xc8] sm:$0xff]
  %v100 = vld [vmem:[%s1 + $0xd0] sm:$0xff]
  %v101 = vld [vmem:[%s1 + $0xd8] sm:$0xff]
  %v102 = vld [vmem:[%s1 + $0xe0] sm:$0xff]
  %v103 = vld [vmem:[%s1 + $0xe8] sm:$0xff]
  %vm104 = vcmask 785408
  %v106 = vsel %vm104, %v74, 0
  %v109 = vsel %vm104, %v75, 0
  %v112 = vsel %vm104, %v76, 0
  %v115 = vsel %vm104, %v77, 0
  %v118 = vsel %vm104, %v78, 0
  %v121 = vsel %vm104, %v79, 0
  %v124 = vsel %vm104, %v80, 0
  %v127 = vsel %vm104, %v81, 0
  %v130 = vsel %vm104, %v82, 0
  %v133 = vsel %vm104, %v83, 0
  %v136 = vsel %vm104, %v84, 0
  %v139 = vsel %vm104, %v85, 0
  %v142 = vsel %vm104, %v86, 0
  %v145 = vsel %vm104, %v87, 0
  %v148 = vsel %vm104, %v88, 0
  %v151 = vsel %vm104, %v89, 0
  %v154 = vsel %vm104, %v90, 0
  %v157 = vsel %vm104, %v91, 0
  %v160 = vsel %vm104, %v92, 0
  %v163 = vsel %vm104, %v93, 0
  %v166 = vsel %vm104, %v94, 0
  %v169 = vsel %vm104, %v95, 0
  %v172 = vsel %vm104, %v96, 0
  %v175 = vsel %vm104, %v97, 0
  %v178 = vsel %vm104, %v98, 0
  %v181 = vsel %vm104, %v99, 0
  %v184 = vsel %vm104, %v100, 0
  %v187 = vsel %vm104, %v101, 0
  %v190 = vsel %vm104, %v102, 0
  %v193 = vsel %vm104, %v103, 0
  %195 = vmatprep.subr.mxu0 0.0
  %196 = vmatpush1.msra.mxu0 %v62
  %197 = vmatprep.subr.mxu0 0.0
  %198 = vmatpush1.msra.mxu0 %v63
  %199 = vmatprep.subr.mxu0 0.0
  %200 = vmatpush1.msra.mxu0 %v64
  %201 = vmatprep.subr.mxu0 0.0
  %202 = vmatpush1.msra.mxu0 %v65
  %203 = vmatprep.subr.mxu0 0.0
  %204 = vmatpush1.msra.mxu0 %v66
  %205 = vmatprep.subr.mxu0 0.0
  %206 = vmatpush1.msra.mxu0 %v67
  %207 = vmatprep.subr.mxu0 0.0
  %208 = vmatpush1.msra.mxu0 %v68
  %209 = vmatprep.subr.mxu0 0.0
  %210 = vmatpush1.msra.mxu0 %v69
  %211 = vmatprep.subr.mxu0 0.0
  %212 = vmatpush1.msra.mxu0 %v70
  %213 = vmatprep.subr.mxu0 0.0
  %214 = vmatpush1.msra.mxu0 %v71
  %215 = vmatprep.subr.mxu0 0.0
  %216 = vmatpush1.msra.mxu0 %v72
  %217 = vmatprep.subr.mxu0 0.0
  %218 = vmatpush1.msra.mxu0 %v73
  %219 = vmatprep.subr.mxu0 0.0
  %220 = vmatpush1.msra.mxu0 0.0
  %221 = vmatprep.subr.mxu0 0.0
  %222 = vmatpush1.msra.mxu0 0.0
  %223 = vmatprep.subr.mxu0 0.0
  %224 = vmatpush1.msra.mxu0 0.0
  %225 = vmatprep.subr.mxu0 0.0
  %226 = vmatpush1.msra.mxu0 0.0
  %227 = vmatprep.subr.mxu0 0.0
  %228 = vmatpush1.msra.mxu0 0.0
  %229 = vmatprep.subr.mxu0 0.0
  %230 = vmatpush1.msra.mxu0 0.0
  %231 = vmatprep.subr.mxu0 0.0
  %232 = vmatpush1.msra.mxu0 0.0
  %233 = vmatprep.subr.mxu0 0.0
  %234 = vmatpush1.msra.mxu0 0.0
  %235 = vmatprep.subr.mxu0 0.0
  %236 = vmatpush1.msra.mxu0 0.0
  %237 = vmatprep.subr.mxu0 0.0
  %238 = vmatpush1.msra.mxu0 0.0
  %239 = vmatprep.subr.mxu0 0.0
  %240 = vmatpush1.msra.mxu0 0.0
  %241 = vmatprep.subr.mxu0 0.0
  %242 = vmatpush1.msra.mxu0 0.0
  %243 = vmatprep.subr.mxu0 0.0
  %244 = vmatpush1.msra.mxu0 0.0
  %245 = vmatprep.subr.mxu0 0.0
  %246 = vmatpush1.msra.mxu0 0.0
  %247 = vmatprep.subr.mxu0 0.0
  %248 = vmatpush1.msra.mxu0 0.0
  %249 = vmatprep.subr.mxu0 0.0
  %250 = vmatpush1.msra.mxu0 0.0
  %251 = vmatprep.subr.mxu0 0.0
  %252 = vmatpush1.msra.mxu0 0.0
  %253 = vmatprep.subr.mxu0 0.0
  %254 = vmatpush1.msra.mxu0 0.0
  %255 = vmatprep.subr.mxu0 0.0
  %256 = vmatpush1.msra.mxu0 0.0
  %257 = vmatprep.subr.mxu0 0.0
  %258 = vmatpush1.msra.mxu0 0.0
  %259 = vmatprep.mubr.f32.mxu0 0.0
  %260 = vmatmul.mubr.f32.gmra.mrb[0].mxu0 %v106
  %v261 = vpop.f32.mrb[0].mxu0
  %v262 = vadd.f32 0.0, %v261
  %v263 = vpop.f32.mrb[0].mxu0
  %264 = vmatprep.mubr.f32.mxu0 0.0
  %265 = vmatmul.mubr.f32.gmra.mrb[0].mxu0 %v109
  %v266 = vpop.f32.mrb[0].mxu0
  %v267 = vadd.f32 0.0, %v266
  %v268 = vpop.f32.mrb[0].mxu0
  %269 = vmatprep.mubr.f32.mxu0 0.0
  %270 = vmatmul.mubr.f32.gmra.mrb[0].mxu0 %v112
  %v271 = vpop.f32.mrb[0].mxu0
  %v272 = vadd.f32 0.0, %v271
  %v273 = vpop.f32.mrb[0].mxu0
  %274 = vmatprep.mubr.f32.mxu0 0.0
  %275 = vmatmul.mubr.f32.gmra.mrb[0].mxu0 %v115
  %v276 = vpop.f32.mrb[0].mxu0
  %v277 = vadd.f32 0.0, %v276
  %v278 = vpop.f32.mrb[0].mxu0
  %279 = vmatprep.mubr.f32.mxu0 0.0
  %280 = vmatmul.mubr.f32.gmra.mrb[0].mxu0 %v118
  %v281 = vpop.f32.mrb[0].mxu0
  %v282 = vadd.f32 0.0, %v281
  %v283 = vpop.f32.mrb[0].mxu0
  %284 = vmatprep.mubr.f32.mxu0 0.0
  %285 = vmatmul.mubr.f32.gmra.mrb[0].mxu0 %v121
  %v286 = vpop.f32.mrb[0].mxu0
  %v287 = vadd.f32 0.0, %v286
  %v288 = vpop.f32.mrb[0].mxu0
  %289 = vmatprep.mubr.f32.mxu0 0.0
  %290 = vmatmul.mubr.f32.gmra.mrb[0].mxu0 %v124
  %v291 = vpop.f32.mrb[0].mxu0
  %v292 = vadd.f32 0.0, %v291
  %v293 = vpop.f32.mrb[0].mxu0
  %294 = vmatprep.mubr.f32.mxu0 0.0
  %295 = vmatmul.mubr.f32.gmra.mrb[0].mxu0 %v127
  %v296 = vpop.f32.mrb[0].mxu0
  %v297 = vadd.f32 0.0, %v296
  %v298 = vpop.f32.mrb[0].mxu0
  %299 = vmatprep.mubr.f32.mxu0 0.0
  %300 = vmatmul.mubr.f32.gmra.mrb[0].mxu0 %v130
  %v301 = vpop.f32.mrb[0].mxu0
  %v302 = vadd.f32 0.0, %v301
  %v303 = vpop.f32.mrb[0].mxu0
  %304 = vmatprep.mubr.f32.mxu0 0.0
  %305 = vmatmul.mubr.f32.gmra.mrb[0].mxu0 %v133
  %v306 = vpop.f32.mrb[0].mxu0
  %v307 = vadd.f32 0.0, %v306
  %v308 = vpop.f32.mrb[0].mxu0
  %309 = vmatprep.mubr.f32.mxu0 0.0
  %310 = vmatmul.mubr.f32.gmra.mrb[0].mxu0 %v136
  %v311 = vpop.f32.mrb[0].mxu0
  %v312 = vadd.f32 0.0, %v311
  %v313 = vpop.f32.mrb[0].mxu0
  %314 = vmatprep.mubr.f32.mxu0 0.0
  %315 = vmatmul.mubr.f32.gmra.mrb[0].mxu0 %v139
  %v316 = vpop.f32.mrb[0].mxu0
  %v317 = vadd.f32 0.0, %v316
  %v318 = vpop.f32.mrb[0].mxu0
  %319 = vmatprep.mubr.f32.mxu0 0.0
  %320 = vmatmul.mubr.f32.gmra.mrb[0].mxu0 %v142
  %v321 = vpop.f32.mrb[0].mxu0
  %v322 = vadd.f32 0.0, %v321
  %v323 = vpop.f32.mrb[0].mxu0
  %324 = vmatprep.mubr.f32.mxu0 0.0
  %325 = vmatmul.mubr.f32.gmra.mrb[0].mxu0 %v145
  %v326 = vpop.f32.mrb[0].mxu0
  %v327 = vadd.f32 0.0, %v326
  %v328 = vpop.f32.mrb[0].mxu0
  %329 = vmatprep.mubr.f32.mxu0 0.0
  %330 = vmatmul.mubr.f32.gmra.mrb[0].mxu0 %v148
  %v331 = vpop.f32.mrb[0].mxu0
  %v332 = vadd.f32 0.0, %v331
  %v333 = vpop.f32.mrb[0].mxu0
  %334 = vmatprep.mubr.f32.mxu0 0.0
  %335 = vmatmul.mubr.f32.gmra.mrb[0].mxu0 %v151
  %v336 = vpop.f32.mrb[0].mxu0
  %v337 = vadd.f32 0.0, %v336
  %v338 = vpop.f32.mrb[0].mxu0
  %339 = vmatprep.mubr.f32.mxu0 0.0
  %340 = vmatmul.mubr.f32.gmra.mrb[0].mxu0 %v154
  %v341 = vpop.f32.mrb[0].mxu0
  %v342 = vadd.f32 0.0, %v341
  %v343 = vpop.f32.mrb[0].mxu0
  %344 = vmatprep.mubr.f32.mxu0 0.0
  %345 = vmatmul.mubr.f32.gmra.mrb[0].mxu0 %v157
  %v346 = vpop.f32.mrb[0].mxu0
  %v347 = vadd.f32 0.0, %v346
  %v348 = vpop.f32.mrb[0].mxu0
  %349 = vmatprep.mubr.f32.mxu0 0.0
  %350 = vmatmul.mubr.f32.gmra.mrb[0].mxu0 %v160
  %v351 = vpop.f32.mrb[0].mxu0
  %v352 = vadd.f32 0.0, %v351
  %v353 = vpop.f32.mrb[0].mxu0
  %354 = vmatprep.mubr.f32.mxu0 0.0
  %355 = vmatmul.mubr.f32.gmra.mrb[0].mxu0 %v163
  %v356 = vpop.f32.mrb[0].mxu0
  %v357 = vadd.f32 0.0, %v356
  %v358 = vpop.f32.mrb[0].mxu0
  %359 = vmatprep.mubr.f32.mxu0 0.0
  %360 = vmatmul.mubr.f32.gmra.mrb[0].mxu0 %v166
  %v361 = vpop.f32.mrb[0].mxu0
  %v362 = vadd.f32 0.0, %v361
  %v363 = vpop.f32.mrb[0].mxu0
  %364 = vmatprep.mubr.f32.mxu0 0.0
  %365 = vmatmul.mubr.f32.gmra.mrb[0].mxu0 %v169
  %v366 = vpop.f32.mrb[0].mxu0
  %v367 = vadd.f32 0.0, %v366
  %v368 = vpop.f32.mrb[0].mxu0
  %369 = vmatprep.mubr.f32.mxu0 0.0
  %370 = vmatmul.mubr.f32.gmra.mrb[0].mxu0 %v172
  %v371 = vpop.f32.mrb[0].mxu0
  %v372 = vadd.f32 0.0, %v371
  %v373 = vpop.f32.mrb[0].mxu0
  %374 = vmatprep.mubr.f32.mxu0 0.0
  %375 = vmatmul.mubr.f32.gmra.mrb[0].mxu0 %v175
  %v376 = vpop.f32.mrb[0].mxu0
  %v377 = vadd.f32 0.0, %v376
  %v378 = vpop.f32.mrb[0].mxu0
  %379 = vmatprep.mubr.f32.mxu0 0.0
  %380 = vmatmul.mubr.f32.gmra.mrb[0].mxu0 %v178
  %v381 = vpop.f32.mrb[0].mxu0
  %v382 = vadd.f32 0.0, %v381
  %v383 = vpop.f32.mrb[0].mxu0
  %384 = vmatprep.mubr.f32.mxu0 0.0
  %385 = vmatmul.mubr.f32.gmra.mrb[0].mxu0 %v181
  %v386 = vpop.f32.mrb[0].mxu0
  %v387 = vadd.f32 0.0, %v386
  %v388 = vpop.f32.mrb[0].mxu0
  %389 = vmatprep.mubr.f32.mxu0 0.0
  %390 = vmatmul.mubr.f32.gmra.mrb[0].mxu0 %v184
  %v391 = vpop.f32.mrb[0].mxu0
  %v392 = vadd.f32 0.0, %v391
  %v393 = vpop.f32.mrb[0].mxu0
  %394 = vmatprep.mubr.f32.mxu0 0.0
  %395 = vmatmul.mubr.f32.gmra.mrb[0].mxu0 %v187
  %v396 = vpop.f32.mrb[0].mxu0
  %v397 = vadd.f32 0.0, %v396
  %v398 = vpop.f32.mrb[0].mxu0
  %399 = vmatprep.mubr.f32.mxu0 0.0
  %400 = vmatmul.mubr.f32.gmra.mrb[0].mxu0 %v190
  %v401 = vpop.f32.mrb[0].mxu0
  %v402 = vadd.f32 0.0, %v401
  %v403 = vpop.f32.mrb[0].mxu0
  %404 = vmatprep.mubr.f32.mxu0 0.0
  %405 = vmatmul.mubr.f32.gmra.mrb[0].mxu0 %v193
  %v406 = vpop.f32.mrb[0].mxu0
  %v407 = vadd.f32 0.0, %v406
  %v408 = vpop.f32.mrb[0].mxu0
  %409 = vdwg.mxu0
  %v410 = vld [vmem:[%s2] sm:$0xff]
  %v411 = vld [vmem:[%s2 + $0x8] sm:$0xff]
  %v412 = vld [vmem:[%s2 + $0x10] sm:$0xff]
  %v413 = vld [vmem:[%s2 + $0x18] sm:$0xff]
  %v414 = vld [vmem:[%s2 + $0x20] sm:$0xff]
  %v415 = vld [vmem:[%s2 + $0x28] sm:$0x3]
  %s416 = scalar_lea.vmem %s2, 48
  %v417 = vld [vmem:[%s416] sm:$0xff]
  %v418 = vld [vmem:[%s416 + $0x8] sm:$0xff]
  %v419 = vld [vmem:[%s416 + $0x10] sm:$0xff]
  %v420 = vld [vmem:[%s416 + $0x18] sm:$0xff]
  %v421 = vld [vmem:[%s416 + $0x20] sm:$0xff]
  %v422 = vld [vmem:[%s416 + $0x28] sm:$0x3]
  %vm423 = vcmask 343040
  %v425 = vsel %vm423, %v292, 0
  %v428 = vsel %vm423, %v297, 0
  %v431 = vsel %vm423, %v302, 0
  %v434 = vsel %vm423, %v307, 0
  %v437 = vsel %vm423, %v312, 0
  %v440 = vsel %vm423, %v317, 0
  %vm442 = vcmask 1041408
  %v444 = vsel %vm442, %v422, 0
  %446 = vmatprep.subr.mxu0 0.0
  %447 = vmatpush1.msra.mxu0 %v417
  %448 = vmatprep.subr.mxu0 0.0
  %449 = vmatpush1.msra.mxu0 %v418
  %450 = vmatprep.subr.mxu0 0.0
  %451 = vmatpush1.msra.mxu0 %v419
  %452 = vmatprep.subr.mxu0 0.0
  %453 = vmatpush1.msra.mxu0 %v420
  %454 = vmatprep.subr.mxu0 0.0
  %455 = vmatpush1.msra.mxu0 %v421
  %456 = vmatprep.subr.mxu0 0.0
  %457 = vmatpush1.msra.mxu0 %v444
  %458 = vmatprep.subr.mxu0 0.0
  %459 = vmatpush1.msra.mxu0 0.0
  %460 = vmatprep.subr.mxu0 0.0
  %461 = vmatpush1.msra.mxu0 0.0
  %462 = vmatprep.subr.mxu0 0.0
  %463 = vmatpush1.msra.mxu0 0.0
  %464 = vmatprep.subr.mxu0 0.0
  %465 = vmatpush1.msra.mxu0 0.0
  %466 = vmatprep.subr.mxu0 0.0
  %467 = vmatpush1.msra.mxu0 0.0
  %468 = vmatprep.subr.mxu0 0.0
  %469 = vmatpush1.msra.mxu0 0.0
  %470 = vmatprep.subr.mxu0 0.0
  %471 = vmatpush1.msra.mxu0 0.0
  %472 = vmatprep.subr.mxu0 0.0
  %473 = vmatpush1.msra.mxu0 0.0
  %474 = vmatprep.subr.mxu0 0.0
  %475 = vmatpush1.msra.mxu0 0.0
  %476 = vmatprep.subr.mxu0 0.0
  %477 = vmatpush1.msra.mxu0 0.0
  %478 = vmatprep.subr.mxu0 0.0
  %479 = vmatpush1.msra.mxu0 0.0
  %480 = vmatprep.subr.mxu0 0.0
  %481 = vmatpush1.msra.mxu0 0.0
  %482 = vmatprep.subr.mxu0 0.0
  %483 = vmatpush1.msra.mxu0 0.0
  %484 = vmatprep.subr.mxu0 0.0
  %485 = vmatpush1.msra.mxu0 0.0
  %486 = vmatprep.subr.mxu0 0.0
  %487 = vmatpush1.msra.mxu0 0.0
  %488 = vmatprep.subr.mxu0 0.0
  %489 = vmatpush1.msra.mxu0 0.0
  %490 = vmatprep.subr.mxu0 0.0
  %491 = vmatpush1.msra.mxu0 0.0
  %492 = vmatprep.subr.mxu0 0.0
  %493 = vmatpush1.msra.mxu0 0.0
  %494 = vmatprep.subr.mxu0 0.0
  %495 = vmatpush1.msra.mxu0 0.0
  %496 = vmatprep.subr.mxu0 0.0
  %497 = vmatpush1.msra.mxu0 0.0
  %498 = vmatprep.subr.mxu0 0.0
  %499 = vmatpush1.msra.mxu0 0.0
  %500 = vmatprep.subr.mxu0 0.0
  %501 = vmatpush1.msra.mxu0 0.0
  %502 = vmatprep.subr.mxu0 0.0
  %503 = vmatpush1.msra.mxu0 0.0
  %504 = vmatprep.subr.mxu0 0.0
  %505 = vmatpush1.msra.mxu0 0.0
  %506 = vmatprep.subr.mxu0 0.0
  %507 = vmatpush1.msra.mxu0 0.0
  %508 = vmatprep.subr.mxu0 0.0
  %509 = vmatpush1.msra.mxu0 0.0
  %510 = vmatprep.mubr.f32.mxu0 0.0
  %511 = vmatmul.mubr.f32.gmra.mrb[0].mxu0 %v425
  %v512 = vpop.f32.mrb[0].mxu0
  %v513 = vadd.f32 0.0, %v512
  %v514 = vpop.f32.mrb[0].mxu0
  %515 = vmatprep.mubr.f32.mxu0 0.0
  %516 = vmatmul.mubr.f32.gmra.mrb[0].mxu0 %v428
  %v517 = vpop.f32.mrb[0].mxu0
  %v518 = vadd.f32 0.0, %v517
  %v519 = vpop.f32.mrb[0].mxu0
  %520 = vmatprep.mubr.f32.mxu0 0.0
  %521 = vmatmul.mubr.f32.gmra.mrb[0].mxu0 %v431
  %v522 = vpop.f32.mrb[0].mxu0
  %v523 = vadd.f32 0.0, %v522
  %v524 = vpop.f32.mrb[0].mxu0
  %525 = vmatprep.mubr.f32.mxu0 0.0
  %526 = vmatmul.mubr.f32.gmra.mrb[0].mxu0 %v434
  %v527 = vpop.f32.mrb[0].mxu0
  %v528 = vadd.f32 0.0, %v527
  %v529 = vpop.f32.mrb[0].mxu0
  %530 = vmatprep.mubr.f32.mxu0 0.0
  %531 = vmatmul.mubr.f32.gmra.mrb[0].mxu0 %v437
  %v532 = vpop.f32.mrb[0].mxu0
  %v533 = vadd.f32 0.0, %v532
  %v534 = vpop.f32.mrb[0].mxu0
  %535 = vmatprep.mubr.f32.mxu0 0.0
  %536 = vmatmul.mubr.f32.gmra.mrb[0].mxu0 %v440
  %v537 = vpop.f32.mrb[0].mxu0
  %v538 = vadd.f32 0.0, %v537
  %v539 = vpop.f32.mrb[0].mxu0
  %540 = vdwg.mxu0
  %v542 = vsel %vm423, %v262, 0
  %v545 = vsel %vm423, %v267, 0
  %v548 = vsel %vm423, %v272, 0
  %v551 = vsel %vm423, %v277, 0
  %v554 = vsel %vm423, %v282, 0
  %v557 = vsel %vm423, %v287, 0
  %v560 = vsel %vm442, %v415, 0
  %562 = vmatprep.subr.mxu0 0.0
  %563 = vmatpush1.msra.mxu0 %v410
  %564 = vmatprep.subr.mxu0 0.0
  %565 = vmatpush1.msra.mxu0 %v411
  %566 = vmatprep.subr.mxu0 0.0
  %567 = vmatpush1.msra.mxu0 %v412
  %568 = vmatprep.subr.mxu0 0.0
  %569 = vmatpush1.msra.mxu0 %v413
  %570 = vmatprep.subr.mxu0 0.0
  %571 = vmatpush1.msra.mxu0 %v414
  %572 = vmatprep.subr.mxu0 0.0
  %573 = vmatpush1.msra.mxu0 %v560
  %574 = vmatprep.subr.mxu0 0.0
  %575 = vmatpush1.msra.mxu0 0.0
  %576 = vmatprep.subr.mxu0 0.0
  %577 = vmatpush1.msra.mxu0 0.0
  %578 = vmatprep.subr.mxu0 0.0
  %579 = vmatpush1.msra.mxu0 0.0
  %580 = vmatprep.subr.mxu0 0.0
  %581 = vmatpush1.msra.mxu0 0.0
  %582 = vmatprep.subr.mxu0 0.0
  %583 = vmatpush1.msra.mxu0 0.0
  %584 = vmatprep.subr.mxu0 0.0
  %585 = vmatpush1.msra.mxu0 0.0
  %586 = vmatprep.subr.mxu0 0.0
  %587 = vmatpush1.msra.mxu0 0.0
  %588 = vmatprep.subr.mxu0 0.0
  %589 = vmatpush1.msra.mxu0 0.0
  %590 = vmatprep.subr.mxu0 0.0
  %591 = vmatpush1.msra.mxu0 0.0
  %592 = vmatprep.subr.mxu0 0.0
  %593 = vmatpush1.msra.mxu0 0.0
  %594 = vmatprep.subr.mxu0 0.0
  %595 = vmatpush1.msra.mxu0 0.0
  %596 = vmatprep.subr.mxu0 0.0
  %597 = vmatpush1.msra.mxu0 0.0
  %598 = vmatprep.subr.mxu0 0.0
  %599 = vmatpush1.msra.mxu0 0.0
  %600 = vmatprep.subr.mxu0 0.0
  %601 = vmatpush1.msra.mxu0 0.0
  %602 = vmatprep.subr.mxu0 0.0
  %603 = vmatpush1.msra.mxu0 0.0
  %604 = vmatprep.subr.mxu0 0.0
  %605 = vmatpush1.msra.mxu0 0.0
  %606 = vmatprep.subr.mxu0 0.0
  %607 = vmatpush1.msra.mxu0 0.0
  %608 = vmatprep.subr.mxu0 0.0
  %609 = vmatpush1.msra.mxu0 0.0
  %610 = vmatprep.subr.mxu0 0.0
  %611 = vmatpush1.msra.mxu0 0.0
  %612 = vmatprep.subr.mxu0 0.0
  %613 = vmatpush1.msra.mxu0 0.0
  %614 = vmatprep.subr.mxu0 0.0
  %615 = vmatpush1.msra.mxu0 0.0
  %616 = vmatprep.subr.mxu0 0.0
  %617 = vmatpush1.msra.mxu0 0.0
  %618 = vmatprep.subr.mxu0 0.0
  %619 = vmatpush1.msra.mxu0 0.0
  %620 = vmatprep.subr.mxu0 0.0
  %621 = vmatpush1.msra.mxu0 0.0
  %622 = vmatprep.subr.mxu0 0.0
  %623 = vmatpush1.msra.mxu0 0.0
  %624 = vmatprep.subr.mxu0 0.0
  %625 = vmatpush1.msra.mxu0 0.0
  %626 = vmatprep.mubr.f32.mxu0 0.0
  %627 = vmatmul.mubr.f32.gmra.mrb[0].mxu0 %v542
  %v628 = vpop.f32.mrb[0].mxu0
  %v629 = vadd.f32 %v513, %v628
  %v630 = vpop.f32.mrb[0].mxu0
  %631 = vmatprep.mubr.f32.mxu0 0.0
  %632 = vmatmul.mubr.f32.gmra.mrb[0].mxu0 %v545
  %v633 = vpop.f32.mrb[0].mxu0
  %v634 = vadd.f32 %v518, %v633
  %v635 = vpop.f32.mrb[0].mxu0
  %636 = vmatprep.mubr.f32.mxu0 0.0
  %637 = vmatmul.mubr.f32.gmra.mrb[0].mxu0 %v548
  %v638 = vpop.f32.mrb[0].mxu0
  %v639 = vadd.f32 %v523, %v638
  %v640 = vpop.f32.mrb[0].mxu0
  %641 = vmatprep.mubr.f32.mxu0 0.0
  %642 = vmatmul.mubr.f32.gmra.mrb[0].mxu0 %v551
  %v643 = vpop.f32.mrb[0].mxu0
  %v644 = vadd.f32 %v528, %v643
  %v645 = vpop.f32.mrb[0].mxu0
  %646 = vmatprep.mubr.f32.mxu0 0.0
  %647 = vmatmul.mubr.f32.gmra.mrb[0].mxu0 %v554
  %v648 = vpop.f32.mrb[0].mxu0
  %v649 = vadd.f32 %v533, %v648
  %v650 = vpop.f32.mrb[0].mxu0
  %651 = vmatprep.mubr.f32.mxu0 0.0
  %652 = vmatmul.mubr.f32.gmra.mrb[0].mxu0 %v557
  %v653 = vpop.f32.mrb[0].mxu0
  %v654 = vadd.f32 %v538, %v653
  %v655 = vpop.f32.mrb[0].mxu0
  %656 = vdwg.mxu0
  %s657 = scalar_lea.vmem %s2, 96
  %v658 = vld [vmem:[%s657] sm:$0xff]
  %v659 = vld [vmem:[%s657 + $0x8] sm:$0xff]
  %v660 = vld [vmem:[%s657 + $0x10] sm:$0xff]
  %v661 = vld [vmem:[%s657 + $0x18] sm:$0xff]
  %v662 = vld [vmem:[%s657 + $0x20] sm:$0xff]
  %v663 = vld [vmem:[%s657 + $0x28] sm:$0x3]
  %v665 = vsel %vm423, %v322, 0
  %v668 = vsel %vm423, %v327, 0
  %v671 = vsel %vm423, %v332, 0
  %v674 = vsel %vm423, %v337, 0
  %v677 = vsel %vm423, %v342, 0
  %v680 = vsel %vm423, %v347, 0
  %v683 = vsel %vm442, %v663, 0
  %685 = vmatprep.subr.mxu0 0.0
  %686 = vmatpush1.msra.mxu0 %v658
  %687 = vmatprep.subr.mxu0 0.0
  %688 = vmatpush1.msra.mxu0 %v659
  %689 = vmatprep.subr.mxu0 0.0
  %690 = vmatpush1.msra.mxu0 %v660
  %691 = vmatprep.subr.mxu0 0.0
  %692 = vmatpush1.msra.mxu0 %v661
  %693 = vmatprep.subr.mxu0 0.0
  %694 = vmatpush1.msra.mxu0 %v662
  %695 = vmatprep.subr.mxu0 0.0
  %696 = vmatpush1.msra.mxu0 %v683
  %697 = vmatprep.subr.mxu0 0.0
  %698 = vmatpush1.msra.mxu0 0.0
  %699 = vmatprep.subr.mxu0 0.0
  %700 = vmatpush1.msra.mxu0 0.0
  %701 = vmatprep.subr.mxu0 0.0
  %702 = vmatpush1.msra.mxu0 0.0
  %703 = vmatprep.subr.mxu0 0.0
  %704 = vmatpush1.msra.mxu0 0.0
  %705 = vmatprep.subr.mxu0 0.0
  %706 = vmatpush1.msra.mxu0 0.0
  %707 = vmatprep.subr.mxu0 0.0
  %708 = vmatpush1.msra.mxu0 0.0
  %709 = vmatprep.subr.mxu0 0.0
  %710 = vmatpush1.msra.mxu0 0.0
  %711 = vmatprep.subr.mxu0 0.0
  %712 = vmatpush1.msra.mxu0 0.0
  %713 = vmatprep.subr.mxu0 0.0
  %714 = vmatpush1.msra.mxu0 0.0
  %715 = vmatprep.subr.mxu0 0.0
  %716 = vmatpush1.msra.mxu0 0.0
  %717 = vmatprep.subr.mxu0 0.0
  %718 = vmatpush1.msra.mxu0 0.0
  %719 = vmatprep.subr.mxu0 0.0
  %720 = vmatpush1.msra.mxu0 0.0
  %721 = vmatprep.subr.mxu0 0.0
  %722 = vmatpush1.msra.mxu0 0.0
  %723 = vmatprep.subr.mxu0 0.0
  %724 = vmatpush1.msra.mxu0 0.0
  %725 = vmatprep.subr.mxu0 0.0
  %726 = vmatpush1.msra.mxu0 0.0
  %727 = vmatprep.subr.mxu0 0.0
  %728 = vmatpush1.msra.mxu0 0.0
  %729 = vmatprep.subr.mxu0 0.0
  %730 = vmatpush1.msra.mxu0 0.0
  %731 = vmatprep.subr.mxu0 0.0
  %732 = vmatpush1.msra.mxu0 0.0
  %733 = vmatprep.subr.mxu0 0.0
  %734 = vmatpush1.msra.mxu0 0.0
  %735 = vmatprep.subr.mxu0 0.0
  %736 = vmatpush1.msra.mxu0 0.0
  %737 = vmatprep.subr.mxu0 0.0
  %738 = vmatpush1.msra.mxu0 0.0
  %739 = vmatprep.subr.mxu0 0.0
  %740 = vmatpush1.msra.mxu0 0.0
  %741 = vmatprep.subr.mxu0 0.0
  %742 = vmatpush1.msra.mxu0 0.0
  %743 = vmatprep.subr.mxu0 0.0
  %744 = vmatpush1.msra.mxu0 0.0
  %745 = vmatprep.subr.mxu0 0.0
  %746 = vmatpush1.msra.mxu0 0.0
  %747 = vmatprep.subr.mxu0 0.0
  %748 = vmatpush1.msra.mxu0 0.0
  %749 = vmatprep.mubr.f32.mxu0 0.0
  %750 = vmatmul.mubr.f32.gmra.mrb[0].mxu0 %v665
  %v751 = vpop.f32.mrb[0].mxu0
  %v752 = vadd.f32 0.0, %v751
  %v753 = vpop.f32.mrb[0].mxu0
  %754 = vmatprep.mubr.f32.mxu0 0.0
  %755 = vmatmul.mubr.f32.gmra.mrb[0].mxu0 %v668
  %v756 = vpop.f32.mrb[0].mxu0
  %v757 = vadd.f32 0.0, %v756
  %v758 = vpop.f32.mrb[0].mxu0
  %759 = vmatprep.mubr.f32.mxu0 0.0
  %760 = vmatmul.mubr.f32.gmra.mrb[0].mxu0 %v671
  %v761 = vpop.f32.mrb[0].mxu0
  %v762 = vadd.f32 0.0, %v761
  %v763 = vpop.f32.mrb[0].mxu0
  %764 = vmatprep.mubr.f32.mxu0 0.0
  %765 = vmatmul.mubr.f32.gmra.mrb[0].mxu0 %v674
  %v766 = vpop.f32.mrb[0].mxu0
  %v767 = vadd.f32 0.0, %v766
  %v768 = vpop.f32.mrb[0].mxu0
  %769 = vmatprep.mubr.f32.mxu0 0.0
  %770 = vmatmul.mubr.f32.gmra.mrb[0].mxu0 %v677
  %v771 = vpop.f32.mrb[0].mxu0
  %v772 = vadd.f32 0.0, %v771
  %v773 = vpop.f32.mrb[0].mxu0
  %774 = vmatprep.mubr.f32.mxu0 0.0
  %775 = vmatmul.mubr.f32.gmra.mrb[0].mxu0 %v680
  %v776 = vpop.f32.mrb[0].mxu0
  %v777 = vadd.f32 0.0, %v776
  %v778 = vpop.f32.mrb[0].mxu0
  %779 = vdwg.mxu0
  %v780 = vadd.f32 %v629, %v752
  %v781 = vadd.f32 %v634, %v757
  %v782 = vadd.f32 %v639, %v762
  %v783 = vadd.f32 %v644, %v767
  %v784 = vadd.f32 %v649, %v772
  %v785 = vadd.f32 %v654, %v777
  %s786 = scalar_lea.vmem %s2, 144
  %v787 = vld [vmem:[%s786] sm:$0xff]
  %v788 = vld [vmem:[%s786 + $0x8] sm:$0xff]
  %v789 = vld [vmem:[%s786 + $0x10] sm:$0xff]
  %v790 = vld [vmem:[%s786 + $0x18] sm:$0xff]
  %v791 = vld [vmem:[%s786 + $0x20] sm:$0xff]
  %v792 = vld [vmem:[%s786 + $0x28] sm:$0x3]
  %v794 = vsel %vm423, %v352, 0
  %v797 = vsel %vm423, %v357, 0
  %v800 = vsel %vm423, %v362, 0
  %v803 = vsel %vm423, %v367, 0
  %v806 = vsel %vm423, %v372, 0
  %v809 = vsel %vm423, %v377, 0
  %v812 = vsel %vm442, %v792, 0
  %814 = vmatprep.subr.mxu0 0.0
  %815 = vmatpush1.msra.mxu0 %v787
  %816 = vmatprep.subr.mxu0 0.0
  %817 = vmatpush1.msra.mxu0 %v788
  %818 = vmatprep.subr.mxu0 0.0
  %819 = vmatpush1.msra.mxu0 %v789
  %820 = vmatprep.subr.mxu0 0.0
  %821 = vmatpush1.msra.mxu0 %v790
  %822 = vmatprep.subr.mxu0 0.0
  %823 = vmatpush1.msra.mxu0 %v791
  %824 = vmatprep.subr.mxu0 0.0
  %825 = vmatpush1.msra.mxu0 %v812
  %826 = vmatprep.subr.mxu0 0.0
  %827 = vmatpush1.msra.mxu0 0.0
  %828 = vmatprep.subr.mxu0 0.0
  %829 = vmatpush1.msra.mxu0 0.0
  %830 = vmatprep.subr.mxu0 0.0
  %831 = vmatpush1.msra.mxu0 0.0
  %832 = vmatprep.subr.mxu0 0.0
  %833 = vmatpush1.msra.mxu0 0.0
  %834 = vmatprep.subr.mxu0 0.0
  %835 = vmatpush1.msra.mxu0 0.0
  %836 = vmatprep.subr.mxu0 0.0
  %837 = vmatpush1.msra.mxu0 0.0
  %838 = vmatprep.subr.mxu0 0.0
  %839 = vmatpush1.msra.mxu0 0.0
  %840 = vmatprep.subr.mxu0 0.0
  %841 = vmatpush1.msra.mxu0 0.0
  %842 = vmatprep.subr.mxu0 0.0
  %843 = vmatpush1.msra.mxu0 0.0
  %844 = vmatprep.subr.mxu0 0.0
  %845 = vmatpush1.msra.mxu0 0.0
  %846 = vmatprep.subr.mxu0 0.0
  %847 = vmatpush1.msra.mxu0 0.0
  %848 = vmatprep.subr.mxu0 0.0
  %849 = vmatpush1.msra.mxu0 0.0
  %850 = vmatprep.subr.mxu0 0.0
  %851 = vmatpush1.msra.mxu0 0.0
  %852 = vmatprep.subr.mxu0 0.0
  %853 = vmatpush1.msra.mxu0 0.0
  %854 = vmatprep.subr.mxu0 0.0
  %855 = vmatpush1.msra.mxu0 0.0
  %856 = vmatprep.subr.mxu0 0.0
  %857 = vmatpush1.msra.mxu0 0.0
  %858 = vmatprep.subr.mxu0 0.0
  %859 = vmatpush1.msra.mxu0 0.0
  %860 = vmatprep.subr.mxu0 0.0
  %861 = vmatpush1.msra.mxu0 0.0
  %862 = vmatprep.subr.mxu0 0.0
  %863 = vmatpush1.msra.mxu0 0.0
  %864 = vmatprep.subr.mxu0 0.0
  %865 = vmatpush1.msra.mxu0 0.0
  %866 = vmatprep.subr.mxu0 0.0
  %867 = vmatpush1.msra.mxu0 0.0
  %868 = vmatprep.subr.mxu0 0.0
  %869 = vmatpush1.msra.mxu0 0.0
  %870 = vmatprep.subr.mxu0 0.0
  %871 = vmatpush1.msra.mxu0 0.0
  %872 = vmatprep.subr.mxu0 0.0
  %873 = vmatpush1.msra.mxu0 0.0
  %874 = vmatprep.subr.mxu0 0.0
  %875 = vmatpush1.msra.mxu0 0.0
  %876 = vmatprep.subr.mxu0 0.0
  %877 = vmatpush1.msra.mxu0 0.0
  %878 = vmatprep.mubr.f32.mxu0 0.0
  %879 = vmatmul.mubr.f32.gmra.mrb[0].mxu0 %v794
  %v880 = vpop.f32.mrb[0].mxu0
  %v881 = vadd.f32 0.0, %v880
  %v882 = vpop.f32.mrb[0].mxu0
  %883 = vmatprep.mubr.f32.mxu0 0.0
  %884 = vmatmul.mubr.f32.gmra.mrb[0].mxu0 %v797
  %v885 = vpop.f32.mrb[0].mxu0
  %v886 = vadd.f32 0.0, %v885
  %v887 = vpop.f32.mrb[0].mxu0
  %888 = vmatprep.mubr.f32.mxu0 0.0
  %889 = vmatmul.mubr.f32.gmra.mrb[0].mxu0 %v800
  %v890 = vpop.f32.mrb[0].mxu0
  %v891 = vadd.f32 0.0, %v890
  %v892 = vpop.f32.mrb[0].mxu0
  %893 = vmatprep.mubr.f32.mxu0 0.0
  %894 = vmatmul.mubr.f32.gmra.mrb[0].mxu0 %v803
  %v895 = vpop.f32.mrb[0].mxu0
  %v896 = vadd.f32 0.0, %v895
  %v897 = vpop.f32.mrb[0].mxu0
  %898 = vmatprep.mubr.f32.mxu0 0.0
  %899 = vmatmul.mubr.f32.gmra.mrb[0].mxu0 %v806
  %v900 = vpop.f32.mrb[0].mxu0
  %v901 = vadd.f32 0.0, %v900
  %v902 = vpop.f32.mrb[0].mxu0
  %903 = vmatprep.mubr.f32.mxu0 0.0
  %904 = vmatmul.mubr.f32.gmra.mrb[0].mxu0 %v809
  %v905 = vpop.f32.mrb[0].mxu0
  %v906 = vadd.f32 0.0, %v905
  %v907 = vpop.f32.mrb[0].mxu0
  %908 = vdwg.mxu0
  %v909 = vadd.f32 %v780, %v881
  %v910 = vadd.f32 %v781, %v886
  %v911 = vadd.f32 %v782, %v891
  %v912 = vadd.f32 %v783, %v896
  %v913 = vadd.f32 %v784, %v901
  %v914 = vadd.f32 %v785, %v906
  %s915 = scalar_lea.vmem %s2, 192
  %v916 = vld [vmem:[%s915] sm:$0xff]
  %v917 = vld [vmem:[%s915 + $0x8] sm:$0xff]
  %v918 = vld [vmem:[%s915 + $0x10] sm:$0xff]
  %v919 = vld [vmem:[%s915 + $0x18] sm:$0xff]
  %v920 = vld [vmem:[%s915 + $0x20] sm:$0xff]
  %v921 = vld [vmem:[%s915 + $0x28] sm:$0x3]
  %v923 = vsel %vm423, %v382, 0
  %v926 = vsel %vm423, %v387, 0
  %v929 = vsel %vm423, %v392, 0
  %v932 = vsel %vm423, %v397, 0
  %v935 = vsel %vm423, %v402, 0
  %v938 = vsel %vm423, %v407, 0
  %v941 = vsel %vm442, %v921, 0
  %943 = vmatprep.subr.mxu0 0.0
  %944 = vmatpush1.msra.mxu0 %v916
  %945 = vmatprep.subr.mxu0 0.0
  %946 = vmatpush1.msra.mxu0 %v917
  %947 = vmatprep.subr.mxu0 0.0
  %948 = vmatpush1.msra.mxu0 %v918
  %949 = vmatprep.subr.mxu0 0.0
  %950 = vmatpush1.msra.mxu0 %v919
  %951 = vmatprep.subr.mxu0 0.0
  %952 = vmatpush1.msra.mxu0 %v920
  %953 = vmatprep.subr.mxu0 0.0
  %954 = vmatpush1.msra.mxu0 %v941
  %955 = vmatprep.subr.mxu0 0.0
  %956 = vmatpush1.msra.mxu0 0.0
  %957 = vmatprep.subr.mxu0 0.0
  %958 = vmatpush1.msra.mxu0 0.0
  %959 = vmatprep.subr.mxu0 0.0
  %960 = vmatpush1.msra.mxu0 0.0
  %961 = vmatprep.subr.mxu0 0.0
  %962 = vmatpush1.msra.mxu0 0.0
  %963 = vmatprep.subr.mxu0 0.0
  %964 = vmatpush1.msra.mxu0 0.0
  %965 = vmatprep.subr.mxu0 0.0
  %966 = vmatpush1.msra.mxu0 0.0
  %967 = vmatprep.subr.mxu0 0.0
  %968 = vmatpush1.msra.mxu0 0.0
  %969 = vmatprep.subr.mxu0 0.0
  %970 = vmatpush1.msra.mxu0 0.0
  %971 = vmatprep.subr.mxu0 0.0
  %972 = vmatpush1.msra.mxu0 0.0
  %973 = vmatprep.subr.mxu0 0.0
  %974 = vmatpush1.msra.mxu0 0.0
  %975 = vmatprep.subr.mxu0 0.0
  %976 = vmatpush1.msra.mxu0 0.0
  %977 = vmatprep.subr.mxu0 0.0
  %978 = vmatpush1.msra.mxu0 0.0
  %979 = vmatprep.subr.mxu0 0.0
  %980 = vmatpush1.msra.mxu0 0.0
  %981 = vmatprep.subr.mxu0 0.0
  %982 = vmatpush1.msra.mxu0 0.0
  %983 = vmatprep.subr.mxu0 0.0
  %984 = vmatpush1.msra.mxu0 0.0
  %985 = vmatprep.subr.mxu0 0.0
  %986 = vmatpush1.msra.mxu0 0.0
  %987 = vmatprep.subr.mxu0 0.0
  %988 = vmatpush1.msra.mxu0 0.0
  %989 = vmatprep.subr.mxu0 0.0
  %990 = vmatpush1.msra.mxu0 0.0
  %991 = vmatprep.subr.mxu0 0.0
  %992 = vmatpush1.msra.mxu0 0.0
  %993 = vmatprep.subr.mxu0 0.0
  %994 = vmatpush1.msra.mxu0 0.0
  %995 = vmatprep.subr.mxu0 0.0
  %996 = vmatpush1.msra.mxu0 0.0
  %997 = vmatprep.subr.mxu0 0.0
  %998 = vmatpush1.msra.mxu0 0.0
  %999 = vmatprep.subr.mxu0 0.0
  %1000 = vmatpush1.msra.mxu0 0.0
  %1001 = vmatprep.subr.mxu0 0.0
  %1002 = vmatpush1.msra.mxu0 0.0
  %1003 = vmatprep.subr.mxu0 0.0
  %1004 = vmatpush1.msra.mxu0 0.0
  %1005 = vmatprep.subr.mxu0 0.0
  %1006 = vmatpush1.msra.mxu0 0.0
  %1007 = vmatprep.mubr.f32.mxu0 0.0
  %1008 = vmatmul.mubr.f32.gmra.mrb[0].mxu0 %v923
  %v1009 = vpop.f32.mrb[0].mxu0
  %v1010 = vadd.f32 0.0, %v1009
  %v1011 = vpop.f32.mrb[0].mxu0
  %1012 = vmatprep.mubr.f32.mxu0 0.0
  %1013 = vmatmul.mubr.f32.gmra.mrb[0].mxu0 %v926
  %v1014 = vpop.f32.mrb[0].mxu0
  %v1015 = vadd.f32 0.0, %v1014
  %v1016 = vpop.f32.mrb[0].mxu0
  %1017 = vmatprep.mubr.f32.mxu0 0.0
  %1018 = vmatmul.mubr.f32.gmra.mrb[0].mxu0 %v929
  %v1019 = vpop.f32.mrb[0].mxu0
  %v1020 = vadd.f32 0.0, %v1019
  %v1021 = vpop.f32.mrb[0].mxu0
  %1022 = vmatprep.mubr.f32.mxu0 0.0
  %1023 = vmatmul.mubr.f32.gmra.mrb[0].mxu0 %v932
  %v1024 = vpop.f32.mrb[0].mxu0
  %v1025 = vadd.f32 0.0, %v1024
  %v1026 = vpop.f32.mrb[0].mxu0
  %1027 = vmatprep.mubr.f32.mxu0 0.0
  %1028 = vmatmul.mubr.f32.gmra.mrb[0].mxu0 %v935
  %v1029 = vpop.f32.mrb[0].mxu0
  %v1030 = vadd.f32 0.0, %v1029
  %v1031 = vpop.f32.mrb[0].mxu0
  %1032 = vmatprep.mubr.f32.mxu0 0.0
  %1033 = vmatmul.mubr.f32.gmra.mrb[0].mxu0 %v938
  %v1034 = vpop.f32.mrb[0].mxu0
  %v1035 = vadd.f32 0.0, %v1034
  %v1036 = vpop.f32.mrb[0].mxu0
  %1037 = vdwg.mxu0
  %v1038 = vadd.f32 %v909, %v1010
  %v1039 = vadd.f32 %v910, %v1015
  %v1040 = vadd.f32 %v911, %v1020
  %v1041 = vadd.f32 %v912, %v1025
  %v1042 = vadd.f32 %v913, %v1030
  %v1043 = vadd.f32 %v914, %v1035
  %v1044 = vld [vmem:[%s3] sm:$0x1]
  %v1046 = vlaneseq
  %v1047 = vshrl.u32 %v1046, 7
  %v1048 = vsub.s32 0, %v1047
  %v1049 = vrot.slane %v1044, %v1048
  %v1051 = vadd.f32 %v1038, %v1049
  %v1052 = vadd.f32 %v1039, %v1049
  %v1053 = vadd.f32 %v1040, %v1049
  %v1054 = vadd.f32 %v1041, %v1049
  %v1055 = vadd.f32 %v1042, %v1049
  %v1056 = vadd.f32 %v1043, %v1049
  %v1057 = vmax.f32 %v1051, 0.0
  %v1058 = vmax.f32 %v1052, 0.0
  %v1059 = vmax.f32 %v1053, 0.0
  %v1060 = vmax.f32 %v1054, 0.0
  %v1061 = vmax.f32 %v1055, 0.0
  %v1062 = vmax.f32 %v1056, 0.0
  %v1063 = vld [vmem:[%s4] sm:$0xff]
  %v1064 = vld [vmem:[%s4 + $0x8] sm:$0xff]
  %v1065 = vld [vmem:[%s4 + $0x10] sm:$0xff]
  %v1066 = vld [vmem:[%s4 + $0x18] sm:$0xff]
  %v1067 = vld [vmem:[%s4 + $0x20] sm:$0xff]
  %v1068 = vld [vmem:[%s4 + $0x28] sm:$0xff]
  %v1069 = vld [vmem:[%s4 + $0x30] sm:$0xff]
  %v1070 = vld [vmem:[%s4 + $0x38] sm:$0xff]
  %v1071 = vld [vmem:[%s4 + $0x40] sm:$0xff]
  %vm1072 = vcmask 392192
  %v1074 = vsel %vm1072, %v1063, 0
  %v1077 = vsel %vm1072, %v1064, 0
  %v1080 = vsel %vm1072, %v1065, 0
  %v1083 = vsel %vm1072, %v1066, 0
  %v1086 = vsel %vm1072, %v1067, 0
  %v1089 = vsel %vm1072, %v1068, 0
  %v1092 = vsel %vm1072, %v1069, 0
  %v1095 = vsel %vm1072, %v1070, 0
  %v1098 = vsel %vm1072, %v1071, 0
  %1100 = vmatprep.subr.mxu0 0.0
  %1101 = vmatpush1.msra.mxu0 %v1057
  %1102 = vmatprep.subr.mxu0 0.0
  %1103 = vmatpush1.msra.mxu0 %v1058
  %1104 = vmatprep.subr.mxu0 0.0
  %1105 = vmatpush1.msra.mxu0 %v1059
  %1106 = vmatprep.subr.mxu0 0.0
  %1107 = vmatpush1.msra.mxu0 %v1060
  %1108 = vmatprep.subr.mxu0 0.0
  %1109 = vmatpush1.msra.mxu0 %v1061
  %1110 = vmatprep.subr.mxu0 0.0
  %1111 = vmatpush1.msra.mxu0 %v1062
  %1112 = vmatprep.subr.mxu0 0.0
  %1113 = vmatpush1.msra.mxu0 0.0
  %1114 = vmatprep.subr.mxu0 0.0
  %1115 = vmatpush1.msra.mxu0 0.0
  %1116 = vmatprep.subr.mxu0 0.0
  %1117 = vmatpush1.msra.mxu0 0.0
  %1118 = vmatprep.subr.mxu0 0.0
  %1119 = vmatpush1.msra.mxu0 0.0
  %1120 = vmatprep.subr.mxu0 0.0
  %1121 = vmatpush1.msra.mxu0 0.0
  %1122 = vmatprep.subr.mxu0 0.0
  %1123 = vmatpush1.msra.mxu0 0.0
  %1124 = vmatprep.subr.mxu0 0.0
  %1125 = vmatpush1.msra.mxu0 0.0
  %1126 = vmatprep.subr.mxu0 0.0
  %1127 = vmatpush1.msra.mxu0 0.0
  %1128 = vmatprep.subr.mxu0 0.0
  %1129 = vmatpush1.msra.mxu0 0.0
  %1130 = vmatprep.subr.mxu0 0.0
  %1131 = vmatpush1.msra.mxu0 0.0
  %1132 = vmatprep.subr.mxu0 0.0
  %1133 = vmatpush1.msra.mxu0 0.0
  %1134 = vmatprep.subr.mxu0 0.0
  %1135 = vmatpush1.msra.mxu0 0.0
  %1136 = vmatprep.subr.mxu0 0.0
  %1137 = vmatpush1.msra.mxu0 0.0
  %1138 = vmatprep.subr.mxu0 0.0
  %1139 = vmatpush1.msra.mxu0 0.0
  %1140 = vmatprep.subr.mxu0 0.0
  %1141 = vmatpush1.msra.mxu0 0.0
  %1142 = vmatprep.subr.mxu0 0.0
  %1143 = vmatpush1.msra.mxu0 0.0
  %1144 = vmatprep.subr.mxu0 0.0
  %1145 = vmatpush1.msra.mxu0 0.0
  %1146 = vmatprep.subr.mxu0 0.0
  %1147 = vmatpush1.msra.mxu0 0.0
  %1148 = vmatprep.subr.mxu0 0.0
  %1149 = vmatpush1.msra.mxu0 0.0
  %1150 = vmatprep.subr.mxu0 0.0
  %1151 = vmatpush1.msra.mxu0 0.0
  %1152 = vmatprep.subr.mxu0 0.0
  %1153 = vmatpush1.msra.mxu0 0.0
  %1154 = vmatprep.subr.mxu0 0.0
  %1155 = vmatpush1.msra.mxu0 0.0
  %1156 = vmatprep.subr.mxu0 0.0
  %1157 = vmatpush1.msra.mxu0 0.0
  %1158 = vmatprep.subr.mxu0 0.0
  %1159 = vmatpush1.msra.mxu0 0.0
  %1160 = vmatprep.subr.mxu0 0.0
  %1161 = vmatpush1.msra.mxu0 0.0
  %1162 = vmatprep.subr.mxu0 0.0
  %1163 = vmatpush1.msra.mxu0 0.0
  %1164 = vmatprep.mubr.f32.mxu0 0.0
  %1165 = vmatmul.mubr.f32.gmra.mrb[0].mxu0 %v1074
  %v1166 = vpop.f32.mrb[0].mxu0
  %v1167 = vadd.f32 0.0, %v1166
  %v1168 = vpop.f32.mrb[0].mxu0
  %1169 = vmatprep.mubr.f32.mxu0 0.0
  %1170 = vmatmul.mubr.f32.gmra.mrb[0].mxu0 %v1077
  %v1171 = vpop.f32.mrb[0].mxu0
  %v1172 = vadd.f32 0.0, %v1171
  %v1173 = vpop.f32.mrb[0].mxu0
  %1174 = vmatprep.mubr.f32.mxu0 0.0
  %1175 = vmatmul.mubr.f32.gmra.mrb[0].mxu0 %v1080
  %v1176 = vpop.f32.mrb[0].mxu0
  %v1177 = vadd.f32 0.0, %v1176
  %v1178 = vpop.f32.mrb[0].mxu0
  %1179 = vmatprep.mubr.f32.mxu0 0.0
  %1180 = vmatmul.mubr.f32.gmra.mrb[0].mxu0 %v1083
  %v1181 = vpop.f32.mrb[0].mxu0
  %v1182 = vadd.f32 0.0, %v1181
  %v1183 = vpop.f32.mrb[0].mxu0
  %1184 = vmatprep.mubr.f32.mxu0 0.0
  %1185 = vmatmul.mubr.f32.gmra.mrb[0].mxu0 %v1086
  %v1186 = vpop.f32.mrb[0].mxu0
  %v1187 = vadd.f32 0.0, %v1186
  %v1188 = vpop.f32.mrb[0].mxu0
  %1189 = vmatprep.mubr.f32.mxu0 0.0
  %1190 = vmatmul.mubr.f32.gmra.mrb[0].mxu0 %v1089
  %v1191 = vpop.f32.mrb[0].mxu0
  %v1192 = vadd.f32 0.0, %v1191
  %v1193 = vpop.f32.mrb[0].mxu0
  %1194 = vmatprep.mubr.f32.mxu0 0.0
  %1195 = vmatmul.mubr.f32.gmra.mrb[0].mxu0 %v1092
  %v1196 = vpop.f32.mrb[0].mxu0
  %v1197 = vadd.f32 0.0, %v1196
  %v1198 = vpop.f32.mrb[0].mxu0
  %1199 = vmatprep.mubr.f32.mxu0 0.0
  %1200 = vmatmul.mubr.f32.gmra.mrb[0].mxu0 %v1095
  %v1201 = vpop.f32.mrb[0].mxu0
  %v1202 = vadd.f32 0.0, %v1201
  %v1203 = vpop.f32.mrb[0].mxu0
  %1204 = vmatprep.mubr.f32.mxu0 0.0
  %1205 = vmatmul.mubr.f32.gmra.mrb[0].mxu0 %v1098
  %v1206 = vpop.f32.mrb[0].mxu0
  %v1207 = vadd.f32 0.0, %v1206
  %v1208 = vpop.f32.mrb[0].mxu0
  %1209 = vdwg.mxu0
  %v1210 = vld [vmem:[%s5] sm:$0xff]
  %v1211 = vld [vmem:[%s5 + $0x8] sm:$0xff]
  %v1212 = vld [vmem:[%s5 + $0x10] sm:$0xff]
  %v1213 = vld [vmem:[%s5 + $0x18] sm:$0xff]
  %v1214 = vld [vmem:[%s5 + $0x20] sm:$0xff]
  %v1215 = vld [vmem:[%s5 + $0x28] sm:$0xff]
  %v1216 = vld [vmem:[%s5 + $0x30] sm:$0xff]
  %v1217 = vld [vmem:[%s5 + $0x38] sm:$0xff]
  %v1218 = vld [vmem:[%s5 + $0x40] sm:$0xff]
  %v1219 = vld [vmem:[%s5 + $0x48] sm:$0xff]
  %v1220 = vld [vmem:[%s5 + $0x50] sm:$0xf]
  %s1221 = scalar_lea.vmem %s5, 88
  %v1222 = vld [vmem:[%s1221] sm:$0xff]
  %v1223 = vld [vmem:[%s1221 + $0x8] sm:$0xff]
  %v1224 = vld [vmem:[%s1221 + $0x10] sm:$0xff]
  %v1225 = vld [vmem:[%s1221 + $0x18] sm:$0xff]
  %v1226 = vld [vmem:[%s1221 + $0x20] sm:$0xff]
  %v1227 = vld [vmem:[%s1221 + $0x28] sm:$0xff]
  %v1228 = vld [vmem:[%s1221 + $0x30] sm:$0xff]
  %v1229 = vld [vmem:[%s1221 + $0x38] sm:$0xff]
  %v1230 = vld [vmem:[%s1221 + $0x40] sm:$0xff]
  %v1231 = vld [vmem:[%s1221 + $0x48] sm:$0xff]
  %v1232 = vld [vmem:[%s1221 + $0x50] sm:$0xf]
  %vm1233 = vcmask 687104
  %v1235 = vsel %vm1233, %v1182, 0
  %v1238 = vsel %vm1233, %v1187, 0
  %v1241 = vsel %vm1233, %v1192, 0
  %vm1243 = vcmask 1043456
  %v1245 = vsel %vm1243, %v1232, 0
  %1247 = vmatprep.subr.mxu0 0.0
  %1248 = vmatpush1.msra.mxu0 %v1222
  %1249 = vmatprep.subr.mxu0 0.0
  %1250 = vmatpush1.msra.mxu0 %v1223
  %1251 = vmatprep.subr.mxu0 0.0
  %1252 = vmatpush1.msra.mxu0 %v1224
  %1253 = vmatprep.subr.mxu0 0.0
  %1254 = vmatpush1.msra.mxu0 %v1225
  %1255 = vmatprep.subr.mxu0 0.0
  %1256 = vmatpush1.msra.mxu0 %v1226
  %1257 = vmatprep.subr.mxu0 0.0
  %1258 = vmatpush1.msra.mxu0 %v1227
  %1259 = vmatprep.subr.mxu0 0.0
  %1260 = vmatpush1.msra.mxu0 %v1228
  %1261 = vmatprep.subr.mxu0 0.0
  %1262 = vmatpush1.msra.mxu0 %v1229
  %1263 = vmatprep.subr.mxu0 0.0
  %1264 = vmatpush1.msra.mxu0 %v1230
  %1265 = vmatprep.subr.mxu0 0.0
  %1266 = vmatpush1.msra.mxu0 %v1231
  %1267 = vmatprep.subr.mxu0 0.0
  %1268 = vmatpush1.msra.mxu0 %v1245
  %1269 = vmatprep.subr.mxu0 0.0
  %1270 = vmatpush1.msra.mxu0 0.0
  %1271 = vmatprep.subr.mxu0 0.0
  %1272 = vmatpush1.msra.mxu0 0.0
  %1273 = vmatprep.subr.mxu0 0.0
  %1274 = vmatpush1.msra.mxu0 0.0
  %1275 = vmatprep.subr.mxu0 0.0
  %1276 = vmatpush1.msra.mxu0 0.0
  %1277 = vmatprep.subr.mxu0 0.0
  %1278 = vmatpush1.msra.mxu0 0.0
  %1279 = vmatprep.subr.mxu0 0.0
  %1280 = vmatpush1.msra.mxu0 0.0
  %1281 = vmatprep.subr.mxu0 0.0
  %1282 = vmatpush1.msra.mxu0 0.0
  %1283 = vmatprep.subr.mxu0 0.0
  %1284 = vmatpush1.msra.mxu0 0.0
  %1285 = vmatprep.subr.mxu0 0.0
  %1286 = vmatpush1.msra.mxu0 0.0
  %1287 = vmatprep.subr.mxu0 0.0
  %1288 = vmatpush1.msra.mxu0 0.0
  %1289 = vmatprep.subr.mxu0 0.0
  %1290 = vmatpush1.msra.mxu0 0.0
  %1291 = vmatprep.subr.mxu0 0.0
  %1292 = vmatpush1.msra.mxu0 0.0
  %1293 = vmatprep.subr.mxu0 0.0
  %1294 = vmatpush1.msra.mxu0 0.0
  %1295 = vmatprep.subr.mxu0 0.0
  %1296 = vmatpush1.msra.mxu0 0.0
  %1297 = vmatprep.subr.mxu0 0.0
  %1298 = vmatpush1.msra.mxu0 0.0
  %1299 = vmatprep.subr.mxu0 0.0
  %1300 = vmatpush1.msra.mxu0 0.0
  %1301 = vmatprep.subr.mxu0 0.0
  %1302 = vmatpush1.msra.mxu0 0.0
  %1303 = vmatprep.subr.mxu0 0.0
  %1304 = vmatpush1.msra.mxu0 0.0
  %1305 = vmatprep.subr.mxu0 0.0
  %1306 = vmatpush1.msra.mxu0 0.0
  %1307 = vmatprep.subr.mxu0 0.0
  %1308 = vmatpush1.msra.mxu0 0.0
  %1309 = vmatprep.subr.mxu0 0.0
  %1310 = vmatpush1.msra.mxu0 0.0
  %1311 = vmatprep.mubr.f32.mxu0 0.0
  %1312 = vmatmul.mubr.f32.gmra.mrb[0].mxu0 %v1235
  %v1313 = vpop.f32.mrb[0].mxu0
  %v1314 = vadd.f32 0.0, %v1313
  %v1315 = vpop.f32.mrb[0].mxu0
  %1316 = vmatprep.mubr.f32.mxu0 0.0
  %1317 = vmatmul.mubr.f32.gmra.mrb[0].mxu0 %v1238
  %v1318 = vpop.f32.mrb[0].mxu0
  %v1319 = vadd.f32 0.0, %v1318
  %v1320 = vpop.f32.mrb[0].mxu0
  %1321 = vmatprep.mubr.f32.mxu0 0.0
  %1322 = vmatmul.mubr.f32.gmra.mrb[0].mxu0 %v1241
  %v1323 = vpop.f32.mrb[0].mxu0
  %v1324 = vadd.f32 0.0, %v1323
  %v1325 = vpop.f32.mrb[0].mxu0
  %1326 = vdwg.mxu0
  %v1328 = vsel %vm1233, %v1167, 0
  %v1331 = vsel %vm1233, %v1172, 0
  %v1334 = vsel %vm1233, %v1177, 0
  %v1337 = vsel %vm1243, %v1220, 0
  %1339 = vmatprep.subr.mxu0 0.0
  %1340 = vmatpush1.msra.mxu0 %v1210
  %1341 = vmatprep.subr.mxu0 0.0
  %1342 = vmatpush1.msra.mxu0 %v1211
  %1343 = vmatprep.subr.mxu0 0.0
  %1344 = vmatpush1.msra.mxu0 %v1212
  %1345 = vmatprep.subr.mxu0 0.0
  %1346 = vmatpush1.msra.mxu0 %v1213
  %1347 = vmatprep.subr.mxu0 0.0
  %1348 = vmatpush1.msra.mxu0 %v1214
  %1349 = vmatprep.subr.mxu0 0.0
  %1350 = vmatpush1.msra.mxu0 %v1215
  %1351 = vmatprep.subr.mxu0 0.0
  %1352 = vmatpush1.msra.mxu0 %v1216
  %1353 = vmatprep.subr.mxu0 0.0
  %1354 = vmatpush1.msra.mxu0 %v1217
  %1355 = vmatprep.subr.mxu0 0.0
  %1356 = vmatpush1.msra.mxu0 %v1218
  %1357 = vmatprep.subr.mxu0 0.0
  %1358 = vmatpush1.msra.mxu0 %v1219
  %1359 = vmatprep.subr.mxu0 0.0
  %1360 = vmatpush1.msra.mxu0 %v1337
  %1361 = vmatprep.subr.mxu0 0.0
  %1362 = vmatpush1.msra.mxu0 0.0
  %1363 = vmatprep.subr.mxu0 0.0
  %1364 = vmatpush1.msra.mxu0 0.0
  %1365 = vmatprep.subr.mxu0 0.0
  %1366 = vmatpush1.msra.mxu0 0.0
  %1367 = vmatprep.subr.mxu0 0.0
  %1368 = vmatpush1.msra.mxu0 0.0
  %1369 = vmatprep.subr.mxu0 0.0
  %1370 = vmatpush1.msra.mxu0 0.0
  %1371 = vmatprep.subr.mxu0 0.0
  %1372 = vmatpush1.msra.mxu0 0.0
  %1373 = vmatprep.subr.mxu0 0.0
  %1374 = vmatpush1.msra.mxu0 0.0
  %1375 = vmatprep.subr.mxu0 0.0
  %1376 = vmatpush1.msra.mxu0 0.0
  %1377 = vmatprep.subr.mxu0 0.0
  %1378 = vmatpush1.msra.mxu0 0.0
  %1379 = vmatprep.subr.mxu0 0.0
  %1380 = vmatpush1.msra.mxu0 0.0
  %1381 = vmatprep.subr.mxu0 0.0
  %1382 = vmatpush1.msra.mxu0 0.0
  %1383 = vmatprep.subr.mxu0 0.0
  %1384 = vmatpush1.msra.mxu0 0.0
  %1385 = vmatprep.subr.mxu0 0.0
  %1386 = vmatpush1.msra.mxu0 0.0
  %1387 = vmatprep.subr.mxu0 0.0
  %1388 = vmatpush1.msra.mxu0 0.0
  %1389 = vmatprep.subr.mxu0 0.0
  %1390 = vmatpush1.msra.mxu0 0.0
  %1391 = vmatprep.subr.mxu0 0.0
  %1392 = vmatpush1.msra.mxu0 0.0
  %1393 = vmatprep.subr.mxu0 0.0
  %1394 = vmatpush1.msra.mxu0 0.0
  %1395 = vmatprep.subr.mxu0 0.0
  %1396 = vmatpush1.msra.mxu0 0.0
  %1397 = vmatprep.subr.mxu0 0.0
  %1398 = vmatpush1.msra.mxu0 0.0
  %1399 = vmatprep.subr.mxu0 0.0
  %1400 = vmatpush1.msra.mxu0 0.0
  %1401 = vmatprep.subr.mxu0 0.0
  %1402 = vmatpush1.msra.mxu0 0.0
  %1403 = vmatprep.mubr.f32.mxu0 0.0
  %1404 = vmatmul.mubr.f32.gmra.mrb[0].mxu0 %v1328
  %v1405 = vpop.f32.mrb[0].mxu0
  %v1406 = vadd.f32 %v1314, %v1405
  %v1407 = vpop.f32.mrb[0].mxu0
  %1408 = vmatprep.mubr.f32.mxu0 0.0
  %1409 = vmatmul.mubr.f32.gmra.mrb[0].mxu0 %v1331
  %v1410 = vpop.f32.mrb[0].mxu0
  %v1411 = vadd.f32 %v1319, %v1410
  %v1412 = vpop.f32.mrb[0].mxu0
  %1413 = vmatprep.mubr.f32.mxu0 0.0
  %1414 = vmatmul.mubr.f32.gmra.mrb[0].mxu0 %v1334
  %v1415 = vpop.f32.mrb[0].mxu0
  %v1416 = vadd.f32 %v1324, %v1415
  %v1417 = vpop.f32.mrb[0].mxu0
  %1418 = vdwg.mxu0
  %s1419 = scalar_lea.vmem %s5, 176
  %v1420 = vld [vmem:[%s1419] sm:$0xff]
  %v1421 = vld [vmem:[%s1419 + $0x8] sm:$0xff]
  %v1422 = vld [vmem:[%s1419 + $0x10] sm:$0xff]
  %v1423 = vld [vmem:[%s1419 + $0x18] sm:$0xff]
  %v1424 = vld [vmem:[%s1419 + $0x20] sm:$0xff]
  %v1425 = vld [vmem:[%s1419 + $0x28] sm:$0xff]
  %v1426 = vld [vmem:[%s1419 + $0x30] sm:$0xff]
  %v1427 = vld [vmem:[%s1419 + $0x38] sm:$0xff]
  %v1428 = vld [vmem:[%s1419 + $0x40] sm:$0xff]
  %v1429 = vld [vmem:[%s1419 + $0x48] sm:$0xff]
  %v1430 = vld [vmem:[%s1419 + $0x50] sm:$0xf]
  %v1432 = vsel %vm1233, %v1197, 0
  %v1435 = vsel %vm1233, %v1202, 0
  %v1438 = vsel %vm1233, %v1207, 0
  %v1441 = vsel %vm1243, %v1430, 0
  %1443 = vmatprep.subr.mxu0 0.0
  %1444 = vmatpush1.msra.mxu0 %v1420
  %1445 = vmatprep.subr.mxu0 0.0
  %1446 = vmatpush1.msra.mxu0 %v1421
  %1447 = vmatprep.subr.mxu0 0.0
  %1448 = vmatpush1.msra.mxu0 %v1422
  %1449 = vmatprep.subr.mxu0 0.0
  %1450 = vmatpush1.msra.mxu0 %v1423
  %1451 = vmatprep.subr.mxu0 0.0
  %1452 = vmatpush1.msra.mxu0 %v1424
  %1453 = vmatprep.subr.mxu0 0.0
  %1454 = vmatpush1.msra.mxu0 %v1425
  %1455 = vmatprep.subr.mxu0 0.0
  %1456 = vmatpush1.msra.mxu0 %v1426
  %1457 = vmatprep.subr.mxu0 0.0
  %1458 = vmatpush1.msra.mxu0 %v1427
  %1459 = vmatprep.subr.mxu0 0.0
  %1460 = vmatpush1.msra.mxu0 %v1428
  %1461 = vmatprep.subr.mxu0 0.0
  %1462 = vmatpush1.msra.mxu0 %v1429
  %1463 = vmatprep.subr.mxu0 0.0
  %1464 = vmatpush1.msra.mxu0 %v1441
  %1465 = vmatprep.subr.mxu0 0.0
  %1466 = vmatpush1.msra.mxu0 0.0
  %1467 = vmatprep.subr.mxu0 0.0
  %1468 = vmatpush1.msra.mxu0 0.0
  %1469 = vmatprep.subr.mxu0 0.0
  %1470 = vmatpush1.msra.mxu0 0.0
  %1471 = vmatprep.subr.mxu0 0.0
  %1472 = vmatpush1.msra.mxu0 0.0
  %1473 = vmatprep.subr.mxu0 0.0
  %1474 = vmatpush1.msra.mxu0 0.0
  %1475 = vmatprep.subr.mxu0 0.0
  %1476 = vmatpush1.msra.mxu0 0.0
  %1477 = vmatprep.subr.mxu0 0.0
  %1478 = vmatpush1.msra.mxu0 0.0
  %1479 = vmatprep.subr.mxu0 0.0
  %1480 = vmatpush1.msra.mxu0 0.0
  %1481 = vmatprep.subr.mxu0 0.0
  %1482 = vmatpush1.msra.mxu0 0.0
  %1483 = vmatprep.subr.mxu0 0.0
  %1484 = vmatpush1.msra.mxu0 0.0
  %1485 = vmatprep.subr.mxu0 0.0
  %1486 = vmatpush1.msra.mxu0 0.0
  %1487 = vmatprep.subr.mxu0 0.0
  %1488 = vmatpush1.msra.mxu0 0.0
  %1489 = vmatprep.subr.mxu0 0.0
  %1490 = vmatpush1.msra.mxu0 0.0
  %1491 = vmatprep.subr.mxu0 0.0
  %1492 = vmatpush1.msra.mxu0 0.0
  %1493 = vmatprep.subr.mxu0 0.0
  %1494 = vmatpush1.msra.mxu0 0.0
  %1495 = vmatprep.subr.mxu0 0.0
  %1496 = vmatpush1.msra.mxu0 0.0
  %1497 = vmatprep.subr.mxu0 0.0
  %1498 = vmatpush1.msra.mxu0 0.0
  %1499 = vmatprep.subr.mxu0 0.0
  %1500 = vmatpush1.msra.mxu0 0.0
  %1501 = vmatprep.subr.mxu0 0.0
  %1502 = vmatpush1.msra.mxu0 0.0
  %1503 = vmatprep.subr.mxu0 0.0
  %1504 = vmatpush1.msra.mxu0 0.0
  %1505 = vmatprep.subr.mxu0 0.0
  %1506 = vmatpush1.msra.mxu0 0.0
  %1507 = vmatprep.mubr.f32.mxu0 0.0
  %1508 = vmatmul.mubr.f32.gmra.mrb[0].mxu0 %v1432
  %v1509 = vpop.f32.mrb[0].mxu0
  %v1510 = vadd.f32 0.0, %v1509
  %v1511 = vpop.f32.mrb[0].mxu0
  %1512 = vmatprep.mubr.f32.mxu0 0.0
  %1513 = vmatmul.mubr.f32.gmra.mrb[0].mxu0 %v1435
  %v1514 = vpop.f32.mrb[0].mxu0
  %v1515 = vadd.f32 0.0, %v1514
  %v1516 = vpop.f32.mrb[0].mxu0
  %1517 = vmatprep.mubr.f32.mxu0 0.0
  %1518 = vmatmul.mubr.f32.gmra.mrb[0].mxu0 %v1438
  %v1519 = vpop.f32.mrb[0].mxu0
  %v1520 = vadd.f32 0.0, %v1519
  %v1521 = vpop.f32.mrb[0].mxu0
  %1522 = vdwg.mxu0
  %v1523 = vadd.f32 %v1406, %v1510
  %v1524 = vadd.f32 %v1411, %v1515
  %v1525 = vadd.f32 %v1416, %v1520
  %v1526 = vld [vmem:[%s6] sm:$0x1]
  %v1528 = vlaneseq
  %v1529 = vshrl.u32 %v1528, 7
  %v1530 = vsub.s32 0, %v1529
  %v1531 = vrot.slane %v1526, %v1530
  %v1533 = vadd.f32 %v1523, %v1531
  %v1534 = vadd.f32 %v1524, %v1531
  %v1535 = vadd.f32 %v1525, %v1531
  %v1536 = vmax.f32 %v1533, 0.0
  %v1537 = vmax.f32 %v1534, 0.0
  %v1538 = vmax.f32 %v1535, 0.0
  %v1539 = vld [vmem:[%s7] sm:$0xff]
  %v1540 = vld [vmem:[%s7 + $0x8] sm:$0xff]
  %v1541 = vld [vmem:[%s7 + $0x10] sm:$0xff]
  %v1542 = vld [vmem:[%s7 + $0x18] sm:$0xff]
  %v1543 = vld [vmem:[%s7 + $0x20] sm:$0xf]
  %vm1544 = vcmask 195584
  %v1546 = vsel %vm1544, %v1539, 0
  %v1549 = vsel %vm1544, %v1540, 0
  %v1552 = vsel %vm1544, %v1541, 0
  %v1555 = vsel %vm1544, %v1542, 0
  %v1558 = vsel %vm1544, %v1543, 0
  %1560 = vmatprep.subr.mxu0 0.0
  %1561 = vmatpush1.msra.mxu0 %v1536
  %1562 = vmatprep.subr.mxu0 0.0
  %1563 = vmatpush1.msra.mxu0 %v1537
  %1564 = vmatprep.subr.mxu0 0.0
  %1565 = vmatpush1.msra.mxu0 %v1538
  %1566 = vmatprep.subr.mxu0 0.0
  %1567 = vmatpush1.msra.mxu0 0.0
  %1568 = vmatprep.subr.mxu0 0.0
  %1569 = vmatpush1.msra.mxu0 0.0
  %1570 = vmatprep.subr.mxu0 0.0
  %1571 = vmatpush1.msra.mxu0 0.0
  %1572 = vmatprep.subr.mxu0 0.0
  %1573 = vmatpush1.msra.mxu0 0.0
  %1574 = vmatprep.subr.mxu0 0.0
  %1575 = vmatpush1.msra.mxu0 0.0
  %1576 = vmatprep.subr.mxu0 0.0
  %1577 = vmatpush1.msra.mxu0 0.0
  %1578 = vmatprep.subr.mxu0 0.0
  %1579 = vmatpush1.msra.mxu0 0.0
  %1580 = vmatprep.subr.mxu0 0.0
  %1581 = vmatpush1.msra.mxu0 0.0
  %1582 = vmatprep.subr.mxu0 0.0
  %1583 = vmatpush1.msra.mxu0 0.0
  %1584 = vmatprep.subr.mxu0 0.0
  %1585 = vmatpush1.msra.mxu0 0.0
  %1586 = vmatprep.subr.mxu0 0.0
  %1587 = vmatpush1.msra.mxu0 0.0
  %1588 = vmatprep.subr.mxu0 0.0
  %1589 = vmatpush1.msra.mxu0 0.0
  %1590 = vmatprep.subr.mxu0 0.0
  %1591 = vmatpush1.msra.mxu0 0.0
  %1592 = vmatprep.subr.mxu0 0.0
  %1593 = vmatpush1.msra.mxu0 0.0
  %1594 = vmatprep.subr.mxu0 0.0
  %1595 = vmatpush1.msra.mxu0 0.0
  %1596 = vmatprep.subr.mxu0 0.0
  %1597 = vmatpush1.msra.mxu0 0.0
  %1598 = vmatprep.subr.mxu0 0.0
  %1599 = vmatpush1.msra.mxu0 0.0
  %1600 = vmatprep.subr.mxu0 0.0
  %1601 = vmatpush1.msra.mxu0 0.0
  %1602 = vmatprep.subr.mxu0 0.0
  %1603 = vmatpush1.msra.mxu0 0.0
  %1604 = vmatprep.subr.mxu0 0.0
  %1605 = vmatpush1.msra.mxu0 0.0
  %1606 = vmatprep.subr.mxu0 0.0
  %1607 = vmatpush1.msra.mxu0 0.0
  %1608 = vmatprep.subr.mxu0 0.0
  %1609 = vmatpush1.msra.mxu0 0.0
  %1610 = vmatprep.subr.mxu0 0.0
  %1611 = vmatpush1.msra.mxu0 0.0
  %1612 = vmatprep.subr.mxu0 0.0
  %1613 = vmatpush1.msra.mxu0 0.0
  %1614 = vmatprep.subr.mxu0 0.0
  %1615 = vmatpush1.msra.mxu0 0.0
  %1616 = vmatprep.subr.mxu0 0.0
  %1617 = vmatpush1.msra.mxu0 0.0
  %1618 = vmatprep.subr.mxu0 0.0
  %1619 = vmatpush1.msra.mxu0 0.0
  %1620 = vmatprep.subr.mxu0 0.0
  %1621 = vmatpush1.msra.mxu0 0.0
  %1622 = vmatprep.subr.mxu0 0.0
  %1623 = vmatpush1.msra.mxu0 0.0
  %1624 = vmatprep.mubr.f32.mxu0 0.0
  %1625 = vmatmul.mubr.f32.gmra.mrb[0].mxu0 %v1546
  %v1626 = vpop.f32.mrb[0].mxu0
  %v1627 = vadd.f32 0.0, %v1626
  %v1628 = vpop.f32.mrb[0].mxu0
  %1629 = vmatprep.mubr.f32.mxu0 0.0
  %1630 = vmatmul.mubr.f32.gmra.mrb[0].mxu0 %v1549
  %v1631 = vpop.f32.mrb[0].mxu0
  %v1632 = vadd.f32 0.0, %v1631
  %v1633 = vpop.f32.mrb[0].mxu0
  %1634 = vmatprep.mubr.f32.mxu0 0.0
  %1635 = vmatmul.mubr.f32.gmra.mrb[0].mxu0 %v1552
  %v1636 = vpop.f32.mrb[0].mxu0
  %v1637 = vadd.f32 0.0, %v1636
  %v1638 = vpop.f32.mrb[0].mxu0
  %1639 = vmatprep.mubr.f32.mxu0 0.0
  %1640 = vmatmul.mubr.f32.gmra.mrb[0].mxu0 %v1555
  %v1641 = vpop.f32.mrb[0].mxu0
  %v1642 = vadd.f32 0.0, %v1641
  %v1643 = vpop.f32.mrb[0].mxu0
  %1644 = vmatprep.mubr.f32.mxu0 0.0
  %1645 = vmatmul.mubr.f32.gmra.mrb[0].mxu0 %v1558
  %v1646 = vpop.f32.mrb[0].mxu0
  %v1647 = vadd.f32 0.0, %v1646
  %v1648 = vpop.f32.mrb[0].mxu0
  %1649 = vdwg.mxu0
  %v1650 = vld [vmem:[%s8] sm:$0xff]
  %v1651 = vld [vmem:[%s8 + $0x8] sm:$0xff]
  %v1652 = vld [vmem:[%s8 + $0x10] sm:$0xff]
  %v1653 = vld [vmem:[%s8 + $0x18] sm:$0xff]
  %v1654 = vld [vmem:[%s8 + $0x20] sm:$0xff]
  %v1655 = vld [vmem:[%s8 + $0x28] sm:$0xff]
  %v1656 = vld [vmem:[%s8 + $0x30] sm:$0xff]
  %v1657 = vld [vmem:[%s8 + $0x38] sm:$0xff]
  %v1658 = vld [vmem:[%s8 + $0x40] sm:$0xff]
  %v1659 = vld [vmem:[%s8 + $0x48] sm:$0xff]
  %v1660 = vld [vmem:[%s8 + $0x50] sm:$0xff]
  %s1661 = scalar_lea.vmem %s8, 88
  %v1662 = vld [vmem:[%s1661] sm:$0xff]
  %v1663 = vld [vmem:[%s1661 + $0x8] sm:$0xff]
  %v1664 = vld [vmem:[%s1661 + $0x10] sm:$0xff]
  %v1665 = vld [vmem:[%s1661 + $0x18] sm:$0xff]
  %v1666 = vld [vmem:[%s1661 + $0x20] sm:$0xff]
  %v1667 = vld [vmem:[%s1661 + $0x28] sm:$0xff]
  %v1668 = vld [vmem:[%s1661 + $0x30] sm:$0xff]
  %v1669 = vld [vmem:[%s1661 + $0x38] sm:$0xff]
  %v1670 = vld [vmem:[%s1661 + $0x40] sm:$0xff]
  %v1671 = vld [vmem:[%s1661 + $0x48] sm:$0xff]
  %v1672 = vld [vmem:[%s1661 + $0x50] sm:$0xff]
  %v1675 = vrot.slane %v1632, 4
  %v1676 = vrot.slane %v1637, 4
  %v1677 = vsel %vm1243, %v1675, %v1676
  %vm1678 = vcmask 719872
  %v1679 = vsel %vm1678, %v1677, 0
  %v1681 = vsel %vm1678, %v1676, 0
  %1683 = vmatprep.subr.mxu0 0.0
  %1684 = vmatpush1.msra.mxu0 %v1662
  %1685 = vmatprep.subr.mxu0 0.0
  %1686 = vmatpush1.msra.mxu0 %v1663
  %1687 = vmatprep.subr.mxu0 0.0
  %1688 = vmatpush1.msra.mxu0 %v1664
  %1689 = vmatprep.subr.mxu0 0.0
  %1690 = vmatpush1.msra.mxu0 %v1665
  %1691 = vmatprep.subr.mxu0 0.0
  %1692 = vmatpush1.msra.mxu0 %v1666
  %1693 = vmatprep.subr.mxu0 0.0
  %1694 = vmatpush1.msra.mxu0 %v1667
  %1695 = vmatprep.subr.mxu0 0.0
  %1696 = vmatpush1.msra.mxu0 %v1668
  %1697 = vmatprep.subr.mxu0 0.0
  %1698 = vmatpush1.msra.mxu0 %v1669
  %1699 = vmatprep.subr.mxu0 0.0
  %1700 = vmatpush1.msra.mxu0 %v1670
  %1701 = vmatprep.subr.mxu0 0.0
  %1702 = vmatpush1.msra.mxu0 %v1671
  %1703 = vmatprep.subr.mxu0 0.0
  %1704 = vmatpush1.msra.mxu0 %v1672
  %1705 = vmatprep.subr.mxu0 0.0
  %1706 = vmatpush1.msra.mxu0 0.0
  %1707 = vmatprep.subr.mxu0 0.0
  %1708 = vmatpush1.msra.mxu0 0.0
  %1709 = vmatprep.subr.mxu0 0.0
  %1710 = vmatpush1.msra.mxu0 0.0
  %1711 = vmatprep.subr.mxu0 0.0
  %1712 = vmatpush1.msra.mxu0 0.0
  %1713 = vmatprep.subr.mxu0 0.0
  %1714 = vmatpush1.msra.mxu0 0.0
  %1715 = vmatprep.subr.mxu0 0.0
  %1716 = vmatpush1.msra.mxu0 0.0
  %1717 = vmatprep.subr.mxu0 0.0
  %1718 = vmatpush1.msra.mxu0 0.0
  %1719 = vmatprep.subr.mxu0 0.0
  %1720 = vmatpush1.msra.mxu0 0.0
  %1721 = vmatprep.subr.mxu0 0.0
  %1722 = vmatpush1.msra.mxu0 0.0
  %1723 = vmatprep.subr.mxu0 0.0
  %1724 = vmatpush1.msra.mxu0 0.0
  %1725 = vmatprep.subr.mxu0 0.0
  %1726 = vmatpush1.msra.mxu0 0.0
  %1727 = vmatprep.subr.mxu0 0.0
  %1728 = vmatpush1.msra.mxu0 0.0
  %1729 = vmatprep.subr.mxu0 0.0
  %1730 = vmatpush1.msra.mxu0 0.0
  %1731 = vmatprep.subr.mxu0 0.0
  %1732 = vmatpush1.msra.mxu0 0.0
  %1733 = vmatprep.subr.mxu0 0.0
  %1734 = vmatpush1.msra.mxu0 0.0
  %1735 = vmatprep.subr.mxu0 0.0
  %1736 = vmatpush1.msra.mxu0 0.0
  %1737 = vmatprep.subr.mxu0 0.0
  %1738 = vmatpush1.msra.mxu0 0.0
  %1739 = vmatprep.subr.mxu0 0.0
  %1740 = vmatpush1.msra.mxu0 0.0
  %1741 = vmatprep.subr.mxu0 0.0
  %1742 = vmatpush1.msra.mxu0 0.0
  %1743 = vmatprep.subr.mxu0 0.0
  %1744 = vmatpush1.msra.mxu0 0.0
  %1745 = vmatprep.subr.mxu0 0.0
  %1746 = vmatpush1.msra.mxu0 0.0
  %1747 = vmatprep.mubr.f32.mxu0 0.0
  %1748 = vmatmul.mubr.f32.gmra.mrb[0].mxu0 %v1679
  %v1749 = vpop.f32.mrb[0].mxu0
  %v1750 = vadd.f32 0.0, %v1749
  %v1751 = vpop.f32.mrb[0].mxu0
  %1752 = vmatprep.mubr.f32.mxu0 0.0
  %1753 = vmatmul.mubr.f32.gmra.mrb[0].mxu0 %v1681
  %v1754 = vpop.f32.mrb[0].mxu0
  %v1755 = vadd.f32 0.0, %v1754
  %v1756 = vpop.f32.mrb[0].mxu0
  %1757 = vdwg.mxu0
  %v1759 = vsel %vm1678, %v1627, 0
  %v1761 = vsel %vm1678, %v1632, 0
  %1763 = vmatprep.subr.mxu0 0.0
  %1764 = vmatpush1.msra.mxu0 %v1650
  %1765 = vmatprep.subr.mxu0 0.0
  %1766 = vmatpush1.msra.mxu0 %v1651
  %1767 = vmatprep.subr.mxu0 0.0
  %1768 = vmatpush1.msra.mxu0 %v1652
  %1769 = vmatprep.subr.mxu0 0.0
  %1770 = vmatpush1.msra.mxu0 %v1653
  %1771 = vmatprep.subr.mxu0 0.0
  %1772 = vmatpush1.msra.mxu0 %v1654
  %1773 = vmatprep.subr.mxu0 0.0
  %1774 = vmatpush1.msra.mxu0 %v1655
  %1775 = vmatprep.subr.mxu0 0.0
  %1776 = vmatpush1.msra.mxu0 %v1656
  %1777 = vmatprep.subr.mxu0 0.0
  %1778 = vmatpush1.msra.mxu0 %v1657
  %1779 = vmatprep.subr.mxu0 0.0
  %1780 = vmatpush1.msra.mxu0 %v1658
  %1781 = vmatprep.subr.mxu0 0.0
  %1782 = vmatpush1.msra.mxu0 %v1659
  %1783 = vmatprep.subr.mxu0 0.0
  %1784 = vmatpush1.msra.mxu0 %v1660
  %1785 = vmatprep.subr.mxu0 0.0
  %1786 = vmatpush1.msra.mxu0 0.0
  %1787 = vmatprep.subr.mxu0 0.0
  %1788 = vmatpush1.msra.mxu0 0.0
  %1789 = vmatprep.subr.mxu0 0.0
  %1790 = vmatpush1.msra.mxu0 0.0
  %1791 = vmatprep.subr.mxu0 0.0
  %1792 = vmatpush1.msra.mxu0 0.0
  %1793 = vmatprep.subr.mxu0 0.0
  %1794 = vmatpush1.msra.mxu0 0.0
  %1795 = vmatprep.subr.mxu0 0.0
  %1796 = vmatpush1.msra.mxu0 0.0
  %1797 = vmatprep.subr.mxu0 0.0
  %1798 = vmatpush1.msra.mxu0 0.0
  %1799 = vmatprep.subr.mxu0 0.0
  %1800 = vmatpush1.msra.mxu0 0.0
  %1801 = vmatprep.subr.mxu0 0.0
  %1802 = vmatpush1.msra.mxu0 0.0
  %1803 = vmatprep.subr.mxu0 0.0
  %1804 = vmatpush1.msra.mxu0 0.0
  %1805 = vmatprep.subr.mxu0 0.0
  %1806 = vmatpush1.msra.mxu0 0.0
  %1807 = vmatprep.subr.mxu0 0.0
  %1808 = vmatpush1.msra.mxu0 0.0
  %1809 = vmatprep.subr.mxu0 0.0
  %1810 = vmatpush1.msra.mxu0 0.0
  %1811 = vmatprep.subr.mxu0 0.0
  %1812 = vmatpush1.msra.mxu0 0.0
  %1813 = vmatprep.subr.mxu0 0.0
  %1814 = vmatpush1.msra.mxu0 0.0
  %1815 = vmatprep.subr.mxu0 0.0
  %1816 = vmatpush1.msra.mxu0 0.0
  %1817 = vmatprep.subr.mxu0 0.0
  %1818 = vmatpush1.msra.mxu0 0.0
  %1819 = vmatprep.subr.mxu0 0.0
  %1820 = vmatpush1.msra.mxu0 0.0
  %1821 = vmatprep.subr.mxu0 0.0
  %1822 = vmatpush1.msra.mxu0 0.0
  %1823 = vmatprep.subr.mxu0 0.0
  %1824 = vmatpush1.msra.mxu0 0.0
  %1825 = vmatprep.subr.mxu0 0.0
  %1826 = vmatpush1.msra.mxu0 0.0
  %1827 = vmatprep.mubr.f32.mxu0 0.0
  %1828 = vmatmul.mubr.f32.gmra.mrb[0].mxu0 %v1759
  %v1829 = vpop.f32.mrb[0].mxu0
  %v1830 = vadd.f32 %v1750, %v1829
  %v1831 = vpop.f32.mrb[0].mxu0
  %1832 = vmatprep.mubr.f32.mxu0 0.0
  %1833 = vmatmul.mubr.f32.gmra.mrb[0].mxu0 %v1761
  %v1834 = vpop.f32.mrb[0].mxu0
  %v1835 = vadd.f32 %v1755, %v1834
  %v1836 = vpop.f32.mrb[0].mxu0
  %1837 = vdwg.mxu0
  %s1838 = scalar_lea.vmem %s8, 176
  %v1839 = vld [vmem:[%s1838] sm:$0xff]
  %v1840 = vld [vmem:[%s1838 + $0x8] sm:$0xff]
  %v1841 = vld [vmem:[%s1838 + $0x10] sm:$0xff]
  %v1842 = vld [vmem:[%s1838 + $0x18] sm:$0xff]
  %v1843 = vld [vmem:[%s1838 + $0x20] sm:$0xff]
  %v1844 = vld [vmem:[%s1838 + $0x28] sm:$0xff]
  %v1845 = vld [vmem:[%s1838 + $0x30] sm:$0xff]
  %v1846 = vld [vmem:[%s1838 + $0x38] sm:$0xff]
  %v1847 = vld [vmem:[%s1838 + $0x40] sm:$0xff]
  %v1848 = vld [vmem:[%s1838 + $0x48] sm:$0xff]
  %v1849 = vld [vmem:[%s1838 + $0x50] sm:$0xff]
  %v1851 = vsel %vm1678, %v1642, 0
  %v1854 = vsel %vm1678, %v1647, 0
  %1856 = vmatprep.subr.mxu0 0.0
  %1857 = vmatpush1.msra.mxu0 %v1839
  %1858 = vmatprep.subr.mxu0 0.0
  %1859 = vmatpush1.msra.mxu0 %v1840
  %1860 = vmatprep.subr.mxu0 0.0
  %1861 = vmatpush1.msra.mxu0 %v1841
  %1862 = vmatprep.subr.mxu0 0.0
  %1863 = vmatpush1.msra.mxu0 %v1842
  %1864 = vmatprep.subr.mxu0 0.0
  %1865 = vmatpush1.msra.mxu0 %v1843
  %1866 = vmatprep.subr.mxu0 0.0
  %1867 = vmatpush1.msra.mxu0 %v1844
  %1868 = vmatprep.subr.mxu0 0.0
  %1869 = vmatpush1.msra.mxu0 %v1845
  %1870 = vmatprep.subr.mxu0 0.0
  %1871 = vmatpush1.msra.mxu0 %v1846
  %1872 = vmatprep.subr.mxu0 0.0
  %1873 = vmatpush1.msra.mxu0 %v1847
  %1874 = vmatprep.subr.mxu0 0.0
  %1875 = vmatpush1.msra.mxu0 %v1848
  %1876 = vmatprep.subr.mxu0 0.0
  %1877 = vmatpush1.msra.mxu0 %v1849
  %1878 = vmatprep.subr.mxu0 0.0
  %1879 = vmatpush1.msra.mxu0 0.0
  %1880 = vmatprep.subr.mxu0 0.0
  %1881 = vmatpush1.msra.mxu0 0.0
  %1882 = vmatprep.subr.mxu0 0.0
  %1883 = vmatpush1.msra.mxu0 0.0
  %1884 = vmatprep.subr.mxu0 0.0
  %1885 = vmatpush1.msra.mxu0 0.0
  %1886 = vmatprep.subr.mxu0 0.0
  %1887 = vmatpush1.msra.mxu0 0.0
  %1888 = vmatprep.subr.mxu0 0.0
  %1889 = vmatpush1.msra.mxu0 0.0
  %1890 = vmatprep.subr.mxu0 0.0
  %1891 = vmatpush1.msra.mxu0 0.0
  %1892 = vmatprep.subr.mxu0 0.0
  %1893 = vmatpush1.msra.mxu0 0.0
  %1894 = vmatprep.subr.mxu0 0.0
  %1895 = vmatpush1.msra.mxu0 0.0
  %1896 = vmatprep.subr.mxu0 0.0
  %1897 = vmatpush1.msra.mxu0 0.0
  %1898 = vmatprep.subr.mxu0 0.0
  %1899 = vmatpush1.msra.mxu0 0.0
  %1900 = vmatprep.subr.mxu0 0.0
  %1901 = vmatpush1.msra.mxu0 0.0
  %1902 = vmatprep.subr.mxu0 0.0
  %1903 = vmatpush1.msra.mxu0 0.0
  %1904 = vmatprep.subr.mxu0 0.0
  %1905 = vmatpush1.msra.mxu0 0.0
  %1906 = vmatprep.subr.mxu0 0.0
  %1907 = vmatpush1.msra.mxu0 0.0
  %1908 = vmatprep.subr.mxu0 0.0
  %1909 = vmatpush1.msra.mxu0 0.0
  %1910 = vmatprep.subr.mxu0 0.0
  %1911 = vmatpush1.msra.mxu0 0.0
  %1912 = vmatprep.subr.mxu0 0.0
  %1913 = vmatpush1.msra.mxu0 0.0
  %1914 = vmatprep.subr.mxu0 0.0
  %1915 = vmatpush1.msra.mxu0 0.0
  %1916 = vmatprep.subr.mxu0 0.0
  %1917 = vmatpush1.msra.mxu0 0.0
  %1918 = vmatprep.subr.mxu0 0.0
  %1919 = vmatpush1.msra.mxu0 0.0
  %1920 = vmatprep.mubr.f32.mxu0 0.0
  %1921 = vmatmul.mubr.f32.gmra.mrb[0].mxu0 %v1851
  %v1922 = vpop.f32.mrb[0].mxu0
  %v1923 = vadd.f32 0.0, %v1922
  %v1924 = vpop.f32.mrb[0].mxu0
  %1925 = vmatprep.mubr.f32.mxu0 0.0
  %1926 = vmatmul.mubr.f32.gmra.mrb[0].mxu0 %v1854
  %v1927 = vpop.f32.mrb[0].mxu0
  %v1928 = vadd.f32 0.0, %v1927
  %v1929 = vpop.f32.mrb[0].mxu0
  %1930 = vdwg.mxu0
  %v1931 = vadd.f32 %v1830, %v1923
  %v1932 = vadd.f32 %v1835, %v1928
  %v1933 = vld [vmem:[%s9] sm:$0x1]
  %v1935 = vlaneseq
  %v1936 = vshrl.u32 %v1935, 7
  %v1937 = vsub.s32 0, %v1936
  %v1938 = vrot.slane %v1933, %v1937
  %v1940 = vadd.f32 %v1931, %v1938
  %v1941 = vadd.f32 %v1932, %v1938
  %v1942 = vmax.f32 %v1940, 0.0
  %v1943 = vmax.f32 %v1941, 0.0
  %v1944 = vld [vmem:[%s10] sm:$0xff]
  %v1945 = vld [vmem:[%s10 + $0x8] sm:$0xff]
  %v1946 = vld [vmem:[%s10 + $0x10] sm:$0xff]
  %v1947 = vld [vmem:[%s10 + $0x18] sm:$0xff]
  %v1948 = vld [vmem:[%s10 + $0x20] sm:$0xff]
  %v1949 = vld [vmem:[%s10 + $0x28] sm:$0xff]
  %v1950 = vld [vmem:[%s10 + $0x30] sm:$0xff]
  %v1951 = vld [vmem:[%s10 + $0x38] sm:$0xff]
  %v1952 = vld [vmem:[%s10 + $0x40] sm:$0xff]
  %vm1953 = vcmask 97280
  %v1955 = vsel %vm1953, %v1944, 0
  %v1958 = vsel %vm1953, %v1945, 0
  %v1961 = vsel %vm1953, %v1946, 0
  %v1964 = vsel %vm1953, %v1947, 0
  %v1967 = vsel %vm1953, %v1948, 0
  %v1970 = vsel %vm1953, %v1949, 0
  %v1973 = vsel %vm1953, %v1950, 0
  %v1976 = vsel %vm1953, %v1951, 0
  %v1979 = vsel %vm1953, %v1952, 0
  %v1982 = vsel %vm1243, %v1943, 0
  %1984 = vmatprep.subr.mxu0 0.0
  %1985 = vmatpush1.msra.mxu0 %v1942
  %1986 = vmatprep.subr.mxu0 0.0
  %1987 = vmatpush1.msra.mxu0 %v1982
  %1988 = vmatprep.subr.mxu0 0.0
  %1989 = vmatpush1.msra.mxu0 0.0
  %1990 = vmatprep.subr.mxu0 0.0
  %1991 = vmatpush1.msra.mxu0 0.0
  %1992 = vmatprep.subr.mxu0 0.0
  %1993 = vmatpush1.msra.mxu0 0.0
  %1994 = vmatprep.subr.mxu0 0.0
  %1995 = vmatpush1.msra.mxu0 0.0
  %1996 = vmatprep.subr.mxu0 0.0
  %1997 = vmatpush1.msra.mxu0 0.0
  %1998 = vmatprep.subr.mxu0 0.0
  %1999 = vmatpush1.msra.mxu0 0.0
  %2000 = vmatprep.subr.mxu0 0.0
  %2001 = vmatpush1.msra.mxu0 0.0
  %2002 = vmatprep.subr.mxu0 0.0
  %2003 = vmatpush1.msra.mxu0 0.0
  %2004 = vmatprep.subr.mxu0 0.0
  %2005 = vmatpush1.msra.mxu0 0.0
  %2006 = vmatprep.subr.mxu0 0.0
  %2007 = vmatpush1.msra.mxu0 0.0
  %2008 = vmatprep.subr.mxu0 0.0
  %2009 = vmatpush1.msra.mxu0 0.0
  %2010 = vmatprep.subr.mxu0 0.0
  %2011 = vmatpush1.msra.mxu0 0.0
  %2012 = vmatprep.subr.mxu0 0.0
  %2013 = vmatpush1.msra.mxu0 0.0
  %2014 = vmatprep.subr.mxu0 0.0
  %2015 = vmatpush1.msra.mxu0 0.0
  %2016 = vmatprep.subr.mxu0 0.0
  %2017 = vmatpush1.msra.mxu0 0.0
  %2018 = vmatprep.subr.mxu0 0.0
  %2019 = vmatpush1.msra.mxu0 0.0
  %2020 = vmatprep.subr.mxu0 0.0
  %2021 = vmatpush1.msra.mxu0 0.0
  %2022 = vmatprep.subr.mxu0 0.0
  %2023 = vmatpush1.msra.mxu0 0.0
  %2024 = vmatprep.subr.mxu0 0.0
  %2025 = vmatpush1.msra.mxu0 0.0
  %2026 = vmatprep.subr.mxu0 0.0
  %2027 = vmatpush1.msra.mxu0 0.0
  %2028 = vmatprep.subr.mxu0 0.0
  %2029 = vmatpush1.msra.mxu0 0.0
  %2030 = vmatprep.subr.mxu0 0.0
  %2031 = vmatpush1.msra.mxu0 0.0
  %2032 = vmatprep.subr.mxu0 0.0
  %2033 = vmatpush1.msra.mxu0 0.0
  %2034 = vmatprep.subr.mxu0 0.0
  %2035 = vmatpush1.msra.mxu0 0.0
  %2036 = vmatprep.subr.mxu0 0.0
  %2037 = vmatpush1.msra.mxu0 0.0
  %2038 = vmatprep.subr.mxu0 0.0
  %2039 = vmatpush1.msra.mxu0 0.0
  %2040 = vmatprep.subr.mxu0 0.0
  %2041 = vmatpush1.msra.mxu0 0.0
  %2042 = vmatprep.subr.mxu0 0.0
  %2043 = vmatpush1.msra.mxu0 0.0
  %2044 = vmatprep.subr.mxu0 0.0
  %2045 = vmatpush1.msra.mxu0 0.0
  %2046 = vmatprep.subr.mxu0 0.0
  %2047 = vmatpush1.msra.mxu0 0.0
  %2048 = vmatprep.mubr.f32.mxu0 0.0
  %2049 = vmatmul.mubr.f32.gmra.mrb[0].mxu0 %v1955
  %v2050 = vpop.f32.mrb[0].mxu0
  %v2051 = vadd.f32 0.0, %v2050
  %v2052 = vpop.f32.mrb[0].mxu0
  %2053 = vmatprep.mubr.f32.mxu0 0.0
  %2054 = vmatmul.mubr.f32.gmra.mrb[0].mxu0 %v1958
  %v2055 = vpop.f32.mrb[0].mxu0
  %v2056 = vadd.f32 0.0, %v2055
  %v2057 = vpop.f32.mrb[0].mxu0
  %2058 = vmatprep.mubr.f32.mxu0 0.0
  %2059 = vmatmul.mubr.f32.gmra.mrb[0].mxu0 %v1961
  %v2060 = vpop.f32.mrb[0].mxu0
  %v2061 = vadd.f32 0.0, %v2060
  %v2062 = vpop.f32.mrb[0].mxu0
  %2063 = vmatprep.mubr.f32.mxu0 0.0
  %2064 = vmatmul.mubr.f32.gmra.mrb[0].mxu0 %v1964
  %v2065 = vpop.f32.mrb[0].mxu0
  %v2066 = vadd.f32 0.0, %v2065
  %v2067 = vpop.f32.mrb[0].mxu0
  %2068 = vmatprep.mubr.f32.mxu0 0.0
  %2069 = vmatmul.mubr.f32.gmra.mrb[0].mxu0 %v1967
  %v2070 = vpop.f32.mrb[0].mxu0
  %v2071 = vadd.f32 0.0, %v2070
  %v2072 = vpop.f32.mrb[0].mxu0
  %2073 = vmatprep.mubr.f32.mxu0 0.0
  %2074 = vmatmul.mubr.f32.gmra.mrb[0].mxu0 %v1970
  %v2075 = vpop.f32.mrb[0].mxu0
  %v2076 = vadd.f32 0.0, %v2075
  %v2077 = vpop.f32.mrb[0].mxu0
  %2078 = vmatprep.mubr.f32.mxu0 0.0
  %2079 = vmatmul.mubr.f32.gmra.mrb[0].mxu0 %v1973
  %v2080 = vpop.f32.mrb[0].mxu0
  %v2081 = vadd.f32 0.0, %v2080
  %v2082 = vpop.f32.mrb[0].mxu0
  %2083 = vmatprep.mubr.f32.mxu0 0.0
  %2084 = vmatmul.mubr.f32.gmra.mrb[0].mxu0 %v1976
  %v2085 = vpop.f32.mrb[0].mxu0
  %v2086 = vadd.f32 0.0, %v2085
  %v2087 = vpop.f32.mrb[0].mxu0
  %2088 = vmatprep.mubr.f32.mxu0 0.0
  %2089 = vmatmul.mubr.f32.gmra.mrb[0].mxu0 %v1979
  %v2090 = vpop.f32.mrb[0].mxu0
  %v2091 = vadd.f32 0.0, %v2090
  %v2092 = vpop.f32.mrb[0].mxu0
  %2093 = vdwg.mxu0
  %v2094 = vld [vmem:[%s11] sm:$0xff]
  %v2095 = vld [vmem:[%s11 + $0x8] sm:$0xff]
  %v2096 = vld [vmem:[%s11 + $0x10] sm:$0xff]
  %v2097 = vld [vmem:[%s11 + $0x18] sm:$0xff]
  %v2098 = vld [vmem:[%s11 + $0x20] sm:$0xff]
  %v2099 = vld [vmem:[%s11 + $0x28] sm:$0xff]
  %s2100 = scalar_lea.vmem %s11, 48
  %v2101 = vld [vmem:[%s2100] sm:$0xff]
  %v2102 = vld [vmem:[%s2100 + $0x8] sm:$0xff]
  %v2103 = vld [vmem:[%s2100 + $0x10] sm:$0xff]
  %v2104 = vld [vmem:[%s2100 + $0x18] sm:$0xff]
  %v2105 = vld [vmem:[%s2100 + $0x20] sm:$0xff]
  %v2106 = vld [vmem:[%s2100 + $0x28] sm:$0xff]
  %v2108 = vsel %vm1072, %v2066, 0
  %v2111 = vsel %vm1072, %v2071, 0
  %v2114 = vsel %vm1072, %v2076, 0
  %2116 = vmatprep.subr.mxu0 0.0
  %2117 = vmatpush1.msra.mxu0 %v2101
  %2118 = vmatprep.subr.mxu0 0.0
  %2119 = vmatpush1.msra.mxu0 %v2102
  %2120 = vmatprep.subr.mxu0 0.0
  %2121 = vmatpush1.msra.mxu0 %v2103
  %2122 = vmatprep.subr.mxu0 0.0
  %2123 = vmatpush1.msra.mxu0 %v2104
  %2124 = vmatprep.subr.mxu0 0.0
  %2125 = vmatpush1.msra.mxu0 %v2105
  %2126 = vmatprep.subr.mxu0 0.0
  %2127 = vmatpush1.msra.mxu0 %v2106
  %2128 = vmatprep.subr.mxu0 0.0
  %2129 = vmatpush1.msra.mxu0 0.0
  %2130 = vmatprep.subr.mxu0 0.0
  %2131 = vmatpush1.msra.mxu0 0.0
  %2132 = vmatprep.subr.mxu0 0.0
  %2133 = vmatpush1.msra.mxu0 0.0
  %2134 = vmatprep.subr.mxu0 0.0
  %2135 = vmatpush1.msra.mxu0 0.0
  %2136 = vmatprep.subr.mxu0 0.0
  %2137 = vmatpush1.msra.mxu0 0.0
  %2138 = vmatprep.subr.mxu0 0.0
  %2139 = vmatpush1.msra.mxu0 0.0
  %2140 = vmatprep.subr.mxu0 0.0
  %2141 = vmatpush1.msra.mxu0 0.0
  %2142 = vmatprep.subr.mxu0 0.0
  %2143 = vmatpush1.msra.mxu0 0.0
  %2144 = vmatprep.subr.mxu0 0.0
  %2145 = vmatpush1.msra.mxu0 0.0
  %2146 = vmatprep.subr.mxu0 0.0
  %2147 = vmatpush1.msra.mxu0 0.0
  %2148 = vmatprep.subr.mxu0 0.0
  %2149 = vmatpush1.msra.mxu0 0.0
  %2150 = vmatprep.subr.mxu0 0.0
  %2151 = vmatpush1.msra.mxu0 0.0
  %2152 = vmatprep.subr.mxu0 0.0
  %2153 = vmatpush1.msra.mxu0 0.0
  %2154 = vmatprep.subr.mxu0 0.0
  %2155 = vmatpush1.msra.mxu0 0.0
  %2156 = vmatprep.subr.mxu0 0.0
  %2157 = vmatpush1.msra.mxu0 0.0
  %2158 = vmatprep.subr.mxu0 0.0
  %2159 = vmatpush1.msra.mxu0 0.0
  %2160 = vmatprep.subr.mxu0 0.0
  %2161 = vmatpush1.msra.mxu0 0.0
  %2162 = vmatprep.subr.mxu0 0.0
  %2163 = vmatpush1.msra.mxu0 0.0
  %2164 = vmatprep.subr.mxu0 0.0
  %2165 = vmatpush1.msra.mxu0 0.0
  %2166 = vmatprep.subr.mxu0 0.0
  %2167 = vmatpush1.msra.mxu0 0.0
  %2168 = vmatprep.subr.mxu0 0.0
  %2169 = vmatpush1.msra.mxu0 0.0
  %2170 = vmatprep.subr.mxu0 0.0
  %2171 = vmatpush1.msra.mxu0 0.0
  %2172 = vmatprep.subr.mxu0 0.0
  %2173 = vmatpush1.msra.mxu0 0.0
  %2174 = vmatprep.subr.mxu0 0.0
  %2175 = vmatpush1.msra.mxu0 0.0
  %2176 = vmatprep.subr.mxu0 0.0
  %2177 = vmatpush1.msra.mxu0 0.0
  %2178 = vmatprep.subr.mxu0 0.0
  %2179 = vmatpush1.msra.mxu0 0.0
  %2180 = vmatprep.mubr.f32.mxu0 0.0
  %2181 = vmatmul.mubr.f32.gmra.mrb[0].mxu0 %v2108
  %v2182 = vpop.f32.mrb[0].mxu0
  %v2183 = vadd.f32 0.0, %v2182
  %v2184 = vpop.f32.mrb[0].mxu0
  %2185 = vmatprep.mubr.f32.mxu0 0.0
  %2186 = vmatmul.mubr.f32.gmra.mrb[0].mxu0 %v2111
  %v2187 = vpop.f32.mrb[0].mxu0
  %v2188 = vadd.f32 0.0, %v2187
  %v2189 = vpop.f32.mrb[0].mxu0
  %2190 = vmatprep.mubr.f32.mxu0 0.0
  %2191 = vmatmul.mubr.f32.gmra.mrb[0].mxu0 %v2114
  %v2192 = vpop.f32.mrb[0].mxu0
  %v2193 = vadd.f32 0.0, %v2192
  %v2194 = vpop.f32.mrb[0].mxu0
  %2195 = vdwg.mxu0
  %v2197 = vsel %vm1072, %v2051, 0
  %v2200 = vsel %vm1072, %v2056, 0
  %v2203 = vsel %vm1072, %v2061, 0
  %2205 = vmatprep.subr.mxu0 0.0
  %2206 = vmatpush1.msra.mxu0 %v2094
  %2207 = vmatprep.subr.mxu0 0.0
  %2208 = vmatpush1.msra.mxu0 %v2095
  %2209 = vmatprep.subr.mxu0 0.0
  %2210 = vmatpush1.msra.mxu0 %v2096
  %2211 = vmatprep.subr.mxu0 0.0
  %2212 = vmatpush1.msra.mxu0 %v2097
  %2213 = vmatprep.subr.mxu0 0.0
  %2214 = vmatpush1.msra.mxu0 %v2098
  %2215 = vmatprep.subr.mxu0 0.0
  %2216 = vmatpush1.msra.mxu0 %v2099
  %2217 = vmatprep.subr.mxu0 0.0
  %2218 = vmatpush1.msra.mxu0 0.0
  %2219 = vmatprep.subr.mxu0 0.0
  %2220 = vmatpush1.msra.mxu0 0.0
  %2221 = vmatprep.subr.mxu0 0.0
  %2222 = vmatpush1.msra.mxu0 0.0
  %2223 = vmatprep.subr.mxu0 0.0
  %2224 = vmatpush1.msra.mxu0 0.0
  %2225 = vmatprep.subr.mxu0 0.0
  %2226 = vmatpush1.msra.mxu0 0.0
  %2227 = vmatprep.subr.mxu0 0.0
  %2228 = vmatpush1.msra.mxu0 0.0
  %2229 = vmatprep.subr.mxu0 0.0
  %2230 = vmatpush1.msra.mxu0 0.0
  %2231 = vmatprep.subr.mxu0 0.0
  %2232 = vmatpush1.msra.mxu0 0.0
  %2233 = vmatprep.subr.mxu0 0.0
  %2234 = vmatpush1.msra.mxu0 0.0
  %2235 = vmatprep.subr.mxu0 0.0
  %2236 = vmatpush1.msra.mxu0 0.0
  %2237 = vmatprep.subr.mxu0 0.0
  %2238 = vmatpush1.msra.mxu0 0.0
  %2239 = vmatprep.subr.mxu0 0.0
  %2240 = vmatpush1.msra.mxu0 0.0
  %2241 = vmatprep.subr.mxu0 0.0
  %2242 = vmatpush1.msra.mxu0 0.0
  %2243 = vmatprep.subr.mxu0 0.0
  %2244 = vmatpush1.msra.mxu0 0.0
  %2245 = vmatprep.subr.mxu0 0.0
  %2246 = vmatpush1.msra.mxu0 0.0
  %2247 = vmatprep.subr.mxu0 0.0
  %2248 = vmatpush1.msra.mxu0 0.0
  %2249 = vmatprep.subr.mxu0 0.0
  %2250 = vmatpush1.msra.mxu0 0.0
  %2251 = vmatprep.subr.mxu0 0.0
  %2252 = vmatpush1.msra.mxu0 0.0
  %2253 = vmatprep.subr.mxu0 0.0
  %2254 = vmatpush1.msra.mxu0 0.0
  %2255 = vmatprep.subr.mxu0 0.0
  %2256 = vmatpush1.msra.mxu0 0.0
  %2257 = vmatprep.subr.mxu0 0.0
  %2258 = vmatpush1.msra.mxu0 0.0
  %2259 = vmatprep.subr.mxu0 0.0
  %2260 = vmatpush1.msra.mxu0 0.0
  %2261 = vmatprep.subr.mxu0 0.0
  %2262 = vmatpush1.msra.mxu0 0.0
  %2263 = vmatprep.subr.mxu0 0.0
  %2264 = vmatpush1.msra.mxu0 0.0
  %2265 = vmatprep.subr.mxu0 0.0
  %2266 = vmatpush1.msra.mxu0 0.0
  %2267 = vmatprep.subr.mxu0 0.0
  %2268 = vmatpush1.msra.mxu0 0.0
  %2269 = vmatprep.mubr.f32.mxu0 0.0
  %2270 = vmatmul.mubr.f32.gmra.mrb[0].mxu0 %v2197
  %v2271 = vpop.f32.mrb[0].mxu0
  %v2272 = vadd.f32 %v2183, %v2271
  %v2273 = vpop.f32.mrb[0].mxu0
  %2274 = vmatprep.mubr.f32.mxu0 0.0
  %2275 = vmatmul.mubr.f32.gmra.mrb[0].mxu0 %v2200
  %v2276 = vpop.f32.mrb[0].mxu0
  %v2277 = vadd.f32 %v2188, %v2276
  %v2278 = vpop.f32.mrb[0].mxu0
  %2279 = vmatprep.mubr.f32.mxu0 0.0
  %2280 = vmatmul.mubr.f32.gmra.mrb[0].mxu0 %v2203
  %v2281 = vpop.f32.mrb[0].mxu0
  %v2282 = vadd.f32 %v2193, %v2281
  %v2283 = vpop.f32.mrb[0].mxu0
  %2284 = vdwg.mxu0
  %s2285 = scalar_lea.vmem %s11, 96
  %v2286 = vld [vmem:[%s2285] sm:$0xff]
  %v2287 = vld [vmem:[%s2285 + $0x8] sm:$0xff]
  %v2288 = vld [vmem:[%s2285 + $0x10] sm:$0xff]
  %v2289 = vld [vmem:[%s2285 + $0x18] sm:$0xff]
  %v2290 = vld [vmem:[%s2285 + $0x20] sm:$0xff]
  %v2291 = vld [vmem:[%s2285 + $0x28] sm:$0xff]
  %v2293 = vsel %vm1072, %v2081, 0
  %v2296 = vsel %vm1072, %v2086, 0
  %v2299 = vsel %vm1072, %v2091, 0
  %2301 = vmatprep.subr.mxu0 0.0
  %2302 = vmatpush1.msra.mxu0 %v2286
  %2303 = vmatprep.subr.mxu0 0.0
  %2304 = vmatpush1.msra.mxu0 %v2287
  %2305 = vmatprep.subr.mxu0 0.0
  %2306 = vmatpush1.msra.mxu0 %v2288
  %2307 = vmatprep.subr.mxu0 0.0
  %2308 = vmatpush1.msra.mxu0 %v2289
  %2309 = vmatprep.subr.mxu0 0.0
  %2310 = vmatpush1.msra.mxu0 %v2290
  %2311 = vmatprep.subr.mxu0 0.0
  %2312 = vmatpush1.msra.mxu0 %v2291
  %2313 = vmatprep.subr.mxu0 0.0
  %2314 = vmatpush1.msra.mxu0 0.0
  %2315 = vmatprep.subr.mxu0 0.0
  %2316 = vmatpush1.msra.mxu0 0.0
  %2317 = vmatprep.subr.mxu0 0.0
  %2318 = vmatpush1.msra.mxu0 0.0
  %2319 = vmatprep.subr.mxu0 0.0
  %2320 = vmatpush1.msra.mxu0 0.0
  %2321 = vmatprep.subr.mxu0 0.0
  %2322 = vmatpush1.msra.mxu0 0.0
  %2323 = vmatprep.subr.mxu0 0.0
  %2324 = vmatpush1.msra.mxu0 0.0
  %2325 = vmatprep.subr.mxu0 0.0
  %2326 = vmatpush1.msra.mxu0 0.0
  %2327 = vmatprep.subr.mxu0 0.0
  %2328 = vmatpush1.msra.mxu0 0.0
  %2329 = vmatprep.subr.mxu0 0.0
  %2330 = vmatpush1.msra.mxu0 0.0
  %2331 = vmatprep.subr.mxu0 0.0
  %2332 = vmatpush1.msra.mxu0 0.0
  %2333 = vmatprep.subr.mxu0 0.0
  %2334 = vmatpush1.msra.mxu0 0.0
  %2335 = vmatprep.subr.mxu0 0.0
  %2336 = vmatpush1.msra.mxu0 0.0
  %2337 = vmatprep.subr.mxu0 0.0
  %2338 = vmatpush1.msra.mxu0 0.0
  %2339 = vmatprep.subr.mxu0 0.0
  %2340 = vmatpush1.msra.mxu0 0.0
  %2341 = vmatprep.subr.mxu0 0.0
  %2342 = vmatpush1.msra.mxu0 0.0
  %2343 = vmatprep.subr.mxu0 0.0
  %2344 = vmatpush1.msra.mxu0 0.0
  %2345 = vmatprep.subr.mxu0 0.0
  %2346 = vmatpush1.msra.mxu0 0.0
  %2347 = vmatprep.subr.mxu0 0.0
  %2348 = vmatpush1.msra.mxu0 0.0
  %2349 = vmatprep.subr.mxu0 0.0
  %2350 = vmatpush1.msra.mxu0 0.0
  %2351 = vmatprep.subr.mxu0 0.0
  %2352 = vmatpush1.msra.mxu0 0.0
  %2353 = vmatprep.subr.mxu0 0.0
  %2354 = vmatpush1.msra.mxu0 0.0
  %2355 = vmatprep.subr.mxu0 0.0
  %2356 = vmatpush1.msra.mxu0 0.0
  %2357 = vmatprep.subr.mxu0 0.0
  %2358 = vmatpush1.msra.mxu0 0.0
  %2359 = vmatprep.subr.mxu0 0.0
  %2360 = vmatpush1.msra.mxu0 0.0
  %2361 = vmatprep.subr.mxu0 0.0
  %2362 = vmatpush1.msra.mxu0 0.0
  %2363 = vmatprep.subr.mxu0 0.0
  %2364 = vmatpush1.msra.mxu0 0.0
  %2365 = vmatprep.mubr.f32.mxu0 0.0
  %2366 = vmatmul.mubr.f32.gmra.mrb[0].mxu0 %v2293
  %v2367 = vpop.f32.mrb[0].mxu0
  %v2368 = vadd.f32 0.0, %v2367
  %v2369 = vpop.f32.mrb[0].mxu0
  %2370 = vmatprep.mubr.f32.mxu0 0.0
  %2371 = vmatmul.mubr.f32.gmra.mrb[0].mxu0 %v2296
  %v2372 = vpop.f32.mrb[0].mxu0
  %v2373 = vadd.f32 0.0, %v2372
  %v2374 = vpop.f32.mrb[0].mxu0
  %2375 = vmatprep.mubr.f32.mxu0 0.0
  %2376 = vmatmul.mubr.f32.gmra.mrb[0].mxu0 %v2299
  %v2377 = vpop.f32.mrb[0].mxu0
  %v2378 = vadd.f32 0.0, %v2377
  %v2379 = vpop.f32.mrb[0].mxu0
  %2380 = vdwg.mxu0
  %v2381 = vadd.f32 %v2272, %v2368
  %v2382 = vadd.f32 %v2277, %v2373
  %v2383 = vadd.f32 %v2282, %v2378
  %v2384 = vld [vmem:[%s12] sm:$0x1]
  %v2386 = vlaneseq
  %v2387 = vshrl.u32 %v2386, 7
  %v2388 = vsub.s32 0, %v2387
  %v2389 = vrot.slane %v2384, %v2388
  %v2391 = vadd.f32 %v2381, %v2389
  %v2392 = vadd.f32 %v2382, %v2389
  %v2393 = vadd.f32 %v2383, %v2389
  %v2394 = vmax.f32 %v2391, 0.0
  %v2395 = vmax.f32 %v2392, 0.0
  %v2396 = vmax.f32 %v2393, 0.0
  %v2397 = vld [vmem:[%s13] sm:$0xff]
  %v2398 = vld [vmem:[%s13 + $0x8] sm:$0xff]
  %v2399 = vld [vmem:[%s13 + $0x10] sm:$0xff]
  %v2400 = vld [vmem:[%s13 + $0x18] sm:$0xff]
  %v2401 = vld [vmem:[%s13 + $0x20] sm:$0xff]
  %v2402 = vld [vmem:[%s13 + $0x28] sm:$0xff]
  %v2403 = vld [vmem:[%s13 + $0x30] sm:$0xff]
  %v2404 = vld [vmem:[%s13 + $0x38] sm:$0xff]
  %v2405 = vld [vmem:[%s13 + $0x40] sm:$0xff]
  %v2406 = vld [vmem:[%s13 + $0x48] sm:$0xff]
  %v2407 = vld [vmem:[%s13 + $0x50] sm:$0xff]
  %v2408 = vld [vmem:[%s13 + $0x58] sm:$0xff]
  %v2409 = vld [vmem:[%s13 + $0x60] sm:$0xff]
  %v2410 = vld [vmem:[%s13 + $0x68] sm:$0xff]
  %v2411 = vld [vmem:[%s13 + $0x70] sm:$0xff]
  %v2412 = vld [vmem:[%s13 + $0x78] sm:$0xff]
  %v2413 = vld [vmem:[%s13 + $0x80] sm:$0xff]
  %v2414 = vld [vmem:[%s13 + $0x88] sm:$0xff]
  %v2416 = vsel %vm1544, %v2397, 0
  %v2419 = vsel %vm1544, %v2398, 0
  %v2422 = vsel %vm1544, %v2399, 0
  %v2425 = vsel %vm1544, %v2400, 0
  %v2428 = vsel %vm1544, %v2401, 0
  %v2431 = vsel %vm1544, %v2402, 0
  %v2434 = vsel %vm1544, %v2403, 0
  %v2437 = vsel %vm1544, %v2404, 0
  %v2440 = vsel %vm1544, %v2405, 0
  %v2443 = vsel %vm1544, %v2406, 0
  %v2446 = vsel %vm1544, %v2407, 0
  %v2449 = vsel %vm1544, %v2408, 0
  %v2452 = vsel %vm1544, %v2409, 0
  %v2455 = vsel %vm1544, %v2410, 0
  %v2458 = vsel %vm1544, %v2411, 0
  %v2461 = vsel %vm1544, %v2412, 0
  %v2464 = vsel %vm1544, %v2413, 0
  %v2467 = vsel %vm1544, %v2414, 0
  %2469 = vmatprep.subr.mxu0 0.0
  %2470 = vmatpush1.msra.mxu0 %v2394
  %2471 = vmatprep.subr.mxu0 0.0
  %2472 = vmatpush1.msra.mxu0 %v2395
  %2473 = vmatprep.subr.mxu0 0.0
  %2474 = vmatpush1.msra.mxu0 %v2396
  %2475 = vmatprep.subr.mxu0 0.0
  %2476 = vmatpush1.msra.mxu0 0.0
  %2477 = vmatprep.subr.mxu0 0.0
  %2478 = vmatpush1.msra.mxu0 0.0
  %2479 = vmatprep.subr.mxu0 0.0
  %2480 = vmatpush1.msra.mxu0 0.0
  %2481 = vmatprep.subr.mxu0 0.0
  %2482 = vmatpush1.msra.mxu0 0.0
  %2483 = vmatprep.subr.mxu0 0.0
  %2484 = vmatpush1.msra.mxu0 0.0
  %2485 = vmatprep.subr.mxu0 0.0
  %2486 = vmatpush1.msra.mxu0 0.0
  %2487 = vmatprep.subr.mxu0 0.0
  %2488 = vmatpush1.msra.mxu0 0.0
  %2489 = vmatprep.subr.mxu0 0.0
  %2490 = vmatpush1.msra.mxu0 0.0
  %2491 = vmatprep.subr.mxu0 0.0
  %2492 = vmatpush1.msra.mxu0 0.0
  %2493 = vmatprep.subr.mxu0 0.0
  %2494 = vmatpush1.msra.mxu0 0.0
  %2495 = vmatprep.subr.mxu0 0.0
  %2496 = vmatpush1.msra.mxu0 0.0
  %2497 = vmatprep.subr.mxu0 0.0
  %2498 = vmatpush1.msra.mxu0 0.0
  %2499 = vmatprep.subr.mxu0 0.0
  %2500 = vmatpush1.msra.mxu0 0.0
  %2501 = vmatprep.subr.mxu0 0.0
  %2502 = vmatpush1.msra.mxu0 0.0
  %2503 = vmatprep.subr.mxu0 0.0
  %2504 = vmatpush1.msra.mxu0 0.0
  %2505 = vmatprep.subr.mxu0 0.0
  %2506 = vmatpush1.msra.mxu0 0.0
  %2507 = vmatprep.subr.mxu0 0.0
  %2508 = vmatpush1.msra.mxu0 0.0
  %2509 = vmatprep.subr.mxu0 0.0
  %2510 = vmatpush1.msra.mxu0 0.0
  %2511 = vmatprep.subr.mxu0 0.0
  %2512 = vmatpush1.msra.mxu0 0.0
  %2513 = vmatprep.subr.mxu0 0.0
  %2514 = vmatpush1.msra.mxu0 0.0
  %2515 = vmatprep.subr.mxu0 0.0
  %2516 = vmatpush1.msra.mxu0 0.0
  %2517 = vmatprep.subr.mxu0 0.0
  %2518 = vmatpush1.msra.mxu0 0.0
  %2519 = vmatprep.subr.mxu0 0.0
  %2520 = vmatpush1.msra.mxu0 0.0
  %2521 = vmatprep.subr.mxu0 0.0
  %2522 = vmatpush1.msra.mxu0 0.0
  %2523 = vmatprep.subr.mxu0 0.0
  %2524 = vmatpush1.msra.mxu0 0.0
  %2525 = vmatprep.subr.mxu0 0.0
  %2526 = vmatpush1.msra.mxu0 0.0
  %2527 = vmatprep.subr.mxu0 0.0
  %2528 = vmatpush1.msra.mxu0 0.0
  %2529 = vmatprep.subr.mxu0 0.0
  %2530 = vmatpush1.msra.mxu0 0.0
  %2531 = vmatprep.subr.mxu0 0.0
  %2532 = vmatpush1.msra.mxu0 0.0
  %2533 = vmatprep.mubr.f32.mxu0 0.0
  %2534 = vmatmul.mubr.f32.gmra.mrb[0].mxu0 %v2416
  %v2535 = vpop.f32.mrb[0].mxu0
  %v2536 = vadd.f32 0.0, %v2535
  %v2537 = vpop.f32.mrb[0].mxu0
  %2538 = vmatprep.mubr.f32.mxu0 0.0
  %2539 = vmatmul.mubr.f32.gmra.mrb[0].mxu0 %v2419
  %v2540 = vpop.f32.mrb[0].mxu0
  %v2541 = vadd.f32 0.0, %v2540
  %v2542 = vpop.f32.mrb[0].mxu0
  %2543 = vmatprep.mubr.f32.mxu0 0.0
  %2544 = vmatmul.mubr.f32.gmra.mrb[0].mxu0 %v2422
  %v2545 = vpop.f32.mrb[0].mxu0
  %v2546 = vadd.f32 0.0, %v2545
  %v2547 = vpop.f32.mrb[0].mxu0
  %2548 = vmatprep.mubr.f32.mxu0 0.0
  %2549 = vmatmul.mubr.f32.gmra.mrb[0].mxu0 %v2425
  %v2550 = vpop.f32.mrb[0].mxu0
  %v2551 = vadd.f32 0.0, %v2550
  %v2552 = vpop.f32.mrb[0].mxu0
  %2553 = vmatprep.mubr.f32.mxu0 0.0
  %2554 = vmatmul.mubr.f32.gmra.mrb[0].mxu0 %v2428
  %v2555 = vpop.f32.mrb[0].mxu0
  %v2556 = vadd.f32 0.0, %v2555
  %v2557 = vpop.f32.mrb[0].mxu0
  %2558 = vmatprep.mubr.f32.mxu0 0.0
  %2559 = vmatmul.mubr.f32.gmra.mrb[0].mxu0 %v2431
  %v2560 = vpop.f32.mrb[0].mxu0
  %v2561 = vadd.f32 0.0, %v2560
  %v2562 = vpop.f32.mrb[0].mxu0
  %2563 = vmatprep.mubr.f32.mxu0 0.0
  %2564 = vmatmul.mubr.f32.gmra.mrb[0].mxu0 %v2434
  %v2565 = vpop.f32.mrb[0].mxu0
  %v2566 = vadd.f32 0.0, %v2565
  %v2567 = vpop.f32.mrb[0].mxu0
  %2568 = vmatprep.mubr.f32.mxu0 0.0
  %2569 = vmatmul.mubr.f32.gmra.mrb[0].mxu0 %v2437
  %v2570 = vpop.f32.mrb[0].mxu0
  %v2571 = vadd.f32 0.0, %v2570
  %v2572 = vpop.f32.mrb[0].mxu0
  %2573 = vmatprep.mubr.f32.mxu0 0.0
  %2574 = vmatmul.mubr.f32.gmra.mrb[0].mxu0 %v2440
  %v2575 = vpop.f32.mrb[0].mxu0
  %v2576 = vadd.f32 0.0, %v2575
  %v2577 = vpop.f32.mrb[0].mxu0
  %2578 = vmatprep.mubr.f32.mxu0 0.0
  %2579 = vmatmul.mubr.f32.gmra.mrb[0].mxu0 %v2443
  %v2580 = vpop.f32.mrb[0].mxu0
  %v2581 = vadd.f32 0.0, %v2580
  %v2582 = vpop.f32.mrb[0].mxu0
  %2583 = vmatprep.mubr.f32.mxu0 0.0
  %2584 = vmatmul.mubr.f32.gmra.mrb[0].mxu0 %v2446
  %v2585 = vpop.f32.mrb[0].mxu0
  %v2586 = vadd.f32 0.0, %v2585
  %v2587 = vpop.f32.mrb[0].mxu0
  %2588 = vmatprep.mubr.f32.mxu0 0.0
  %2589 = vmatmul.mubr.f32.gmra.mrb[0].mxu0 %v2449
  %v2590 = vpop.f32.mrb[0].mxu0
  %v2591 = vadd.f32 0.0, %v2590
  %v2592 = vpop.f32.mrb[0].mxu0
  %2593 = vmatprep.mubr.f32.mxu0 0.0
  %2594 = vmatmul.mubr.f32.gmra.mrb[0].mxu0 %v2452
  %v2595 = vpop.f32.mrb[0].mxu0
  %v2596 = vadd.f32 0.0, %v2595
  %v2597 = vpop.f32.mrb[0].mxu0
  %2598 = vmatprep.mubr.f32.mxu0 0.0
  %2599 = vmatmul.mubr.f32.gmra.mrb[0].mxu0 %v2455
  %v2600 = vpop.f32.mrb[0].mxu0
  %v2601 = vadd.f32 0.0, %v2600
  %v2602 = vpop.f32.mrb[0].mxu0
  %2603 = vmatprep.mubr.f32.mxu0 0.0
  %2604 = vmatmul.mubr.f32.gmra.mrb[0].mxu0 %v2458
  %v2605 = vpop.f32.mrb[0].mxu0
  %v2606 = vadd.f32 0.0, %v2605
  %v2607 = vpop.f32.mrb[0].mxu0
  %2608 = vmatprep.mubr.f32.mxu0 0.0
  %2609 = vmatmul.mubr.f32.gmra.mrb[0].mxu0 %v2461
  %v2610 = vpop.f32.mrb[0].mxu0
  %v2611 = vadd.f32 0.0, %v2610
  %v2612 = vpop.f32.mrb[0].mxu0
  %2613 = vmatprep.mubr.f32.mxu0 0.0
  %2614 = vmatmul.mubr.f32.gmra.mrb[0].mxu0 %v2464
  %v2615 = vpop.f32.mrb[0].mxu0
  %v2616 = vadd.f32 0.0, %v2615
  %v2617 = vpop.f32.mrb[0].mxu0
  %2618 = vmatprep.mubr.f32.mxu0 0.0
  %2619 = vmatmul.mubr.f32.gmra.mrb[0].mxu0 %v2467
  %v2620 = vpop.f32.mrb[0].mxu0
  %v2621 = vadd.f32 0.0, %v2620
  %v2622 = vpop.f32.mrb[0].mxu0
  %2623 = vdwg.mxu0
  %v2624 = vld [vmem:[%s14] sm:$0xff]
  %v2625 = vld [vmem:[%s14 + $0x8] sm:$0xff]
  %v2626 = vld [vmem:[%s14 + $0x10] sm:$0xff]
  %v2627 = vld [vmem:[%s14 + $0x18] sm:$0xff]
  %v2628 = vld [vmem:[%s14 + $0x20] sm:$0xff]
  %v2629 = vld [vmem:[%s14 + $0x28] sm:$0xff]
  %v2630 = vld [vmem:[%s14 + $0x30] sm:$0xff]
  %v2631 = vld [vmem:[%s14 + $0x38] sm:$0xff]
  %v2632 = vld [vmem:[%s14 + $0x40] sm:$0xff]
  %v2633 = vld [vmem:[%s14 + $0x48] sm:$0xff]
  %v2634 = vld [vmem:[%s14 + $0x50] sm:$0xff]
  %s2635 = scalar_lea.vmem %s14, 88
  %v2636 = vld [vmem:[%s2635] sm:$0xff]
  %v2637 = vld [vmem:[%s2635 + $0x8] sm:$0xff]
  %v2638 = vld [vmem:[%s2635 + $0x10] sm:$0xff]
  %v2639 = vld [vmem:[%s2635 + $0x18] sm:$0xff]
  %v2640 = vld [vmem:[%s2635 + $0x20] sm:$0xff]
  %v2641 = vld [vmem:[%s2635 + $0x28] sm:$0xff]
  %v2642 = vld [vmem:[%s2635 + $0x30] sm:$0xff]
  %v2643 = vld [vmem:[%s2635 + $0x38] sm:$0xff]
  %v2644 = vld [vmem:[%s2635 + $0x40] sm:$0xff]
  %v2645 = vld [vmem:[%s2635 + $0x48] sm:$0xff]
  %v2646 = vld [vmem:[%s2635 + $0x50] sm:$0xff]
  %v2648 = vsel %vm1678, %v2566, 0
  %v2651 = vsel %vm1678, %v2571, 0
  %v2654 = vsel %vm1678, %v2576, 0
  %v2657 = vsel %vm1678, %v2581, 0
  %v2660 = vsel %vm1678, %v2586, 0
  %v2663 = vsel %vm1678, %v2591, 0
  %2665 = vmatprep.subr.mxu0 0.0
  %2666 = vmatpush1.msra.mxu0 %v2636
  %2667 = vmatprep.subr.mxu0 0.0
  %2668 = vmatpush1.msra.mxu0 %v2637
  %2669 = vmatprep.subr.mxu0 0.0
  %2670 = vmatpush1.msra.mxu0 %v2638
  %2671 = vmatprep.subr.mxu0 0.0
  %2672 = vmatpush1.msra.mxu0 %v2639
  %2673 = vmatprep.subr.mxu0 0.0
  %2674 = vmatpush1.msra.mxu0 %v2640
  %2675 = vmatprep.subr.mxu0 0.0
  %2676 = vmatpush1.msra.mxu0 %v2641
  %2677 = vmatprep.subr.mxu0 0.0
  %2678 = vmatpush1.msra.mxu0 %v2642
  %2679 = vmatprep.subr.mxu0 0.0
  %2680 = vmatpush1.msra.mxu0 %v2643
  %2681 = vmatprep.subr.mxu0 0.0
  %2682 = vmatpush1.msra.mxu0 %v2644
  %2683 = vmatprep.subr.mxu0 0.0
  %2684 = vmatpush1.msra.mxu0 %v2645
  %2685 = vmatprep.subr.mxu0 0.0
  %2686 = vmatpush1.msra.mxu0 %v2646
  %2687 = vmatprep.subr.mxu0 0.0
  %2688 = vmatpush1.msra.mxu0 0.0
  %2689 = vmatprep.subr.mxu0 0.0
  %2690 = vmatpush1.msra.mxu0 0.0
  %2691 = vmatprep.subr.mxu0 0.0
  %2692 = vmatpush1.msra.mxu0 0.0
  %2693 = vmatprep.subr.mxu0 0.0
  %2694 = vmatpush1.msra.mxu0 0.0
  %2695 = vmatprep.subr.mxu0 0.0
  %2696 = vmatpush1.msra.mxu0 0.0
  %2697 = vmatprep.subr.mxu0 0.0
  %2698 = vmatpush1.msra.mxu0 0.0
  %2699 = vmatprep.subr.mxu0 0.0
  %2700 = vmatpush1.msra.mxu0 0.0
  %2701 = vmatprep.subr.mxu0 0.0
  %2702 = vmatpush1.msra.mxu0 0.0
  %2703 = vmatprep.subr.mxu0 0.0
  %2704 = vmatpush1.msra.mxu0 0.0
  %2705 = vmatprep.subr.mxu0 0.0
  %2706 = vmatpush1.msra.mxu0 0.0
  %2707 = vmatprep.subr.mxu0 0.0
  %2708 = vmatpush1.msra.mxu0 0.0
  %2709 = vmatprep.subr.mxu0 0.0
  %2710 = vmatpush1.msra.mxu0 0.0
  %2711 = vmatprep.subr.mxu0 0.0
  %2712 = vmatpush1.msra.mxu0 0.0
  %2713 = vmatprep.subr.mxu0 0.0
  %2714 = vmatpush1.msra.mxu0 0.0
  %2715 = vmatprep.subr.mxu0 0.0
  %2716 = vmatpush1.msra.mxu0 0.0
  %2717 = vmatprep.subr.mxu0 0.0
  %2718 = vmatpush1.msra.mxu0 0.0
  %2719 = vmatprep.subr.mxu0 0.0
  %2720 = vmatpush1.msra.mxu0 0.0
  %2721 = vmatprep.subr.mxu0 0.0
  %2722 = vmatpush1.msra.mxu0 0.0
  %2723 = vmatprep.subr.mxu0 0.0
  %2724 = vmatpush1.msra.mxu0 0.0
  %2725 = vmatprep.subr.mxu0 0.0
  %2726 = vmatpush1.msra.mxu0 0.0
  %2727 = vmatprep.subr.mxu0 0.0
  %2728 = vmatpush1.msra.mxu0 0.0
  %2729 = vmatprep.mubr.f32.mxu0 0.0
  %2730 = vmatmul.mubr.f32.gmra.mrb[0].mxu0 %v2648
  %v2731 = vpop.f32.mrb[0].mxu0
  %v2732 = vadd.f32 0.0, %v2731
  %v2733 = vpop.f32.mrb[0].mxu0
  %2734 = vmatprep.mubr.f32.mxu0 0.0
  %2735 = vmatmul.mubr.f32.gmra.mrb[0].mxu0 %v2651
  %v2736 = vpop.f32.mrb[0].mxu0
  %v2737 = vadd.f32 0.0, %v2736
  %v2738 = vpop.f32.mrb[0].mxu0
  %2739 = vmatprep.mubr.f32.mxu0 0.0
  %2740 = vmatmul.mubr.f32.gmra.mrb[0].mxu0 %v2654
  %v2741 = vpop.f32.mrb[0].mxu0
  %v2742 = vadd.f32 0.0, %v2741
  %v2743 = vpop.f32.mrb[0].mxu0
  %2744 = vmatprep.mubr.f32.mxu0 0.0
  %2745 = vmatmul.mubr.f32.gmra.mrb[0].mxu0 %v2657
  %v2746 = vpop.f32.mrb[0].mxu0
  %v2747 = vadd.f32 0.0, %v2746
  %v2748 = vpop.f32.mrb[0].mxu0
  %2749 = vmatprep.mubr.f32.mxu0 0.0
  %2750 = vmatmul.mubr.f32.gmra.mrb[0].mxu0 %v2660
  %v2751 = vpop.f32.mrb[0].mxu0
  %v2752 = vadd.f32 0.0, %v2751
  %v2753 = vpop.f32.mrb[0].mxu0
  %2754 = vmatprep.mubr.f32.mxu0 0.0
  %2755 = vmatmul.mubr.f32.gmra.mrb[0].mxu0 %v2663
  %v2756 = vpop.f32.mrb[0].mxu0
  %v2757 = vadd.f32 0.0, %v2756
  %v2758 = vpop.f32.mrb[0].mxu0
  %2759 = vdwg.mxu0
  %v2761 = vsel %vm1678, %v2536, 0
  %v2764 = vsel %vm1678, %v2541, 0
  %v2767 = vsel %vm1678, %v2546, 0
  %v2770 = vsel %vm1678, %v2551, 0
  %v2773 = vsel %vm1678, %v2556, 0
  %v2776 = vsel %vm1678, %v2561, 0
  %2778 = vmatprep.subr.mxu0 0.0
  %2779 = vmatpush1.msra.mxu0 %v2624
  %2780 = vmatprep.subr.mxu0 0.0
  %2781 = vmatpush1.msra.mxu0 %v2625
  %2782 = vmatprep.subr.mxu0 0.0
  %2783 = vmatpush1.msra.mxu0 %v2626
  %2784 = vmatprep.subr.mxu0 0.0
  %2785 = vmatpush1.msra.mxu0 %v2627
  %2786 = vmatprep.subr.mxu0 0.0
  %2787 = vmatpush1.msra.mxu0 %v2628
  %2788 = vmatprep.subr.mxu0 0.0
  %2789 = vmatpush1.msra.mxu0 %v2629
  %2790 = vmatprep.subr.mxu0 0.0
  %2791 = vmatpush1.msra.mxu0 %v2630
  %2792 = vmatprep.subr.mxu0 0.0
  %2793 = vmatpush1.msra.mxu0 %v2631
  %2794 = vmatprep.subr.mxu0 0.0
  %2795 = vmatpush1.msra.mxu0 %v2632
  %2796 = vmatprep.subr.mxu0 0.0
  %2797 = vmatpush1.msra.mxu0 %v2633
  %2798 = vmatprep.subr.mxu0 0.0
  %2799 = vmatpush1.msra.mxu0 %v2634
  %2800 = vmatprep.subr.mxu0 0.0
  %2801 = vmatpush1.msra.mxu0 0.0
  %2802 = vmatprep.subr.mxu0 0.0
  %2803 = vmatpush1.msra.mxu0 0.0
  %2804 = vmatprep.subr.mxu0 0.0
  %2805 = vmatpush1.msra.mxu0 0.0
  %2806 = vmatprep.subr.mxu0 0.0
  %2807 = vmatpush1.msra.mxu0 0.0
  %2808 = vmatprep.subr.mxu0 0.0
  %2809 = vmatpush1.msra.mxu0 0.0
  %2810 = vmatprep.subr.mxu0 0.0
  %2811 = vmatpush1.msra.mxu0 0.0
  %2812 = vmatprep.subr.mxu0 0.0
  %2813 = vmatpush1.msra.mxu0 0.0
  %2814 = vmatprep.subr.mxu0 0.0
  %2815 = vmatpush1.msra.mxu0 0.0
  %2816 = vmatprep.subr.mxu0 0.0
  %2817 = vmatpush1.msra.mxu0 0.0
  %2818 = vmatprep.subr.mxu0 0.0
  %2819 = vmatpush1.msra.mxu0 0.0
  %2820 = vmatprep.subr.mxu0 0.0
  %2821 = vmatpush1.msra.mxu0 0.0
  %2822 = vmatprep.subr.mxu0 0.0
  %2823 = vmatpush1.msra.mxu0 0.0
  %2824 = vmatprep.subr.mxu0 0.0
  %2825 = vmatpush1.msra.mxu0 0.0
  %2826 = vmatprep.subr.mxu0 0.0
  %2827 = vmatpush1.msra.mxu0 0.0
  %2828 = vmatprep.subr.mxu0 0.0
  %2829 = vmatpush1.msra.mxu0 0.0
  %2830 = vmatprep.subr.mxu0 0.0
  %2831 = vmatpush1.msra.mxu0 0.0
  %2832 = vmatprep.subr.mxu0 0.0
  %2833 = vmatpush1.msra.mxu0 0.0
  %2834 = vmatprep.subr.mxu0 0.0
  %2835 = vmatpush1.msra.mxu0 0.0
  %2836 = vmatprep.subr.mxu0 0.0
  %2837 = vmatpush1.msra.mxu0 0.0
  %2838 = vmatprep.subr.mxu0 0.0
  %2839 = vmatpush1.msra.mxu0 0.0
  %2840 = vmatprep.subr.mxu0 0.0
  %2841 = vmatpush1.msra.mxu0 0.0
  %2842 = vmatprep.mubr.f32.mxu0 0.0
  %2843 = vmatmul.mubr.f32.gmra.mrb[0].mxu0 %v2761
  %v2844 = vpop.f32.mrb[0].mxu0
  %v2845 = vadd.f32 %v2732, %v2844
  %v2846 = vpop.f32.mrb[0].mxu0
  %2847 = vmatprep.mubr.f32.mxu0 0.0
  %2848 = vmatmul.mubr.f32.gmra.mrb[0].mxu0 %v2764
  %v2849 = vpop.f32.mrb[0].mxu0
  %v2850 = vadd.f32 %v2737, %v2849
  %v2851 = vpop.f32.mrb[0].mxu0
  %2852 = vmatprep.mubr.f32.mxu0 0.0
  %2853 = vmatmul.mubr.f32.gmra.mrb[0].mxu0 %v2767
  %v2854 = vpop.f32.mrb[0].mxu0
  %v2855 = vadd.f32 %v2742, %v2854
  %v2856 = vpop.f32.mrb[0].mxu0
  %2857 = vmatprep.mubr.f32.mxu0 0.0
  %2858 = vmatmul.mubr.f32.gmra.mrb[0].mxu0 %v2770
  %v2859 = vpop.f32.mrb[0].mxu0
  %v2860 = vadd.f32 %v2747, %v2859
  %v2861 = vpop.f32.mrb[0].mxu0
  %2862 = vmatprep.mubr.f32.mxu0 0.0
  %2863 = vmatmul.mubr.f32.gmra.mrb[0].mxu0 %v2773
  %v2864 = vpop.f32.mrb[0].mxu0
  %v2865 = vadd.f32 %v2752, %v2864
  %v2866 = vpop.f32.mrb[0].mxu0
  %2867 = vmatprep.mubr.f32.mxu0 0.0
  %2868 = vmatmul.mubr.f32.gmra.mrb[0].mxu0 %v2776
  %v2869 = vpop.f32.mrb[0].mxu0
  %v2870 = vadd.f32 %v2757, %v2869
  %v2871 = vpop.f32.mrb[0].mxu0
  %2872 = vdwg.mxu0
  %s2873 = scalar_lea.vmem %s14, 176
  %v2874 = vld [vmem:[%s2873] sm:$0xff]
  %v2875 = vld [vmem:[%s2873 + $0x8] sm:$0xff]
  %v2876 = vld [vmem:[%s2873 + $0x10] sm:$0xff]
  %v2877 = vld [vmem:[%s2873 + $0x18] sm:$0xff]
  %v2878 = vld [vmem:[%s2873 + $0x20] sm:$0xff]
  %v2879 = vld [vmem:[%s2873 + $0x28] sm:$0xff]
  %v2880 = vld [vmem:[%s2873 + $0x30] sm:$0xff]
  %v2881 = vld [vmem:[%s2873 + $0x38] sm:$0xff]
  %v2882 = vld [vmem:[%s2873 + $0x40] sm:$0xff]
  %v2883 = vld [vmem:[%s2873 + $0x48] sm:$0xff]
  %v2884 = vld [vmem:[%s2873 + $0x50] sm:$0xff]
  %v2886 = vsel %vm1678, %v2596, 0
  %v2889 = vsel %vm1678, %v2601, 0
  %v2892 = vsel %vm1678, %v2606, 0
  %v2895 = vsel %vm1678, %v2611, 0
  %v2898 = vsel %vm1678, %v2616, 0
  %v2901 = vsel %vm1678, %v2621, 0
  %2903 = vmatprep.subr.mxu0 0.0
  %2904 = vmatpush1.msra.mxu0 %v2874
  %2905 = vmatprep.subr.mxu0 0.0
  %2906 = vmatpush1.msra.mxu0 %v2875
  %2907 = vmatprep.subr.mxu0 0.0
  %2908 = vmatpush1.msra.mxu0 %v2876
  %2909 = vmatprep.subr.mxu0 0.0
  %2910 = vmatpush1.msra.mxu0 %v2877
  %2911 = vmatprep.subr.mxu0 0.0
  %2912 = vmatpush1.msra.mxu0 %v2878
  %2913 = vmatprep.subr.mxu0 0.0
  %2914 = vmatpush1.msra.mxu0 %v2879
  %2915 = vmatprep.subr.mxu0 0.0
  %2916 = vmatpush1.msra.mxu0 %v2880
  %2917 = vmatprep.subr.mxu0 0.0
  %2918 = vmatpush1.msra.mxu0 %v2881
  %2919 = vmatprep.subr.mxu0 0.0
  %2920 = vmatpush1.msra.mxu0 %v2882
  %2921 = vmatprep.subr.mxu0 0.0
  %2922 = vmatpush1.msra.mxu0 %v2883
  %2923 = vmatprep.subr.mxu0 0.0
  %2924 = vmatpush1.msra.mxu0 %v2884
  %2925 = vmatprep.subr.mxu0 0.0
  %2926 = vmatpush1.msra.mxu0 0.0
  %2927 = vmatprep.subr.mxu0 0.0
  %2928 = vmatpush1.msra.mxu0 0.0
  %2929 = vmatprep.subr.mxu0 0.0
  %2930 = vmatpush1.msra.mxu0 0.0
  %2931 = vmatprep.subr.mxu0 0.0
  %2932 = vmatpush1.msra.mxu0 0.0
  %2933 = vmatprep.subr.mxu0 0.0
  %2934 = vmatpush1.msra.mxu0 0.0
  %2935 = vmatprep.subr.mxu0 0.0
  %2936 = vmatpush1.msra.mxu0 0.0
  %2937 = vmatprep.subr.mxu0 0.0
  %2938 = vmatpush1.msra.mxu0 0.0
  %2939 = vmatprep.subr.mxu0 0.0
  %2940 = vmatpush1.msra.mxu0 0.0
  %2941 = vmatprep.subr.mxu0 0.0
  %2942 = vmatpush1.msra.mxu0 0.0
  %2943 = vmatprep.subr.mxu0 0.0
  %2944 = vmatpush1.msra.mxu0 0.0
  %2945 = vmatprep.subr.mxu0 0.0
  %2946 = vmatpush1.msra.mxu0 0.0
  %2947 = vmatprep.subr.mxu0 0.0
  %2948 = vmatpush1.msra.mxu0 0.0
  %2949 = vmatprep.subr.mxu0 0.0
  %2950 = vmatpush1.msra.mxu0 0.0
  %2951 = vmatprep.subr.mxu0 0.0
  %2952 = vmatpush1.msra.mxu0 0.0
  %2953 = vmatprep.subr.mxu0 0.0
  %2954 = vmatpush1.msra.mxu0 0.0
  %2955 = vmatprep.subr.mxu0 0.0
  %2956 = vmatpush1.msra.mxu0 0.0
  %2957 = vmatprep.subr.mxu0 0.0
  %2958 = vmatpush1.msra.mxu0 0.0
  %2959 = vmatprep.subr.mxu0 0.0
  %2960 = vmatpush1.msra.mxu0 0.0
  %2961 = vmatprep.subr.mxu0 0.0
  %2962 = vmatpush1.msra.mxu0 0.0
  %2963 = vmatprep.subr.mxu0 0.0
  %2964 = vmatpush1.msra.mxu0 0.0
  %2965 = vmatprep.subr.mxu0 0.0
  %2966 = vmatpush1.msra.mxu0 0.0
  %2967 = vmatprep.mubr.f32.mxu0 0.0
  %2968 = vmatmul.mubr.f32.gmra.mrb[0].mxu0 %v2886
  %v2969 = vpop.f32.mrb[0].mxu0
  %v2970 = vadd.f32 0.0, %v2969
  %v2971 = vpop.f32.mrb[0].mxu0
  %2972 = vmatprep.mubr.f32.mxu0 0.0
  %2973 = vmatmul.mubr.f32.gmra.mrb[0].mxu0 %v2889
  %v2974 = vpop.f32.mrb[0].mxu0
  %v2975 = vadd.f32 0.0, %v2974
  %v2976 = vpop.f32.mrb[0].mxu0
  %2977 = vmatprep.mubr.f32.mxu0 0.0
  %2978 = vmatmul.mubr.f32.gmra.mrb[0].mxu0 %v2892
  %v2979 = vpop.f32.mrb[0].mxu0
  %v2980 = vadd.f32 0.0, %v2979
  %v2981 = vpop.f32.mrb[0].mxu0
  %2982 = vmatprep.mubr.f32.mxu0 0.0
  %2983 = vmatmul.mubr.f32.gmra.mrb[0].mxu0 %v2895
  %v2984 = vpop.f32.mrb[0].mxu0
  %v2985 = vadd.f32 0.0, %v2984
  %v2986 = vpop.f32.mrb[0].mxu0
  %2987 = vmatprep.mubr.f32.mxu0 0.0
  %2988 = vmatmul.mubr.f32.gmra.mrb[0].mxu0 %v2898
  %v2989 = vpop.f32.mrb[0].mxu0
  %v2990 = vadd.f32 0.0, %v2989
  %v2991 = vpop.f32.mrb[0].mxu0
  %2992 = vmatprep.mubr.f32.mxu0 0.0
  %2993 = vmatmul.mubr.f32.gmra.mrb[0].mxu0 %v2901
  %v2994 = vpop.f32.mrb[0].mxu0
  %v2995 = vadd.f32 0.0, %v2994
  %v2996 = vpop.f32.mrb[0].mxu0
  %2997 = vdwg.mxu0
  %v2998 = vadd.f32 %v2845, %v2970
  %v2999 = vadd.f32 %v2850, %v2975
  %v3000 = vadd.f32 %v2855, %v2980
  %v3001 = vadd.f32 %v2860, %v2985
  %v3002 = vadd.f32 %v2865, %v2990
  %v3003 = vadd.f32 %v2870, %v2995
  %v3004 = vld [vmem:[%s15] sm:$0x1]
  %v3006 = vlaneseq
  %v3007 = vshrl.u32 %v3006, 7
  %v3008 = vsub.s32 0, %v3007
  %v3009 = vrot.slane %v3004, %v3008
  %v3011 = vadd.f32 %v2998, %v3009
  %v3012 = vadd.f32 %v2999, %v3009
  %v3013 = vadd.f32 %v3000, %v3009
  %v3014 = vadd.f32 %v3001, %v3009
  %v3015 = vadd.f32 %v3002, %v3009
  %v3016 = vadd.f32 %v3003, %v3009
  %v3017 = vmax.f32 %v3011, 0.0
  %v3018 = vmax.f32 %v3012, 0.0
  %v3019 = vmax.f32 %v3013, 0.0
  %v3020 = vmax.f32 %v3014, 0.0
  %v3021 = vmax.f32 %v3015, 0.0
  %v3022 = vmax.f32 %v3016, 0.0
  %v3023 = vld [vmem:[%s16] sm:$0xff]
  %v3024 = vld [vmem:[%s16 + $0x8] sm:$0xff]
  %v3025 = vld [vmem:[%s16 + $0x10] sm:$0xff]
  %v3026 = vld [vmem:[%s16 + $0x18] sm:$0xff]
  %v3027 = vld [vmem:[%s16 + $0x20] sm:$0xff]
  %v3028 = vld [vmem:[%s16 + $0x28] sm:$0xff]
  %v3029 = vld [vmem:[%s16 + $0x30] sm:$0xff]
  %v3030 = vld [vmem:[%s16 + $0x38] sm:$0xff]
  %v3031 = vld [vmem:[%s16 + $0x40] sm:$0xff]
  %v3032 = vld [vmem:[%s16 + $0x48] sm:$0xff]
  %v3033 = vld [vmem:[%s16 + $0x50] sm:$0xff]
  %v3034 = vld [vmem:[%s16 + $0x58] sm:$0xff]
  %v3035 = vld [vmem:[%s16 + $0x60] sm:$0xff]
  %v3036 = vld [vmem:[%s16 + $0x68] sm:$0xff]
  %v3037 = vld [vmem:[%s16 + $0x70] sm:$0xff]
  %v3038 = vld [vmem:[%s16 + $0x78] sm:$0xff]
  %v3039 = vld [vmem:[%s16 + $0x80] sm:$0xff]
  %v3040 = vld [vmem:[%s16 + $0x88] sm:$0xff]
  %v3041 = vld [vmem:[%s16 + $0x90] sm:$0xff]
  %v3042 = vld [vmem:[%s16 + $0x98] sm:$0xff]
  %v3043 = vld [vmem:[%s16 + $0xa0] sm:$0xff]
  %v3044 = vld [vmem:[%s16 + $0xa8] sm:$0xff]
  %v3045 = vld [vmem:[%s16 + $0xb0] sm:$0xff]
  %v3046 = vld [vmem:[%s16 + $0xb8] sm:$0xff]
  %v3047 = vld [vmem:[%s16 + $0xc0] sm:$0xff]
  %v3048 = vld [vmem:[%s16 + $0xc8] sm:$0xff]
  %v3049 = vld [vmem:[%s16 + $0xd0] sm:$0xff]
  %v3050 = vld [vmem:[%s16 + $0xd8] sm:$0xff]
  %v3051 = vld [vmem:[%s16 + $0xe0] sm:$0xff]
  %v3052 = vld [vmem:[%s16 + $0xe8] sm:$0xff]
  %v3053 = vld [vmem:[%s16 + $0xf0] sm:$0xff]
  %v3054 = vld [vmem:[%s16 + $0xf8] sm:$0xff]
  %v3055 = vld [vmem:[%s16 + $0x100] sm:$0xff]
  %v3056 = vld [vmem:[%s16 + $0x108] sm:$0xff]
  %v3057 = vld [vmem:[%s16 + $0x110] sm:$0xff]
  %v3058 = vld [vmem:[%s16 + $0x118] sm:$0xff]
  %v3059 = vld [vmem:[%s16 + $0x120] sm:$0xff]
  %v3060 = vld [vmem:[%s16 + $0x128] sm:$0xff]
  %v3061 = vld [vmem:[%s16 + $0x130] sm:$0xff]
  %v3062 = vld [vmem:[%s16 + $0x138] sm:$0xff]
  %v3063 = vld [vmem:[%s16 + $0x140] sm:$0xff]
  %v3064 = vld [vmem:[%s16 + $0x148] sm:$0xff]
  %v3065 = vld [vmem:[%s16 + $0x150] sm:$0xff]
  %v3066 = vld [vmem:[%s16 + $0x158] sm:$0xff]
  %v3067 = vld [vmem:[%s16 + $0x160] sm:$0xff]
  %v3068 = vld [vmem:[%s16 + $0x168] sm:$0xff]
  %v3069 = vld [vmem:[%s16 + $0x170] sm:$0xff]
  %v3070 = vld [vmem:[%s16 + $0x178] sm:$0xff]
  %v3071 = vld [vmem:[%s16 + $0x180] sm:$0xff]
  %v3072 = vld [vmem:[%s16 + $0x188] sm:$0xff]
  %v3073 = vld [vmem:[%s16 + $0x190] sm:$0xff]
  %v3074 = vld [vmem:[%s16 + $0x198] sm:$0xff]
  %v3075 = vld [vmem:[%s16 + $0x1a0] sm:$0xff]
  %v3076 = vld [vmem:[%s16 + $0x1a8] sm:$0xff]
  %v3077 = vld [vmem:[%s16 + $0x1b0] sm:$0xff]
  %v3078 = vld [vmem:[%s16 + $0x1b8] sm:$0xff]
  %v3079 = vld [vmem:[%s16 + $0x1c0] sm:$0xff]
  %v3080 = vld [vmem:[%s16 + $0x1c8] sm:$0xff]
  %v3081 = vld [vmem:[%s16 + $0x1d0] sm:$0xff]
  %v3082 = vld [vmem:[%s16 + $0x1d8] sm:$0xff]
  %v3084 = vsel %vm1072, %v3023, 0
  %v3087 = vsel %vm1072, %v3024, 0
  %v3090 = vsel %vm1072, %v3025, 0
  %v3093 = vsel %vm1072, %v3026, 0
  %v3096 = vsel %vm1072, %v3027, 0
  %v3099 = vsel %vm1072, %v3028, 0
  %v3102 = vsel %vm1072, %v3029, 0
  %v3105 = vsel %vm1072, %v3030, 0
  %v3108 = vsel %vm1072, %v3031, 0
  %v3111 = vsel %vm1072, %v3032, 0
  %v3114 = vsel %vm1072, %v3033, 0
  %v3117 = vsel %vm1072, %v3034, 0
  %v3120 = vsel %vm1072, %v3035, 0
  %v3123 = vsel %vm1072, %v3036, 0
  %v3126 = vsel %vm1072, %v3037, 0
  %v3129 = vsel %vm1072, %v3038, 0
  %v3132 = vsel %vm1072, %v3039, 0
  %v3135 = vsel %vm1072, %v3040, 0
  %v3138 = vsel %vm1072, %v3041, 0
  %v3141 = vsel %vm1072, %v3042, 0
  %v3144 = vsel %vm1072, %v3043, 0
  %v3147 = vsel %vm1072, %v3044, 0
  %v3150 = vsel %vm1072, %v3045, 0
  %v3153 = vsel %vm1072, %v3046, 0
  %v3156 = vsel %vm1072, %v3047, 0
  %v3159 = vsel %vm1072, %v3048, 0
  %v3162 = vsel %vm1072, %v3049, 0
  %v3165 = vsel %vm1072, %v3050, 0
  %v3168 = vsel %vm1072, %v3051, 0
  %v3171 = vsel %vm1072, %v3052, 0
  %v3174 = vsel %vm1072, %v3053, 0
  %v3177 = vsel %vm1072, %v3054, 0
  %v3180 = vsel %vm1072, %v3055, 0
  %v3183 = vsel %vm1072, %v3056, 0
  %v3186 = vsel %vm1072, %v3057, 0
  %v3189 = vsel %vm1072, %v3058, 0
  %v3192 = vsel %vm1072, %v3059, 0
  %v3195 = vsel %vm1072, %v3060, 0
  %v3198 = vsel %vm1072, %v3061, 0
  %v3201 = vsel %vm1072, %v3062, 0
  %v3204 = vsel %vm1072, %v3063, 0
  %v3207 = vsel %vm1072, %v3064, 0
  %v3210 = vsel %vm1072, %v3065, 0
  %v3213 = vsel %vm1072, %v3066, 0
  %v3216 = vsel %vm1072, %v3067, 0
  %v3219 = vsel %vm1072, %v3068, 0
  %v3222 = vsel %vm1072, %v3069, 0
  %v3225 = vsel %vm1072, %v3070, 0
  %v3228 = vsel %vm1072, %v3071, 0
  %v3231 = vsel %vm1072, %v3072, 0
  %v3234 = vsel %vm1072, %v3073, 0
  %v3237 = vsel %vm1072, %v3074, 0
  %v3240 = vsel %vm1072, %v3075, 0
  %v3243 = vsel %vm1072, %v3076, 0
  %v3246 = vsel %vm1072, %v3077, 0
  %v3249 = vsel %vm1072, %v3078, 0
  %v3252 = vsel %vm1072, %v3079, 0
  %v3255 = vsel %vm1072, %v3080, 0
  %v3258 = vsel %vm1072, %v3081, 0
  %v3261 = vsel %vm1072, %v3082, 0
  %3263 = vmatprep.subr.mxu0 0.0
  %3264 = vmatpush1.msra.mxu0 %v3017
  %3265 = vmatprep.subr.mxu0 0.0
  %3266 = vmatpush1.msra.mxu0 %v3018
  %3267 = vmatprep.subr.mxu0 0.0
  %3268 = vmatpush1.msra.mxu0 %v3019
  %3269 = vmatprep.subr.mxu0 0.0
  %3270 = vmatpush1.msra.mxu0 %v3020
  %3271 = vmatprep.subr.mxu0 0.0
  %3272 = vmatpush1.msra.mxu0 %v3021
  %3273 = vmatprep.subr.mxu0 0.0
  %3274 = vmatpush1.msra.mxu0 %v3022
  %3275 = vmatprep.subr.mxu0 0.0
  %3276 = vmatpush1.msra.mxu0 0.0
  %3277 = vmatprep.subr.mxu0 0.0
  %3278 = vmatpush1.msra.mxu0 0.0
  %3279 = vmatprep.subr.mxu0 0.0
  %3280 = vmatpush1.msra.mxu0 0.0
  %3281 = vmatprep.subr.mxu0 0.0
  %3282 = vmatpush1.msra.mxu0 0.0
  %3283 = vmatprep.subr.mxu0 0.0
  %3284 = vmatpush1.msra.mxu0 0.0
  %3285 = vmatprep.subr.mxu0 0.0
  %3286 = vmatpush1.msra.mxu0 0.0
  %3287 = vmatprep.subr.mxu0 0.0
  %3288 = vmatpush1.msra.mxu0 0.0
  %3289 = vmatprep.subr.mxu0 0.0
  %3290 = vmatpush1.msra.mxu0 0.0
  %3291 = vmatprep.subr.mxu0 0.0
  %3292 = vmatpush1.msra.mxu0 0.0
  %3293 = vmatprep.subr.mxu0 0.0
  %3294 = vmatpush1.msra.mxu0 0.0
  %3295 = vmatprep.subr.mxu0 0.0
  %3296 = vmatpush1.msra.mxu0 0.0
  %3297 = vmatprep.subr.mxu0 0.0
  %3298 = vmatpush1.msra.mxu0 0.0
  %3299 = vmatprep.subr.mxu0 0.0
  %3300 = vmatpush1.msra.mxu0 0.0
  %3301 = vmatprep.subr.mxu0 0.0
  %3302 = vmatpush1.msra.mxu0 0.0
  %3303 = vmatprep.subr.mxu0 0.0
  %3304 = vmatpush1.msra.mxu0 0.0
  %3305 = vmatprep.subr.mxu0 0.0
  %3306 = vmatpush1.msra.mxu0 0.0
  %3307 = vmatprep.subr.mxu0 0.0
  %3308 = vmatpush1.msra.mxu0 0.0
  %3309 = vmatprep.subr.mxu0 0.0
  %3310 = vmatpush1.msra.mxu0 0.0
  %3311 = vmatprep.subr.mxu0 0.0
  %3312 = vmatpush1.msra.mxu0 0.0
  %3313 = vmatprep.subr.mxu0 0.0
  %3314 = vmatpush1.msra.mxu0 0.0
  %3315 = vmatprep.subr.mxu0 0.0
  %3316 = vmatpush1.msra.mxu0 0.0
  %3317 = vmatprep.subr.mxu0 0.0
  %3318 = vmatpush1.msra.mxu0 0.0
  %3319 = vmatprep.subr.mxu0 0.0
  %3320 = vmatpush1.msra.mxu0 0.0
  %3321 = vmatprep.subr.mxu0 0.0
  %3322 = vmatpush1.msra.mxu0 0.0
  %3323 = vmatprep.subr.mxu0 0.0
  %3324 = vmatpush1.msra.mxu0 0.0
  %3325 = vmatprep.subr.mxu0 0.0
  %3326 = vmatpush1.msra.mxu0 0.0
  %3327 = vmatprep.mubr.f32.mxu0 0.0
  %3328 = vmatmul.mubr.f32.gmra.mrb[0].mxu0 %v3084
  %v3329 = vpop.f32.mrb[0].mxu0
  %v3330 = vadd.f32 0.0, %v3329
  %v3331 = vpop.f32.mrb[0].mxu0
  %3332 = vmatprep.mubr.f32.mxu0 0.0
  %3333 = vmatmul.mubr.f32.gmra.mrb[0].mxu0 %v3087
  %v3334 = vpop.f32.mrb[0].mxu0
  %v3335 = vadd.f32 0.0, %v3334
  %v3336 = vpop.f32.mrb[0].mxu0
  %3337 = vmatprep.mubr.f32.mxu0 0.0
  %3338 = vmatmul.mubr.f32.gmra.mrb[0].mxu0 %v3090
  %v3339 = vpop.f32.mrb[0].mxu0
  %v3340 = vadd.f32 0.0, %v3339
  %v3341 = vpop.f32.mrb[0].mxu0
  %3342 = vmatprep.mubr.f32.mxu0 0.0
  %3343 = vmatmul.mubr.f32.gmra.mrb[0].mxu0 %v3093
  %v3344 = vpop.f32.mrb[0].mxu0
  %v3345 = vadd.f32 0.0, %v3344
  %v3346 = vpop.f32.mrb[0].mxu0
  %3347 = vmatprep.mubr.f32.mxu0 0.0
  %3348 = vmatmul.mubr.f32.gmra.mrb[0].mxu0 %v3096
  %v3349 = vpop.f32.mrb[0].mxu0
  %v3350 = vadd.f32 0.0, %v3349
  %v3351 = vpop.f32.mrb[0].mxu0
  %3352 = vmatprep.mubr.f32.mxu0 0.0
  %3353 = vmatmul.mubr.f32.gmra.mrb[0].mxu0 %v3099
  %v3354 = vpop.f32.mrb[0].mxu0
  %v3355 = vadd.f32 0.0, %v3354
  %v3356 = vpop.f32.mrb[0].mxu0
  %3357 = vmatprep.mubr.f32.mxu0 0.0
  %3358 = vmatmul.mubr.f32.gmra.mrb[0].mxu0 %v3102
  %v3359 = vpop.f32.mrb[0].mxu0
  %v3360 = vadd.f32 0.0, %v3359
  %v3361 = vpop.f32.mrb[0].mxu0
  %3362 = vmatprep.mubr.f32.mxu0 0.0
  %3363 = vmatmul.mubr.f32.gmra.mrb[0].mxu0 %v3105
  %v3364 = vpop.f32.mrb[0].mxu0
  %v3365 = vadd.f32 0.0, %v3364
  %v3366 = vpop.f32.mrb[0].mxu0
  %3367 = vmatprep.mubr.f32.mxu0 0.0
  %3368 = vmatmul.mubr.f32.gmra.mrb[0].mxu0 %v3108
  %v3369 = vpop.f32.mrb[0].mxu0
  %v3370 = vadd.f32 0.0, %v3369
  %v3371 = vpop.f32.mrb[0].mxu0
  %3372 = vmatprep.mubr.f32.mxu0 0.0
  %3373 = vmatmul.mubr.f32.gmra.mrb[0].mxu0 %v3111
  %v3374 = vpop.f32.mrb[0].mxu0
  %v3375 = vadd.f32 0.0, %v3374
  %v3376 = vpop.f32.mrb[0].mxu0
  %3377 = vmatprep.mubr.f32.mxu0 0.0
  %3378 = vmatmul.mubr.f32.gmra.mrb[0].mxu0 %v3114
  %v3379 = vpop.f32.mrb[0].mxu0
  %v3380 = vadd.f32 0.0, %v3379
  %v3381 = vpop.f32.mrb[0].mxu0
  %3382 = vmatprep.mubr.f32.mxu0 0.0
  %3383 = vmatmul.mubr.f32.gmra.mrb[0].mxu0 %v3117
  %v3384 = vpop.f32.mrb[0].mxu0
  %v3385 = vadd.f32 0.0, %v3384
  %v3386 = vpop.f32.mrb[0].mxu0
  %3387 = vmatprep.mubr.f32.mxu0 0.0
  %3388 = vmatmul.mubr.f32.gmra.mrb[0].mxu0 %v3120
  %v3389 = vpop.f32.mrb[0].mxu0
  %v3390 = vadd.f32 0.0, %v3389
  %v3391 = vpop.f32.mrb[0].mxu0
  %3392 = vmatprep.mubr.f32.mxu0 0.0
  %3393 = vmatmul.mubr.f32.gmra.mrb[0].mxu0 %v3123
  %v3394 = vpop.f32.mrb[0].mxu0
  %v3395 = vadd.f32 0.0, %v3394
  %v3396 = vpop.f32.mrb[0].mxu0
  %3397 = vmatprep.mubr.f32.mxu0 0.0
  %3398 = vmatmul.mubr.f32.gmra.mrb[0].mxu0 %v3126
  %v3399 = vpop.f32.mrb[0].mxu0
  %v3400 = vadd.f32 0.0, %v3399
  %v3401 = vpop.f32.mrb[0].mxu0
  %3402 = vmatprep.mubr.f32.mxu0 0.0
  %3403 = vmatmul.mubr.f32.gmra.mrb[0].mxu0 %v3129
  %v3404 = vpop.f32.mrb[0].mxu0
  %v3405 = vadd.f32 0.0, %v3404
  %v3406 = vpop.f32.mrb[0].mxu0
  %3407 = vmatprep.mubr.f32.mxu0 0.0
  %3408 = vmatmul.mubr.f32.gmra.mrb[0].mxu0 %v3132
  %v3409 = vpop.f32.mrb[0].mxu0
  %v3410 = vadd.f32 0.0, %v3409
  %v3411 = vpop.f32.mrb[0].mxu0
  %3412 = vmatprep.mubr.f32.mxu0 0.0
  %3413 = vmatmul.mubr.f32.gmra.mrb[0].mxu0 %v3135
  %v3414 = vpop.f32.mrb[0].mxu0
  %v3415 = vadd.f32 0.0, %v3414
  %v3416 = vpop.f32.mrb[0].mxu0
  %3417 = vmatprep.mubr.f32.mxu0 0.0
  %3418 = vmatmul.mubr.f32.gmra.mrb[0].mxu0 %v3138
  %v3419 = vpop.f32.mrb[0].mxu0
  %v3420 = vadd.f32 0.0, %v3419
  %v3421 = vpop.f32.mrb[0].mxu0
  %3422 = vmatprep.mubr.f32.mxu0 0.0
  %3423 = vmatmul.mubr.f32.gmra.mrb[0].mxu0 %v3141
  %v3424 = vpop.f32.mrb[0].mxu0
  %v3425 = vadd.f32 0.0, %v3424
  %v3426 = vpop.f32.mrb[0].mxu0
  %3427 = vmatprep.mubr.f32.mxu0 0.0
  %3428 = vmatmul.mubr.f32.gmra.mrb[0].mxu0 %v3144
  %v3429 = vpop.f32.mrb[0].mxu0
  %v3430 = vadd.f32 0.0, %v3429
  %v3431 = vpop.f32.mrb[0].mxu0
  %3432 = vmatprep.mubr.f32.mxu0 0.0
  %3433 = vmatmul.mubr.f32.gmra.mrb[0].mxu0 %v3147
  %v3434 = vpop.f32.mrb[0].mxu0
  %v3435 = vadd.f32 0.0, %v3434
  %v3436 = vpop.f32.mrb[0].mxu0
  %3437 = vmatprep.mubr.f32.mxu0 0.0
  %3438 = vmatmul.mubr.f32.gmra.mrb[0].mxu0 %v3150
  %v3439 = vpop.f32.mrb[0].mxu0
  %v3440 = vadd.f32 0.0, %v3439
  %v3441 = vpop.f32.mrb[0].mxu0
  %3442 = vmatprep.mubr.f32.mxu0 0.0
  %3443 = vmatmul.mubr.f32.gmra.mrb[0].mxu0 %v3153
  %v3444 = vpop.f32.mrb[0].mxu0
  %v3445 = vadd.f32 0.0, %v3444
  %v3446 = vpop.f32.mrb[0].mxu0
  %3447 = vmatprep.mubr.f32.mxu0 0.0
  %3448 = vmatmul.mubr.f32.gmra.mrb[0].mxu0 %v3156
  %v3449 = vpop.f32.mrb[0].mxu0
  %v3450 = vadd.f32 0.0, %v3449
  %v3451 = vpop.f32.mrb[0].mxu0
  %3452 = vmatprep.mubr.f32.mxu0 0.0
  %3453 = vmatmul.mubr.f32.gmra.mrb[0].mxu0 %v3159
  %v3454 = vpop.f32.mrb[0].mxu0
  %v3455 = vadd.f32 0.0, %v3454
  %v3456 = vpop.f32.mrb[0].mxu0
  %3457 = vmatprep.mubr.f32.mxu0 0.0
  %3458 = vmatmul.mubr.f32.gmra.mrb[0].mxu0 %v3162
  %v3459 = vpop.f32.mrb[0].mxu0
  %v3460 = vadd.f32 0.0, %v3459
  %v3461 = vpop.f32.mrb[0].mxu0
  %3462 = vmatprep.mubr.f32.mxu0 0.0
  %3463 = vmatmul.mubr.f32.gmra.mrb[0].mxu0 %v3165
  %v3464 = vpop.f32.mrb[0].mxu0
  %v3465 = vadd.f32 0.0, %v3464
  %v3466 = vpop.f32.mrb[0].mxu0
  %3467 = vmatprep.mubr.f32.mxu0 0.0
  %3468 = vmatmul.mubr.f32.gmra.mrb[0].mxu0 %v3168
  %v3469 = vpop.f32.mrb[0].mxu0
  %v3470 = vadd.f32 0.0, %v3469
  %v3471 = vpop.f32.mrb[0].mxu0
  %3472 = vmatprep.mubr.f32.mxu0 0.0
  %3473 = vmatmul.mubr.f32.gmra.mrb[0].mxu0 %v3171
  %v3474 = vpop.f32.mrb[0].mxu0
  %v3475 = vadd.f32 0.0, %v3474
  %v3476 = vpop.f32.mrb[0].mxu0
  %3477 = vmatprep.mubr.f32.mxu0 0.0
  %3478 = vmatmul.mubr.f32.gmra.mrb[0].mxu0 %v3174
  %v3479 = vpop.f32.mrb[0].mxu0
  %v3480 = vadd.f32 0.0, %v3479
  %v3481 = vpop.f32.mrb[0].mxu0
  %3482 = vmatprep.mubr.f32.mxu0 0.0
  %3483 = vmatmul.mubr.f32.gmra.mrb[0].mxu0 %v3177
  %v3484 = vpop.f32.mrb[0].mxu0
  %v3485 = vadd.f32 0.0, %v3484
  %v3486 = vpop.f32.mrb[0].mxu0
  %3487 = vmatprep.mubr.f32.mxu0 0.0
  %3488 = vmatmul.mubr.f32.gmra.mrb[0].mxu0 %v3180
  %v3489 = vpop.f32.mrb[0].mxu0
  %v3490 = vadd.f32 0.0, %v3489
  %v3491 = vpop.f32.mrb[0].mxu0
  %3492 = vmatprep.mubr.f32.mxu0 0.0
  %3493 = vmatmul.mubr.f32.gmra.mrb[0].mxu0 %v3183
  %v3494 = vpop.f32.mrb[0].mxu0
  %v3495 = vadd.f32 0.0, %v3494
  %v3496 = vpop.f32.mrb[0].mxu0
  %3497 = vmatprep.mubr.f32.mxu0 0.0
  %3498 = vmatmul.mubr.f32.gmra.mrb[0].mxu0 %v3186
  %v3499 = vpop.f32.mrb[0].mxu0
  %v3500 = vadd.f32 0.0, %v3499
  %v3501 = vpop.f32.mrb[0].mxu0
  %3502 = vmatprep.mubr.f32.mxu0 0.0
  %3503 = vmatmul.mubr.f32.gmra.mrb[0].mxu0 %v3189
  %v3504 = vpop.f32.mrb[0].mxu0
  %v3505 = vadd.f32 0.0, %v3504
  %v3506 = vpop.f32.mrb[0].mxu0
  %3507 = vmatprep.mubr.f32.mxu0 0.0
  %3508 = vmatmul.mubr.f32.gmra.mrb[0].mxu0 %v3192
  %v3509 = vpop.f32.mrb[0].mxu0
  %v3510 = vadd.f32 0.0, %v3509
  %v3511 = vpop.f32.mrb[0].mxu0
  %3512 = vmatprep.mubr.f32.mxu0 0.0
  %3513 = vmatmul.mubr.f32.gmra.mrb[0].mxu0 %v3195
  %v3514 = vpop.f32.mrb[0].mxu0
  %v3515 = vadd.f32 0.0, %v3514
  %v3516 = vpop.f32.mrb[0].mxu0
  %3517 = vmatprep.mubr.f32.mxu0 0.0
  %3518 = vmatmul.mubr.f32.gmra.mrb[0].mxu0 %v3198
  %v3519 = vpop.f32.mrb[0].mxu0
  %v3520 = vadd.f32 0.0, %v3519
  %v3521 = vpop.f32.mrb[0].mxu0
  %3522 = vmatprep.mubr.f32.mxu0 0.0
  %3523 = vmatmul.mubr.f32.gmra.mrb[0].mxu0 %v3201
  %v3524 = vpop.f32.mrb[0].mxu0
  %v3525 = vadd.f32 0.0, %v3524
  %v3526 = vpop.f32.mrb[0].mxu0
  %3527 = vmatprep.mubr.f32.mxu0 0.0
  %3528 = vmatmul.mubr.f32.gmra.mrb[0].mxu0 %v3204
  %v3529 = vpop.f32.mrb[0].mxu0
  %v3530 = vadd.f32 0.0, %v3529
  %v3531 = vpop.f32.mrb[0].mxu0
  %3532 = vmatprep.mubr.f32.mxu0 0.0
  %3533 = vmatmul.mubr.f32.gmra.mrb[0].mxu0 %v3207
  %v3534 = vpop.f32.mrb[0].mxu0
  %v3535 = vadd.f32 0.0, %v3534
  %v3536 = vpop.f32.mrb[0].mxu0
  %3537 = vmatprep.mubr.f32.mxu0 0.0
  %3538 = vmatmul.mubr.f32.gmra.mrb[0].mxu0 %v3210
  %v3539 = vpop.f32.mrb[0].mxu0
  %v3540 = vadd.f32 0.0, %v3539
  %v3541 = vpop.f32.mrb[0].mxu0
  %3542 = vmatprep.mubr.f32.mxu0 0.0
  %3543 = vmatmul.mubr.f32.gmra.mrb[0].mxu0 %v3213
  %v3544 = vpop.f32.mrb[0].mxu0
  %v3545 = vadd.f32 0.0, %v3544
  %v3546 = vpop.f32.mrb[0].mxu0
  %3547 = vmatprep.mubr.f32.mxu0 0.0
  %3548 = vmatmul.mubr.f32.gmra.mrb[0].mxu0 %v3216
  %v3549 = vpop.f32.mrb[0].mxu0
  %v3550 = vadd.f32 0.0, %v3549
  %v3551 = vpop.f32.mrb[0].mxu0
  %3552 = vmatprep.mubr.f32.mxu0 0.0
  %3553 = vmatmul.mubr.f32.gmra.mrb[0].mxu0 %v3219
  %v3554 = vpop.f32.mrb[0].mxu0
  %v3555 = vadd.f32 0.0, %v3554
  %v3556 = vpop.f32.mrb[0].mxu0
  %3557 = vmatprep.mubr.f32.mxu0 0.0
  %3558 = vmatmul.mubr.f32.gmra.mrb[0].mxu0 %v3222
  %v3559 = vpop.f32.mrb[0].mxu0
  %v3560 = vadd.f32 0.0, %v3559
  %v3561 = vpop.f32.mrb[0].mxu0
  %3562 = vmatprep.mubr.f32.mxu0 0.0
  %3563 = vmatmul.mubr.f32.gmra.mrb[0].mxu0 %v3225
  %v3564 = vpop.f32.mrb[0].mxu0
  %v3565 = vadd.f32 0.0, %v3564
  %v3566 = vpop.f32.mrb[0].mxu0
  %3567 = vmatprep.mubr.f32.mxu0 0.0
  %3568 = vmatmul.mubr.f32.gmra.mrb[0].mxu0 %v3228
  %v3569 = vpop.f32.mrb[0].mxu0
  %v3570 = vadd.f32 0.0, %v3569
  %v3571 = vpop.f32.mrb[0].mxu0
  %3572 = vmatprep.mubr.f32.mxu0 0.0
  %3573 = vmatmul.mubr.f32.gmra.mrb[0].mxu0 %v3231
  %v3574 = vpop.f32.mrb[0].mxu0
  %v3575 = vadd.f32 0.0, %v3574
  %v3576 = vpop.f32.mrb[0].mxu0
  %3577 = vmatprep.mubr.f32.mxu0 0.0
  %3578 = vmatmul.mubr.f32.gmra.mrb[0].mxu0 %v3234
  %v3579 = vpop.f32.mrb[0].mxu0
  %v3580 = vadd.f32 0.0, %v3579
  %v3581 = vpop.f32.mrb[0].mxu0
  %3582 = vmatprep.mubr.f32.mxu0 0.0
  %3583 = vmatmul.mubr.f32.gmra.mrb[0].mxu0 %v3237
  %v3584 = vpop.f32.mrb[0].mxu0
  %v3585 = vadd.f32 0.0, %v3584
  %v3586 = vpop.f32.mrb[0].mxu0
  %3587 = vmatprep.mubr.f32.mxu0 0.0
  %3588 = vmatmul.mubr.f32.gmra.mrb[0].mxu0 %v3240
  %v3589 = vpop.f32.mrb[0].mxu0
  %v3590 = vadd.f32 0.0, %v3589
  %v3591 = vpop.f32.mrb[0].mxu0
  %3592 = vmatprep.mubr.f32.mxu0 0.0
  %3593 = vmatmul.mubr.f32.gmra.mrb[0].mxu0 %v3243
  %v3594 = vpop.f32.mrb[0].mxu0
  %v3595 = vadd.f32 0.0, %v3594
  %v3596 = vpop.f32.mrb[0].mxu0
  %3597 = vmatprep.mubr.f32.mxu0 0.0
  %3598 = vmatmul.mubr.f32.gmra.mrb[0].mxu0 %v3246
  %v3599 = vpop.f32.mrb[0].mxu0
  %v3600 = vadd.f32 0.0, %v3599
  %v3601 = vpop.f32.mrb[0].mxu0
  %3602 = vmatprep.mubr.f32.mxu0 0.0
  %3603 = vmatmul.mubr.f32.gmra.mrb[0].mxu0 %v3249
  %v3604 = vpop.f32.mrb[0].mxu0
  %v3605 = vadd.f32 0.0, %v3604
  %v3606 = vpop.f32.mrb[0].mxu0
  %3607 = vmatprep.mubr.f32.mxu0 0.0
  %3608 = vmatmul.mubr.f32.gmra.mrb[0].mxu0 %v3252
  %v3609 = vpop.f32.mrb[0].mxu0
  %v3610 = vadd.f32 0.0, %v3609
  %v3611 = vpop.f32.mrb[0].mxu0
  %3612 = vmatprep.mubr.f32.mxu0 0.0
  %3613 = vmatmul.mubr.f32.gmra.mrb[0].mxu0 %v3255
  %v3614 = vpop.f32.mrb[0].mxu0
  %v3615 = vadd.f32 0.0, %v3614
  %v3616 = vpop.f32.mrb[0].mxu0
  %3617 = vmatprep.mubr.f32.mxu0 0.0
  %3618 = vmatmul.mubr.f32.gmra.mrb[0].mxu0 %v3258
  %v3619 = vpop.f32.mrb[0].mxu0
  %v3620 = vadd.f32 0.0, %v3619
  %v3621 = vpop.f32.mrb[0].mxu0
  %3622 = vmatprep.mubr.f32.mxu0 0.0
  %3623 = vmatmul.mubr.f32.gmra.mrb[0].mxu0 %v3261
  %v3624 = vpop.f32.mrb[0].mxu0
  %v3625 = vadd.f32 0.0, %v3624
  %v3626 = vpop.f32.mrb[0].mxu0
  %3627 = vdwg.mxu0
  %v3628 = vld [vmem:[%s17] sm:$0xff]
  %v3629 = vld [vmem:[%s17 + $0x8] sm:$0xff]
  %v3630 = vld [vmem:[%s17 + $0x10] sm:$0xff]
  %v3631 = vld [vmem:[%s17 + $0x18] sm:$0xff]
  %v3632 = vld [vmem:[%s17 + $0x20] sm:$0xff]
  %v3633 = vld [vmem:[%s17 + $0x28] sm:$0xff]
  %v3634 = vld [vmem:[%s17 + $0x30] sm:$0xff]
  %v3635 = vld [vmem:[%s17 + $0x38] sm:$0xff]
  %v3636 = vld [vmem:[%s17 + $0x40] sm:$0xff]
  %v3637 = vld [vmem:[%s17 + $0x48] sm:$0xff]
  %v3638 = vld [vmem:[%s17 + $0x50] sm:$0xf]
  %s3639 = scalar_lea.vmem %s17, 88
  %v3640 = vld [vmem:[%s3639] sm:$0xff]
  %v3641 = vld [vmem:[%s3639 + $0x8] sm:$0xff]
  %v3642 = vld [vmem:[%s3639 + $0x10] sm:$0xff]
  %v3643 = vld [vmem:[%s3639 + $0x18] sm:$0xff]
  %v3644 = vld [vmem:[%s3639 + $0x20] sm:$0xff]
  %v3645 = vld [vmem:[%s3639 + $0x28] sm:$0xff]
  %v3646 = vld [vmem:[%s3639 + $0x30] sm:$0xff]
  %v3647 = vld [vmem:[%s3639 + $0x38] sm:$0xff]
  %v3648 = vld [vmem:[%s3639 + $0x40] sm:$0xff]
  %v3649 = vld [vmem:[%s3639 + $0x48] sm:$0xff]
  %v3650 = vld [vmem:[%s3639 + $0x50] sm:$0xf]
  %v3652 = vsel %vm1233, %v3390, 0
  %v3655 = vsel %vm1233, %v3395, 0
  %v3658 = vsel %vm1233, %v3400, 0
  %v3661 = vsel %vm1233, %v3405, 0
  %v3664 = vsel %vm1233, %v3410, 0
  %v3667 = vsel %vm1233, %v3415, 0
  %v3670 = vsel %vm1233, %v3420, 0
  %v3673 = vsel %vm1233, %v3425, 0
  %v3676 = vsel %vm1233, %v3430, 0
  %v3679 = vsel %vm1233, %v3435, 0
  %v3682 = vsel %vm1233, %v3440, 0
  %v3685 = vsel %vm1233, %v3445, 0
  %v3688 = vsel %vm1243, %v3650, 0
  %3690 = vmatprep.subr.mxu0 0.0
  %3691 = vmatpush1.msra.mxu0 %v3640
  %3692 = vmatprep.subr.mxu0 0.0
  %3693 = vmatpush1.msra.mxu0 %v3641
  %3694 = vmatprep.subr.mxu0 0.0
  %3695 = vmatpush1.msra.mxu0 %v3642
  %3696 = vmatprep.subr.mxu0 0.0
  %3697 = vmatpush1.msra.mxu0 %v3643
  %3698 = vmatprep.subr.mxu0 0.0
  %3699 = vmatpush1.msra.mxu0 %v3644
  %3700 = vmatprep.subr.mxu0 0.0
  %3701 = vmatpush1.msra.mxu0 %v3645
  %3702 = vmatprep.subr.mxu0 0.0
  %3703 = vmatpush1.msra.mxu0 %v3646
  %3704 = vmatprep.subr.mxu0 0.0
  %3705 = vmatpush1.msra.mxu0 %v3647
  %3706 = vmatprep.subr.mxu0 0.0
  %3707 = vmatpush1.msra.mxu0 %v3648
  %3708 = vmatprep.subr.mxu0 0.0
  %3709 = vmatpush1.msra.mxu0 %v3649
  %3710 = vmatprep.subr.mxu0 0.0
  %3711 = vmatpush1.msra.mxu0 %v3688
  %3712 = vmatprep.subr.mxu0 0.0
  %3713 = vmatpush1.msra.mxu0 0.0
  %3714 = vmatprep.subr.mxu0 0.0
  %3715 = vmatpush1.msra.mxu0 0.0
  %3716 = vmatprep.subr.mxu0 0.0
  %3717 = vmatpush1.msra.mxu0 0.0
  %3718 = vmatprep.subr.mxu0 0.0
  %3719 = vmatpush1.msra.mxu0 0.0
  %3720 = vmatprep.subr.mxu0 0.0
  %3721 = vmatpush1.msra.mxu0 0.0
  %3722 = vmatprep.subr.mxu0 0.0
  %3723 = vmatpush1.msra.mxu0 0.0
  %3724 = vmatprep.subr.mxu0 0.0
  %3725 = vmatpush1.msra.mxu0 0.0
  %3726 = vmatprep.subr.mxu0 0.0
  %3727 = vmatpush1.msra.mxu0 0.0
  %3728 = vmatprep.subr.mxu0 0.0
  %3729 = vmatpush1.msra.mxu0 0.0
  %3730 = vmatprep.subr.mxu0 0.0
  %3731 = vmatpush1.msra.mxu0 0.0
  %3732 = vmatprep.subr.mxu0 0.0
  %3733 = vmatpush1.msra.mxu0 0.0
  %3734 = vmatprep.subr.mxu0 0.0
  %3735 = vmatpush1.msra.mxu0 0.0
  %3736 = vmatprep.subr.mxu0 0.0
  %3737 = vmatpush1.msra.mxu0 0.0
  %3738 = vmatprep.subr.mxu0 0.0
  %3739 = vmatpush1.msra.mxu0 0.0
  %3740 = vmatprep.subr.mxu0 0.0
  %3741 = vmatpush1.msra.mxu0 0.0
  %3742 = vmatprep.subr.mxu0 0.0
  %3743 = vmatpush1.msra.mxu0 0.0
  %3744 = vmatprep.subr.mxu0 0.0
  %3745 = vmatpush1.msra.mxu0 0.0
  %3746 = vmatprep.subr.mxu0 0.0
  %3747 = vmatpush1.msra.mxu0 0.0
  %3748 = vmatprep.subr.mxu0 0.0
  %3749 = vmatpush1.msra.mxu0 0.0
  %3750 = vmatprep.subr.mxu0 0.0
  %3751 = vmatpush1.msra.mxu0 0.0
  %3752 = vmatprep.subr.mxu0 0.0
  %3753 = vmatpush1.msra.mxu0 0.0
  %3754 = vmatprep.mubr.f32.mxu0 0.0
  %3755 = vmatmul.mubr.f32.gmra.mrb[0].mxu0 %v3652
  %v3756 = vpop.f32.mrb[0].mxu0
  %v3757 = vadd.f32 0.0, %v3756
  %v3758 = vpop.f32.mrb[0].mxu0
  %3759 = vmatprep.mubr.f32.mxu0 0.0
  %3760 = vmatmul.mubr.f32.gmra.mrb[0].mxu0 %v3655
  %v3761 = vpop.f32.mrb[0].mxu0
  %v3762 = vadd.f32 0.0, %v3761
  %v3763 = vpop.f32.mrb[0].mxu0
  %3764 = vmatprep.mubr.f32.mxu0 0.0
  %3765 = vmatmul.mubr.f32.gmra.mrb[0].mxu0 %v3658
  %v3766 = vpop.f32.mrb[0].mxu0
  %v3767 = vadd.f32 0.0, %v3766
  %v3768 = vpop.f32.mrb[0].mxu0
  %3769 = vmatprep.mubr.f32.mxu0 0.0
  %3770 = vmatmul.mubr.f32.gmra.mrb[0].mxu0 %v3661
  %v3771 = vpop.f32.mrb[0].mxu0
  %v3772 = vadd.f32 0.0, %v3771
  %v3773 = vpop.f32.mrb[0].mxu0
  %3774 = vmatprep.mubr.f32.mxu0 0.0
  %3775 = vmatmul.mubr.f32.gmra.mrb[0].mxu0 %v3664
  %v3776 = vpop.f32.mrb[0].mxu0
  %v3777 = vadd.f32 0.0, %v3776
  %v3778 = vpop.f32.mrb[0].mxu0
  %3779 = vmatprep.mubr.f32.mxu0 0.0
  %3780 = vmatmul.mubr.f32.gmra.mrb[0].mxu0 %v3667
  %v3781 = vpop.f32.mrb[0].mxu0
  %v3782 = vadd.f32 0.0, %v3781
  %v3783 = vpop.f32.mrb[0].mxu0
  %3784 = vmatprep.mubr.f32.mxu0 0.0
  %3785 = vmatmul.mubr.f32.gmra.mrb[0].mxu0 %v3670
  %v3786 = vpop.f32.mrb[0].mxu0
  %v3787 = vadd.f32 0.0, %v3786
  %v3788 = vpop.f32.mrb[0].mxu0
  %3789 = vmatprep.mubr.f32.mxu0 0.0
  %3790 = vmatmul.mubr.f32.gmra.mrb[0].mxu0 %v3673
  %v3791 = vpop.f32.mrb[0].mxu0
  %v3792 = vadd.f32 0.0, %v3791
  %v3793 = vpop.f32.mrb[0].mxu0
  %3794 = vmatprep.mubr.f32.mxu0 0.0
  %3795 = vmatmul.mubr.f32.gmra.mrb[0].mxu0 %v3676
  %v3796 = vpop.f32.mrb[0].mxu0
  %v3797 = vadd.f32 0.0, %v3796
  %v3798 = vpop.f32.mrb[0].mxu0
  %3799 = vmatprep.mubr.f32.mxu0 0.0
  %3800 = vmatmul.mubr.f32.gmra.mrb[0].mxu0 %v3679
  %v3801 = vpop.f32.mrb[0].mxu0
  %v3802 = vadd.f32 0.0, %v3801
  %v3803 = vpop.f32.mrb[0].mxu0
  %3804 = vmatprep.mubr.f32.mxu0 0.0
  %3805 = vmatmul.mubr.f32.gmra.mrb[0].mxu0 %v3682
  %v3806 = vpop.f32.mrb[0].mxu0
  %v3807 = vadd.f32 0.0, %v3806
  %v3808 = vpop.f32.mrb[0].mxu0
  %3809 = vmatprep.mubr.f32.mxu0 0.0
  %3810 = vmatmul.mubr.f32.gmra.mrb[0].mxu0 %v3685
  %v3811 = vpop.f32.mrb[0].mxu0
  %v3812 = vadd.f32 0.0, %v3811
  %v3813 = vpop.f32.mrb[0].mxu0
  %3814 = vdwg.mxu0
  %v3816 = vsel %vm1233, %v3330, 0
  %v3819 = vsel %vm1233, %v3335, 0
  %v3822 = vsel %vm1233, %v3340, 0
  %v3825 = vsel %vm1233, %v3345, 0
  %v3828 = vsel %vm1233, %v3350, 0
  %v3831 = vsel %vm1233, %v3355, 0
  %v3834 = vsel %vm1233, %v3360, 0
  %v3837 = vsel %vm1233, %v3365, 0
  %v3840 = vsel %vm1233, %v3370, 0
  %v3843 = vsel %vm1233, %v3375, 0
  %v3846 = vsel %vm1233, %v3380, 0
  %v3849 = vsel %vm1233, %v3385, 0
  %v3852 = vsel %vm1243, %v3638, 0
  %3854 = vmatprep.subr.mxu0 0.0
  %3855 = vmatpush1.msra.mxu0 %v3628
  %3856 = vmatprep.subr.mxu0 0.0
  %3857 = vmatpush1.msra.mxu0 %v3629
  %3858 = vmatprep.subr.mxu0 0.0
  %3859 = vmatpush1.msra.mxu0 %v3630
  %3860 = vmatprep.subr.mxu0 0.0
  %3861 = vmatpush1.msra.mxu0 %v3631
  %3862 = vmatprep.subr.mxu0 0.0
  %3863 = vmatpush1.msra.mxu0 %v3632
  %3864 = vmatprep.subr.mxu0 0.0
  %3865 = vmatpush1.msra.mxu0 %v3633
  %3866 = vmatprep.subr.mxu0 0.0
  %3867 = vmatpush1.msra.mxu0 %v3634
  %3868 = vmatprep.subr.mxu0 0.0
  %3869 = vmatpush1.msra.mxu0 %v3635
  %3870 = vmatprep.subr.mxu0 0.0
  %3871 = vmatpush1.msra.mxu0 %v3636
  %3872 = vmatprep.subr.mxu0 0.0
  %3873 = vmatpush1.msra.mxu0 %v3637
  %3874 = vmatprep.subr.mxu0 0.0
  %3875 = vmatpush1.msra.mxu0 %v3852
  %3876 = vmatprep.subr.mxu0 0.0
  %3877 = vmatpush1.msra.mxu0 0.0
  %3878 = vmatprep.subr.mxu0 0.0
  %3879 = vmatpush1.msra.mxu0 0.0
  %3880 = vmatprep.subr.mxu0 0.0
  %3881 = vmatpush1.msra.mxu0 0.0
  %3882 = vmatprep.subr.mxu0 0.0
  %3883 = vmatpush1.msra.mxu0 0.0
  %3884 = vmatprep.subr.mxu0 0.0
  %3885 = vmatpush1.msra.mxu0 0.0
  %3886 = vmatprep.subr.mxu0 0.0
  %3887 = vmatpush1.msra.mxu0 0.0
  %3888 = vmatprep.subr.mxu0 0.0
  %3889 = vmatpush1.msra.mxu0 0.0
  %3890 = vmatprep.subr.mxu0 0.0
  %3891 = vmatpush1.msra.mxu0 0.0
  %3892 = vmatprep.subr.mxu0 0.0
  %3893 = vmatpush1.msra.mxu0 0.0
  %3894 = vmatprep.subr.mxu0 0.0
  %3895 = vmatpush1.msra.mxu0 0.0
  %3896 = vmatprep.subr.mxu0 0.0
  %3897 = vmatpush1.msra.mxu0 0.0
  %3898 = vmatprep.subr.mxu0 0.0
  %3899 = vmatpush1.msra.mxu0 0.0
  %3900 = vmatprep.subr.mxu0 0.0
  %3901 = vmatpush1.msra.mxu0 0.0
  %3902 = vmatprep.subr.mxu0 0.0
  %3903 = vmatpush1.msra.mxu0 0.0
  %3904 = vmatprep.subr.mxu0 0.0
  %3905 = vmatpush1.msra.mxu0 0.0
  %3906 = vmatprep.subr.mxu0 0.0
  %3907 = vmatpush1.msra.mxu0 0.0
  %3908 = vmatprep.subr.mxu0 0.0
  %3909 = vmatpush1.msra.mxu0 0.0
  %3910 = vmatprep.subr.mxu0 0.0
  %3911 = vmatpush1.msra.mxu0 0.0
  %3912 = vmatprep.subr.mxu0 0.0
  %3913 = vmatpush1.msra.mxu0 0.0
  %3914 = vmatprep.subr.mxu0 0.0
  %3915 = vmatpush1.msra.mxu0 0.0
  %3916 = vmatprep.subr.mxu0 0.0
  %3917 = vmatpush1.msra.mxu0 0.0
  %3918 = vmatprep.mubr.f32.mxu0 0.0
  %3919 = vmatmul.mubr.f32.gmra.mrb[0].mxu0 %v3816
  %v3920 = vpop.f32.mrb[0].mxu0
  %v3921 = vadd.f32 %v3757, %v3920
  %v3922 = vpop.f32.mrb[0].mxu0
  %3923 = vmatprep.mubr.f32.mxu0 0.0
  %3924 = vmatmul.mubr.f32.gmra.mrb[0].mxu0 %v3819
  %v3925 = vpop.f32.mrb[0].mxu0
  %v3926 = vadd.f32 %v3762, %v3925
  %v3927 = vpop.f32.mrb[0].mxu0
  %3928 = vmatprep.mubr.f32.mxu0 0.0
  %3929 = vmatmul.mubr.f32.gmra.mrb[0].mxu0 %v3822
  %v3930 = vpop.f32.mrb[0].mxu0
  %v3931 = vadd.f32 %v3767, %v3930
  %v3932 = vpop.f32.mrb[0].mxu0
  %3933 = vmatprep.mubr.f32.mxu0 0.0
  %3934 = vmatmul.mubr.f32.gmra.mrb[0].mxu0 %v3825
  %v3935 = vpop.f32.mrb[0].mxu0
  %v3936 = vadd.f32 %v3772, %v3935
  %v3937 = vpop.f32.mrb[0].mxu0
  %3938 = vmatprep.mubr.f32.mxu0 0.0
  %3939 = vmatmul.mubr.f32.gmra.mrb[0].mxu0 %v3828
  %v3940 = vpop.f32.mrb[0].mxu0
  %v3941 = vadd.f32 %v3777, %v3940
  %v3942 = vpop.f32.mrb[0].mxu0
  %3943 = vmatprep.mubr.f32.mxu0 0.0
  %3944 = vmatmul.mubr.f32.gmra.mrb[0].mxu0 %v3831
  %v3945 = vpop.f32.mrb[0].mxu0
  %v3946 = vadd.f32 %v3782, %v3945
  %v3947 = vpop.f32.mrb[0].mxu0
  %3948 = vmatprep.mubr.f32.mxu0 0.0
  %3949 = vmatmul.mubr.f32.gmra.mrb[0].mxu0 %v3834
  %v3950 = vpop.f32.mrb[0].mxu0
  %v3951 = vadd.f32 %v3787, %v3950
  %v3952 = vpop.f32.mrb[0].mxu0
  %3953 = vmatprep.mubr.f32.mxu0 0.0
  %3954 = vmatmul.mubr.f32.gmra.mrb[0].mxu0 %v3837
  %v3955 = vpop.f32.mrb[0].mxu0
  %v3956 = vadd.f32 %v3792, %v3955
  %v3957 = vpop.f32.mrb[0].mxu0
  %3958 = vmatprep.mubr.f32.mxu0 0.0
  %3959 = vmatmul.mubr.f32.gmra.mrb[0].mxu0 %v3840
  %v3960 = vpop.f32.mrb[0].mxu0
  %v3961 = vadd.f32 %v3797, %v3960
  %v3962 = vpop.f32.mrb[0].mxu0
  %3963 = vmatprep.mubr.f32.mxu0 0.0
  %3964 = vmatmul.mubr.f32.gmra.mrb[0].mxu0 %v3843
  %v3965 = vpop.f32.mrb[0].mxu0
  %v3966 = vadd.f32 %v3802, %v3965
  %v3967 = vpop.f32.mrb[0].mxu0
  %3968 = vmatprep.mubr.f32.mxu0 0.0
  %3969 = vmatmul.mubr.f32.gmra.mrb[0].mxu0 %v3846
  %v3970 = vpop.f32.mrb[0].mxu0
  %v3971 = vadd.f32 %v3807, %v3970
  %v3972 = vpop.f32.mrb[0].mxu0
  %3973 = vmatprep.mubr.f32.mxu0 0.0
  %3974 = vmatmul.mubr.f32.gmra.mrb[0].mxu0 %v3849
  %v3975 = vpop.f32.mrb[0].mxu0
  %v3976 = vadd.f32 %v3812, %v3975
  %v3977 = vpop.f32.mrb[0].mxu0
  %3978 = vdwg.mxu0
  %s3979 = scalar_lea.vmem %s17, 176
  %v3980 = vld [vmem:[%s3979] sm:$0xff]
  %v3981 = vld [vmem:[%s3979 + $0x8] sm:$0xff]
  %v3982 = vld [vmem:[%s3979 + $0x10] sm:$0xff]
  %v3983 = vld [vmem:[%s3979 + $0x18] sm:$0xff]
  %v3984 = vld [vmem:[%s3979 + $0x20] sm:$0xff]
  %v3985 = vld [vmem:[%s3979 + $0x28] sm:$0xff]
  %v3986 = vld [vmem:[%s3979 + $0x30] sm:$0xff]
  %v3987 = vld [vmem:[%s3979 + $0x38] sm:$0xff]
  %v3988 = vld [vmem:[%s3979 + $0x40] sm:$0xff]
  %v3989 = vld [vmem:[%s3979 + $0x48] sm:$0xff]
  %v3990 = vld [vmem:[%s3979 + $0x50] sm:$0xf]
  %v3992 = vsel %vm1233, %v3450, 0
  %v3995 = vsel %vm1233, %v3455, 0
  %v3998 = vsel %vm1233, %v3460, 0
  %v4001 = vsel %vm1233, %v3465, 0
  %v4004 = vsel %vm1233, %v3470, 0
  %v4007 = vsel %vm1233, %v3475, 0
  %v4010 = vsel %vm1233, %v3480, 0
  %v4013 = vsel %vm1233, %v3485, 0
  %v4016 = vsel %vm1233, %v3490, 0
  %v4019 = vsel %vm1233, %v3495, 0
  %v4022 = vsel %vm1233, %v3500, 0
  %v4025 = vsel %vm1233, %v3505, 0
  %v4028 = vsel %vm1243, %v3990, 0
  %4030 = vmatprep.subr.mxu0 0.0
  %4031 = vmatpush1.msra.mxu0 %v3980
  %4032 = vmatprep.subr.mxu0 0.0
  %4033 = vmatpush1.msra.mxu0 %v3981
  %4034 = vmatprep.subr.mxu0 0.0
  %4035 = vmatpush1.msra.mxu0 %v3982
  %4036 = vmatprep.subr.mxu0 0.0
  %4037 = vmatpush1.msra.mxu0 %v3983
  %4038 = vmatprep.subr.mxu0 0.0
  %4039 = vmatpush1.msra.mxu0 %v3984
  %4040 = vmatprep.subr.mxu0 0.0
  %4041 = vmatpush1.msra.mxu0 %v3985
  %4042 = vmatprep.subr.mxu0 0.0
  %4043 = vmatpush1.msra.mxu0 %v3986
  %4044 = vmatprep.subr.mxu0 0.0
  %4045 = vmatpush1.msra.mxu0 %v3987
  %4046 = vmatprep.subr.mxu0 0.0
  %4047 = vmatpush1.msra.mxu0 %v3988
  %4048 = vmatprep.subr.mxu0 0.0
  %4049 = vmatpush1.msra.mxu0 %v3989
  %4050 = vmatprep.subr.mxu0 0.0
  %4051 = vmatpush1.msra.mxu0 %v4028
  %4052 = vmatprep.subr.mxu0 0.0
  %4053 = vmatpush1.msra.mxu0 0.0
  %4054 = vmatprep.subr.mxu0 0.0
  %4055 = vmatpush1.msra.mxu0 0.0
  %4056 = vmatprep.subr.mxu0 0.0
  %4057 = vmatpush1.msra.mxu0 0.0
  %4058 = vmatprep.subr.mxu0 0.0
  %4059 = vmatpush1.msra.mxu0 0.0
  %4060 = vmatprep.subr.mxu0 0.0
  %4061 = vmatpush1.msra.mxu0 0.0
  %4062 = vmatprep.subr.mxu0 0.0
  %4063 = vmatpush1.msra.mxu0 0.0
  %4064 = vmatprep.subr.mxu0 0.0
  %4065 = vmatpush1.msra.mxu0 0.0
  %4066 = vmatprep.subr.mxu0 0.0
  %4067 = vmatpush1.msra.mxu0 0.0
  %4068 = vmatprep.subr.mxu0 0.0
  %4069 = vmatpush1.msra.mxu0 0.0
  %4070 = vmatprep.subr.mxu0 0.0
  %4071 = vmatpush1.msra.mxu0 0.0
  %4072 = vmatprep.subr.mxu0 0.0
  %4073 = vmatpush1.msra.mxu0 0.0
  %4074 = vmatprep.subr.mxu0 0.0
  %4075 = vmatpush1.msra.mxu0 0.0
  %4076 = vmatprep.subr.mxu0 0.0
  %4077 = vmatpush1.msra.mxu0 0.0
  %4078 = vmatprep.subr.mxu0 0.0
  %4079 = vmatpush1.msra.mxu0 0.0
  %4080 = vmatprep.subr.mxu0 0.0
  %4081 = vmatpush1.msra.mxu0 0.0
  %4082 = vmatprep.subr.mxu0 0.0
  %4083 = vmatpush1.msra.mxu0 0.0
  %4084 = vmatprep.subr.mxu0 0.0
  %4085 = vmatpush1.msra.mxu0 0.0
  %4086 = vmatprep.subr.mxu0 0.0
  %4087 = vmatpush1.msra.mxu0 0.0
  %4088 = vmatprep.subr.mxu0 0.0
  %4089 = vmatpush1.msra.mxu0 0.0
  %4090 = vmatprep.subr.mxu0 0.0
  %4091 = vmatpush1.msra.mxu0 0.0
  %4092 = vmatprep.subr.mxu0 0.0
  %4093 = vmatpush1.msra.mxu0 0.0
  %4094 = vmatprep.mubr.f32.mxu0 0.0
  %4095 = vmatmul.mubr.f32.gmra.mrb[0].mxu0 %v3992
  %v4096 = vpop.f32.mrb[0].mxu0
  %v4097 = vadd.f32 0.0, %v4096
  %v4098 = vpop.f32.mrb[0].mxu0
  %4099 = vmatprep.mubr.f32.mxu0 0.0
  %4100 = vmatmul.mubr.f32.gmra.mrb[0].mxu0 %v3995
  %v4101 = vpop.f32.mrb[0].mxu0
  %v4102 = vadd.f32 0.0, %v4101
  %v4103 = vpop.f32.mrb[0].mxu0
  %4104 = vmatprep.mubr.f32.mxu0 0.0
  %4105 = vmatmul.mubr.f32.gmra.mrb[0].mxu0 %v3998
  %v4106 = vpop.f32.mrb[0].mxu0
  %v4107 = vadd.f32 0.0, %v4106
  %v4108 = vpop.f32.mrb[0].mxu0
  %4109 = vmatprep.mubr.f32.mxu0 0.0
  %4110 = vmatmul.mubr.f32.gmra.mrb[0].mxu0 %v4001
  %v4111 = vpop.f32.mrb[0].mxu0
  %v4112 = vadd.f32 0.0, %v4111
  %v4113 = vpop.f32.mrb[0].mxu0
  %4114 = vmatprep.mubr.f32.mxu0 0.0
  %4115 = vmatmul.mubr.f32.gmra.mrb[0].mxu0 %v4004
  %v4116 = vpop.f32.mrb[0].mxu0
  %v4117 = vadd.f32 0.0, %v4116
  %v4118 = vpop.f32.mrb[0].mxu0
  %4119 = vmatprep.mubr.f32.mxu0 0.0
  %4120 = vmatmul.mubr.f32.gmra.mrb[0].mxu0 %v4007
  %v4121 = vpop.f32.mrb[0].mxu0
  %v4122 = vadd.f32 0.0, %v4121
  %v4123 = vpop.f32.mrb[0].mxu0
  %4124 = vmatprep.mubr.f32.mxu0 0.0
  %4125 = vmatmul.mubr.f32.gmra.mrb[0].mxu0 %v4010
  %v4126 = vpop.f32.mrb[0].mxu0
  %v4127 = vadd.f32 0.0, %v4126
  %v4128 = vpop.f32.mrb[0].mxu0
  %4129 = vmatprep.mubr.f32.mxu0 0.0
  %4130 = vmatmul.mubr.f32.gmra.mrb[0].mxu0 %v4013
  %v4131 = vpop.f32.mrb[0].mxu0
  %v4132 = vadd.f32 0.0, %v4131
  %v4133 = vpop.f32.mrb[0].mxu0
  %4134 = vmatprep.mubr.f32.mxu0 0.0
  %4135 = vmatmul.mubr.f32.gmra.mrb[0].mxu0 %v4016
  %v4136 = vpop.f32.mrb[0].mxu0
  %v4137 = vadd.f32 0.0, %v4136
  %v4138 = vpop.f32.mrb[0].mxu0
  %4139 = vmatprep.mubr.f32.mxu0 0.0
  %4140 = vmatmul.mubr.f32.gmra.mrb[0].mxu0 %v4019
  %v4141 = vpop.f32.mrb[0].mxu0
  %v4142 = vadd.f32 0.0, %v4141
  %v4143 = vpop.f32.mrb[0].mxu0
  %4144 = vmatprep.mubr.f32.mxu0 0.0
  %4145 = vmatmul.mubr.f32.gmra.mrb[0].mxu0 %v4022
  %v4146 = vpop.f32.mrb[0].mxu0
  %v4147 = vadd.f32 0.0, %v4146
  %v4148 = vpop.f32.mrb[0].mxu0
  %4149 = vmatprep.mubr.f32.mxu0 0.0
  %4150 = vmatmul.mubr.f32.gmra.mrb[0].mxu0 %v4025
  %v4151 = vpop.f32.mrb[0].mxu0
  %v4152 = vadd.f32 0.0, %v4151
  %v4153 = vpop.f32.mrb[0].mxu0
  %4154 = vdwg.mxu0
  %v4155 = vadd.f32 %v3921, %v4097
  %v4156 = vadd.f32 %v3926, %v4102
  %v4157 = vadd.f32 %v3931, %v4107
  %v4158 = vadd.f32 %v3936, %v4112
  %v4159 = vadd.f32 %v3941, %v4117
  %v4160 = vadd.f32 %v3946, %v4122
  %v4161 = vadd.f32 %v3951, %v4127
  %v4162 = vadd.f32 %v3956, %v4132
  %v4163 = vadd.f32 %v3961, %v4137
  %v4164 = vadd.f32 %v3966, %v4142
  %v4165 = vadd.f32 %v3971, %v4147
  %v4166 = vadd.f32 %v3976, %v4152
  %s4167 = scalar_lea.vmem %s17, 264
  %v4168 = vld [vmem:[%s4167] sm:$0xff]
  %v4169 = vld [vmem:[%s4167 + $0x8] sm:$0xff]
  %v4170 = vld [vmem:[%s4167 + $0x10] sm:$0xff]
  %v4171 = vld [vmem:[%s4167 + $0x18] sm:$0xff]
  %v4172 = vld [vmem:[%s4167 + $0x20] sm:$0xff]
  %v4173 = vld [vmem:[%s4167 + $0x28] sm:$0xff]
  %v4174 = vld [vmem:[%s4167 + $0x30] sm:$0xff]
  %v4175 = vld [vmem:[%s4167 + $0x38] sm:$0xff]
  %v4176 = vld [vmem:[%s4167 + $0x40] sm:$0xff]
  %v4177 = vld [vmem:[%s4167 + $0x48] sm:$0xff]
  %v4178 = vld [vmem:[%s4167 + $0x50] sm:$0xf]
  %v4180 = vsel %vm1233, %v3510, 0
  %v4183 = vsel %vm1233, %v3515, 0
  %v4186 = vsel %vm1233, %v3520, 0
  %v4189 = vsel %vm1233, %v3525, 0
  %v4192 = vsel %vm1233, %v3530, 0
  %v4195 = vsel %vm1233, %v3535, 0
  %v4198 = vsel %vm1233, %v3540, 0
  %v4201 = vsel %vm1233, %v3545, 0
  %v4204 = vsel %vm1233, %v3550, 0
  %v4207 = vsel %vm1233, %v3555, 0
  %v4210 = vsel %vm1233, %v3560, 0
  %v4213 = vsel %vm1233, %v3565, 0
  %v4216 = vsel %vm1243, %v4178, 0
  %4218 = vmatprep.subr.mxu0 0.0
  %4219 = vmatpush1.msra.mxu0 %v4168
  %4220 = vmatprep.subr.mxu0 0.0
  %4221 = vmatpush1.msra.mxu0 %v4169
  %4222 = vmatprep.subr.mxu0 0.0
  %4223 = vmatpush1.msra.mxu0 %v4170
  %4224 = vmatprep.subr.mxu0 0.0
  %4225 = vmatpush1.msra.mxu0 %v4171
  %4226 = vmatprep.subr.mxu0 0.0
  %4227 = vmatpush1.msra.mxu0 %v4172
  %4228 = vmatprep.subr.mxu0 0.0
  %4229 = vmatpush1.msra.mxu0 %v4173
  %4230 = vmatprep.subr.mxu0 0.0
  %4231 = vmatpush1.msra.mxu0 %v4174
  %4232 = vmatprep.subr.mxu0 0.0
  %4233 = vmatpush1.msra.mxu0 %v4175
  %4234 = vmatprep.subr.mxu0 0.0
  %4235 = vmatpush1.msra.mxu0 %v4176
  %4236 = vmatprep.subr.mxu0 0.0
  %4237 = vmatpush1.msra.mxu0 %v4177
  %4238 = vmatprep.subr.mxu0 0.0
  %4239 = vmatpush1.msra.mxu0 %v4216
  %4240 = vmatprep.subr.mxu0 0.0
  %4241 = vmatpush1.msra.mxu0 0.0
  %4242 = vmatprep.subr.mxu0 0.0
  %4243 = vmatpush1.msra.mxu0 0.0
  %4244 = vmatprep.subr.mxu0 0.0
  %4245 = vmatpush1.msra.mxu0 0.0
  %4246 = vmatprep.subr.mxu0 0.0
  %4247 = vmatpush1.msra.mxu0 0.0
  %4248 = vmatprep.subr.mxu0 0.0
  %4249 = vmatpush1.msra.mxu0 0.0
  %4250 = vmatprep.subr.mxu0 0.0
  %4251 = vmatpush1.msra.mxu0 0.0
  %4252 = vmatprep.subr.mxu0 0.0
  %4253 = vmatpush1.msra.mxu0 0.0
  %4254 = vmatprep.subr.mxu0 0.0
  %4255 = vmatpush1.msra.mxu0 0.0
  %4256 = vmatprep.subr.mxu0 0.0
  %4257 = vmatpush1.msra.mxu0 0.0
  %4258 = vmatprep.subr.mxu0 0.0
  %4259 = vmatpush1.msra.mxu0 0.0
  %4260 = vmatprep.subr.mxu0 0.0
  %4261 = vmatpush1.msra.mxu0 0.0
  %4262 = vmatprep.subr.mxu0 0.0
  %4263 = vmatpush1.msra.mxu0 0.0
  %4264 = vmatprep.subr.mxu0 0.0
  %4265 = vmatpush1.msra.mxu0 0.0
  %4266 = vmatprep.subr.mxu0 0.0
  %4267 = vmatpush1.msra.mxu0 0.0
  %4268 = vmatprep.subr.mxu0 0.0
  %4269 = vmatpush1.msra.mxu0 0.0
  %4270 = vmatprep.subr.mxu0 0.0
  %4271 = vmatpush1.msra.mxu0 0.0
  %4272 = vmatprep.subr.mxu0 0.0
  %4273 = vmatpush1.msra.mxu0 0.0
  %4274 = vmatprep.subr.mxu0 0.0
  %4275 = vmatpush1.msra.mxu0 0.0
  %4276 = vmatprep.subr.mxu0 0.0
  %4277 = vmatpush1.msra.mxu0 0.0
  %4278 = vmatprep.subr.mxu0 0.0
  %4279 = vmatpush1.msra.mxu0 0.0
  %4280 = vmatprep.subr.mxu0 0.0
  %4281 = vmatpush1.msra.mxu0 0.0
  %4282 = vmatprep.mubr.f32.mxu0 0.0
  %4283 = vmatmul.mubr.f32.gmra.mrb[0].mxu0 %v4180
  %v4284 = vpop.f32.mrb[0].mxu0
  %v4285 = vadd.f32 0.0, %v4284
  %v4286 = vpop.f32.mrb[0].mxu0
  %4287 = vmatprep.mubr.f32.mxu0 0.0
  %4288 = vmatmul.mubr.f32.gmra.mrb[0].mxu0 %v4183
  %v4289 = vpop.f32.mrb[0].mxu0
  %v4290 = vadd.f32 0.0, %v4289
  %v4291 = vpop.f32.mrb[0].mxu0
  %4292 = vmatprep.mubr.f32.mxu0 0.0
  %4293 = vmatmul.mubr.f32.gmra.mrb[0].mxu0 %v4186
  %v4294 = vpop.f32.mrb[0].mxu0
  %v4295 = vadd.f32 0.0, %v4294
  %v4296 = vpop.f32.mrb[0].mxu0
  %4297 = vmatprep.mubr.f32.mxu0 0.0
  %4298 = vmatmul.mubr.f32.gmra.mrb[0].mxu0 %v4189
  %v4299 = vpop.f32.mrb[0].mxu0
  %v4300 = vadd.f32 0.0, %v4299
  %v4301 = vpop.f32.mrb[0].mxu0
  %4302 = vmatprep.mubr.f32.mxu0 0.0
  %4303 = vmatmul.mubr.f32.gmra.mrb[0].mxu0 %v4192
  %v4304 = vpop.f32.mrb[0].mxu0
  %v4305 = vadd.f32 0.0, %v4304
  %v4306 = vpop.f32.mrb[0].mxu0
  %4307 = vmatprep.mubr.f32.mxu0 0.0
  %4308 = vmatmul.mubr.f32.gmra.mrb[0].mxu0 %v4195
  %v4309 = vpop.f32.mrb[0].mxu0
  %v4310 = vadd.f32 0.0, %v4309
  %v4311 = vpop.f32.mrb[0].mxu0
  %4312 = vmatprep.mubr.f32.mxu0 0.0
  %4313 = vmatmul.mubr.f32.gmra.mrb[0].mxu0 %v4198
  %v4314 = vpop.f32.mrb[0].mxu0
  %v4315 = vadd.f32 0.0, %v4314
  %v4316 = vpop.f32.mrb[0].mxu0
  %4317 = vmatprep.mubr.f32.mxu0 0.0
  %4318 = vmatmul.mubr.f32.gmra.mrb[0].mxu0 %v4201
  %v4319 = vpop.f32.mrb[0].mxu0
  %v4320 = vadd.f32 0.0, %v4319
  %v4321 = vpop.f32.mrb[0].mxu0
  %4322 = vmatprep.mubr.f32.mxu0 0.0
  %4323 = vmatmul.mubr.f32.gmra.mrb[0].mxu0 %v4204
  %v4324 = vpop.f32.mrb[0].mxu0
  %v4325 = vadd.f32 0.0, %v4324
  %v4326 = vpop.f32.mrb[0].mxu0
  %4327 = vmatprep.mubr.f32.mxu0 0.0
  %4328 = vmatmul.mubr.f32.gmra.mrb[0].mxu0 %v4207
  %v4329 = vpop.f32.mrb[0].mxu0
  %v4330 = vadd.f32 0.0, %v4329
  %v4331 = vpop.f32.mrb[0].mxu0
  %4332 = vmatprep.mubr.f32.mxu0 0.0
  %4333 = vmatmul.mubr.f32.gmra.mrb[0].mxu0 %v4210
  %v4334 = vpop.f32.mrb[0].mxu0
  %v4335 = vadd.f32 0.0, %v4334
  %v4336 = vpop.f32.mrb[0].mxu0
  %4337 = vmatprep.mubr.f32.mxu0 0.0
  %4338 = vmatmul.mubr.f32.gmra.mrb[0].mxu0 %v4213
  %v4339 = vpop.f32.mrb[0].mxu0
  %v4340 = vadd.f32 0.0, %v4339
  %v4341 = vpop.f32.mrb[0].mxu0
  %4342 = vdwg.mxu0
  %v4343 = vadd.f32 %v4155, %v4285
  %v4344 = vadd.f32 %v4156, %v4290
  %v4345 = vadd.f32 %v4157, %v4295
  %v4346 = vadd.f32 %v4158, %v4300
  %v4347 = vadd.f32 %v4159, %v4305
  %v4348 = vadd.f32 %v4160, %v4310
  %v4349 = vadd.f32 %v4161, %v4315
  %v4350 = vadd.f32 %v4162, %v4320
  %v4351 = vadd.f32 %v4163, %v4325
  %v4352 = vadd.f32 %v4164, %v4330
  %v4353 = vadd.f32 %v4165, %v4335
  %v4354 = vadd.f32 %v4166, %v4340
  %s4355 = scalar_lea.vmem %s17, 352
  %v4356 = vld [vmem:[%s4355] sm:$0xff]
  %v4357 = vld [vmem:[%s4355 + $0x8] sm:$0xff]
  %v4358 = vld [vmem:[%s4355 + $0x10] sm:$0xff]
  %v4359 = vld [vmem:[%s4355 + $0x18] sm:$0xff]
  %v4360 = vld [vmem:[%s4355 + $0x20] sm:$0xff]
  %v4361 = vld [vmem:[%s4355 + $0x28] sm:$0xff]
  %v4362 = vld [vmem:[%s4355 + $0x30] sm:$0xff]
  %v4363 = vld [vmem:[%s4355 + $0x38] sm:$0xff]
  %v4364 = vld [vmem:[%s4355 + $0x40] sm:$0xff]
  %v4365 = vld [vmem:[%s4355 + $0x48] sm:$0xff]
  %v4366 = vld [vmem:[%s4355 + $0x50] sm:$0xf]
  %v4368 = vsel %vm1233, %v3570, 0
  %v4371 = vsel %vm1233, %v3575, 0
  %v4374 = vsel %vm1233, %v3580, 0
  %v4377 = vsel %vm1233, %v3585, 0
  %v4380 = vsel %vm1233, %v3590, 0
  %v4383 = vsel %vm1233, %v3595, 0
  %v4386 = vsel %vm1233, %v3600, 0
  %v4389 = vsel %vm1233, %v3605, 0
  %v4392 = vsel %vm1233, %v3610, 0
  %v4395 = vsel %vm1233, %v3615, 0
  %v4398 = vsel %vm1233, %v3620, 0
  %v4401 = vsel %vm1233, %v3625, 0
  %v4404 = vsel %vm1243, %v4366, 0
  %4406 = vmatprep.subr.mxu0 0.0
  %4407 = vmatpush1.msra.mxu0 %v4356
  %4408 = vmatprep.subr.mxu0 0.0
  %4409 = vmatpush1.msra.mxu0 %v4357
  %4410 = vmatprep.subr.mxu0 0.0
  %4411 = vmatpush1.msra.mxu0 %v4358
  %4412 = vmatprep.subr.mxu0 0.0
  %4413 = vmatpush1.msra.mxu0 %v4359
  %4414 = vmatprep.subr.mxu0 0.0
  %4415 = vmatpush1.msra.mxu0 %v4360
  %4416 = vmatprep.subr.mxu0 0.0
  %4417 = vmatpush1.msra.mxu0 %v4361
  %4418 = vmatprep.subr.mxu0 0.0
  %4419 = vmatpush1.msra.mxu0 %v4362
  %4420 = vmatprep.subr.mxu0 0.0
  %4421 = vmatpush1.msra.mxu0 %v4363
  %4422 = vmatprep.subr.mxu0 0.0
  %4423 = vmatpush1.msra.mxu0 %v4364
  %4424 = vmatprep.subr.mxu0 0.0
  %4425 = vmatpush1.msra.mxu0 %v4365
  %4426 = vmatprep.subr.mxu0 0.0
  %4427 = vmatpush1.msra.mxu0 %v4404
  %4428 = vmatprep.subr.mxu0 0.0
  %4429 = vmatpush1.msra.mxu0 0.0
  %4430 = vmatprep.subr.mxu0 0.0
  %4431 = vmatpush1.msra.mxu0 0.0
  %4432 = vmatprep.subr.mxu0 0.0
  %4433 = vmatpush1.msra.mxu0 0.0
  %4434 = vmatprep.subr.mxu0 0.0
  %4435 = vmatpush1.msra.mxu0 0.0
  %4436 = vmatprep.subr.mxu0 0.0
  %4437 = vmatpush1.msra.mxu0 0.0
  %4438 = vmatprep.subr.mxu0 0.0
  %4439 = vmatpush1.msra.mxu0 0.0
  %4440 = vmatprep.subr.mxu0 0.0
  %4441 = vmatpush1.msra.mxu0 0.0
  %4442 = vmatprep.subr.mxu0 0.0
  %4443 = vmatpush1.msra.mxu0 0.0
  %4444 = vmatprep.subr.mxu0 0.0
  %4445 = vmatpush1.msra.mxu0 0.0
  %4446 = vmatprep.subr.mxu0 0.0
  %4447 = vmatpush1.msra.mxu0 0.0
  %4448 = vmatprep.subr.mxu0 0.0
  %4449 = vmatpush1.msra.mxu0 0.0
  %4450 = vmatprep.subr.mxu0 0.0
  %4451 = vmatpush1.msra.mxu0 0.0
  %4452 = vmatprep.subr.mxu0 0.0
  %4453 = vmatpush1.msra.mxu0 0.0
  %4454 = vmatprep.subr.mxu0 0.0
  %4455 = vmatpush1.msra.mxu0 0.0
  %4456 = vmatprep.subr.mxu0 0.0
  %4457 = vmatpush1.msra.mxu0 0.0
  %4458 = vmatprep.subr.mxu0 0.0
  %4459 = vmatpush1.msra.mxu0 0.0
  %4460 = vmatprep.subr.mxu0 0.0
  %4461 = vmatpush1.msra.mxu0 0.0
  %4462 = vmatprep.subr.mxu0 0.0
  %4463 = vmatpush1.msra.mxu0 0.0
  %4464 = vmatprep.subr.mxu0 0.0
  %4465 = vmatpush1.msra.mxu0 0.0
  %4466 = vmatprep.subr.mxu0 0.0
  %4467 = vmatpush1.msra.mxu0 0.0
  %4468 = vmatprep.subr.mxu0 0.0
  %4469 = vmatpush1.msra.mxu0 0.0
  %4470 = vmatprep.mubr.f32.mxu0 0.0
  %4471 = vmatmul.mubr.f32.gmra.mrb[0].mxu0 %v4368
  %v4472 = vpop.f32.mrb[0].mxu0
  %v4473 = vadd.f32 0.0, %v4472
  %v4474 = vpop.f32.mrb[0].mxu0
  %4475 = vmatprep.mubr.f32.mxu0 0.0
  %4476 = vmatmul.mubr.f32.gmra.mrb[0].mxu0 %v4371
  %v4477 = vpop.f32.mrb[0].mxu0
  %v4478 = vadd.f32 0.0, %v4477
  %v4479 = vpop.f32.mrb[0].mxu0
  %4480 = vmatprep.mubr.f32.mxu0 0.0
  %4481 = vmatmul.mubr.f32.gmra.mrb[0].mxu0 %v4374
  %v4482 = vpop.f32.mrb[0].mxu0
  %v4483 = vadd.f32 0.0, %v4482
  %v4484 = vpop.f32.mrb[0].mxu0
  %4485 = vmatprep.mubr.f32.mxu0 0.0
  %4486 = vmatmul.mubr.f32.gmra.mrb[0].mxu0 %v4377
  %v4487 = vpop.f32.mrb[0].mxu0
  %v4488 = vadd.f32 0.0, %v4487
  %v4489 = vpop.f32.mrb[0].mxu0
  %4490 = vmatprep.mubr.f32.mxu0 0.0
  %4491 = vmatmul.mubr.f32.gmra.mrb[0].mxu0 %v4380
  %v4492 = vpop.f32.mrb[0].mxu0
  %v4493 = vadd.f32 0.0, %v4492
  %v4494 = vpop.f32.mrb[0].mxu0
  %4495 = vmatprep.mubr.f32.mxu0 0.0
  %4496 = vmatmul.mubr.f32.gmra.mrb[0].mxu0 %v4383
  %v4497 = vpop.f32.mrb[0].mxu0
  %v4498 = vadd.f32 0.0, %v4497
  %v4499 = vpop.f32.mrb[0].mxu0
  %4500 = vmatprep.mubr.f32.mxu0 0.0
  %4501 = vmatmul.mubr.f32.gmra.mrb[0].mxu0 %v4386
  %v4502 = vpop.f32.mrb[0].mxu0
  %v4503 = vadd.f32 0.0, %v4502
  %v4504 = vpop.f32.mrb[0].mxu0
  %4505 = vmatprep.mubr.f32.mxu0 0.0
  %4506 = vmatmul.mubr.f32.gmra.mrb[0].mxu0 %v4389
  %v4507 = vpop.f32.mrb[0].mxu0
  %v4508 = vadd.f32 0.0, %v4507
  %v4509 = vpop.f32.mrb[0].mxu0
  %4510 = vmatprep.mubr.f32.mxu0 0.0
  %4511 = vmatmul.mubr.f32.gmra.mrb[0].mxu0 %v4392
  %v4512 = vpop.f32.mrb[0].mxu0
  %v4513 = vadd.f32 0.0, %v4512
  %v4514 = vpop.f32.mrb[0].mxu0
  %4515 = vmatprep.mubr.f32.mxu0 0.0
  %4516 = vmatmul.mubr.f32.gmra.mrb[0].mxu0 %v4395
  %v4517 = vpop.f32.mrb[0].mxu0
  %v4518 = vadd.f32 0.0, %v4517
  %v4519 = vpop.f32.mrb[0].mxu0
  %4520 = vmatprep.mubr.f32.mxu0 0.0
  %4521 = vmatmul.mubr.f32.gmra.mrb[0].mxu0 %v4398
  %v4522 = vpop.f32.mrb[0].mxu0
  %v4523 = vadd.f32 0.0, %v4522
  %v4524 = vpop.f32.mrb[0].mxu0
  %4525 = vmatprep.mubr.f32.mxu0 0.0
  %4526 = vmatmul.mubr.f32.gmra.mrb[0].mxu0 %v4401
  %v4527 = vpop.f32.mrb[0].mxu0
  %v4528 = vadd.f32 0.0, %v4527
  %v4529 = vpop.f32.mrb[0].mxu0
  %4530 = vdwg.mxu0
  %v4531 = vadd.f32 %v4343, %v4473
  %v4532 = vadd.f32 %v4344, %v4478
  %v4533 = vadd.f32 %v4345, %v4483
  %v4534 = vadd.f32 %v4346, %v4488
  %v4535 = vadd.f32 %v4347, %v4493
  %v4536 = vadd.f32 %v4348, %v4498
  %v4537 = vadd.f32 %v4349, %v4503
  %v4538 = vadd.f32 %v4350, %v4508
  %v4539 = vadd.f32 %v4351, %v4513
  %v4540 = vadd.f32 %v4352, %v4518
  %v4541 = vadd.f32 %v4353, %v4523
  %v4542 = vadd.f32 %v4354, %v4528
  %v4543 = vld [vmem:[%s18] sm:$0x1]
  %v4545 = vlaneseq
  %v4546 = vshrl.u32 %v4545, 7
  %v4547 = vsub.s32 0, %v4546
  %v4548 = vrot.slane %v4543, %v4547
  %v4550 = vadd.f32 %v4531, %v4548
  %v4551 = vadd.f32 %v4532, %v4548
  %v4552 = vadd.f32 %v4533, %v4548
  %v4553 = vadd.f32 %v4534, %v4548
  %v4554 = vadd.f32 %v4535, %v4548
  %v4555 = vadd.f32 %v4536, %v4548
  %v4556 = vadd.f32 %v4537, %v4548
  %v4557 = vadd.f32 %v4538, %v4548
  %v4558 = vadd.f32 %v4539, %v4548
  %v4559 = vadd.f32 %v4540, %v4548
  %v4560 = vadd.f32 %v4541, %v4548
  %v4561 = vadd.f32 %v4542, %v4548
  %v4562 = vmax.f32 %v4550, 0.0
  %v4563 = vmax.f32 %v4551, 0.0
  %v4564 = vmax.f32 %v4552, 0.0
  %v4565 = vmax.f32 %v4553, 0.0
  %v4566 = vmax.f32 %v4554, 0.0
  %v4567 = vmax.f32 %v4555, 0.0
  %v4568 = vmax.f32 %v4556, 0.0
  %v4569 = vmax.f32 %v4557, 0.0
  %v4570 = vmax.f32 %v4558, 0.0
  %v4571 = vmax.f32 %v4559, 0.0
  %v4572 = vmax.f32 %v4560, 0.0
  %v4573 = vmax.f32 %v4561, 0.0
  %4574 = vst.msk [vmem:[%s19] sm:$0xff] %vm423, %v4562
  %4575 = vst.msk [vmem:[%s19 + $0x8] sm:$0xff] %vm423, %v4563
  %4576 = vst.msk [vmem:[%s19 + $0x10] sm:$0xff] %vm423, %v4564
  %4577 = vst.msk [vmem:[%s19 + $0x18] sm:$0xff] %vm423, %v4565
  %4578 = vst.msk [vmem:[%s19 + $0x20] sm:$0xff] %vm423, %v4566
  %4579 = vst.msk [vmem:[%s19 + $0x28] sm:$0xff] %vm423, %v4567
  %4580 = vst.msk [vmem:[%s19 + $0x30] sm:$0xff] %vm423, %v4568
  %4581 = vst.msk [vmem:[%s19 + $0x38] sm:$0xff] %vm423, %v4569
  %4582 = vst.msk [vmem:[%s19 + $0x40] sm:$0xff] %vm423, %v4570
  %4583 = vst.msk [vmem:[%s19 + $0x48] sm:$0xff] %vm423, %v4571
  %4584 = vst.msk [vmem:[%s19 + $0x50] sm:$0xff] %vm423, %v4572
  %4585 = vst.msk [vmem:[%s19 + $0x58] sm:$0xff] %vm423, %v4573
  // Predicated region
  $region78: #{conv_ae_in_forward.1} parent=0 // pred_check
    _
  $region79: #{conv_ae_in_forward.1} parent=0 // pred_check_branch
    %4587 = sbr.rel (0) target = $region81
  $region80: #{conv_ae_in_forward.1} parent=0 // pred_region
    _
  $region81: #{conv_ae_in_forward.1} parent=0 // pred_fallthru
    _
  // Predicated region
  $region82: #{conv_ae_in_forward.1} parent=0 // pred_check
    _
  $region83: #{conv_ae_in_forward.1} parent=0 // pred_check_branch
    %4589 = sbr.rel (0) target = $region85
  $region84: #{conv_ae_in_forward.1} parent=0 // pred_region
    _
  $region85: #{conv_ae_in_forward.1} parent=0 // pred_fallthru
    _

</llo_original>
